<compile_context>
chip_gen: v6e
topology: v6e:2x2x1
jax: 0.10.0
libtpu: 0.0.40
codegen_flags: <defaults>
</compile_context>

<pallas_src>
import jax
import jax.numpy as jnp
from jax.experimental import pallas as pl
from jax.experimental.pallas import tpu as pltpu

D_IN, D_H1, D_H2, D_OUT = 512, 2048, 512, 128


def mlp_kernel(x_ref, w1_ref, b1_ref, w2_ref, b2_ref, w3_ref, b3_ref, o_ref):
    # fc1 + relu (bf16 MXU operands, f32 accumulation; bias added in f32)
    x = x_ref[...].astype(jnp.bfloat16)
    h1 = jnp.dot(x, w1_ref[...].astype(jnp.bfloat16),
                 preferred_element_type=jnp.float32)
    h1 = jnp.maximum(h1 + b1_ref[...], 0.0).astype(jnp.bfloat16)
    # fc2 + relu
    h2 = jnp.dot(h1, w2_ref[...].astype(jnp.bfloat16),
                 preferred_element_type=jnp.float32)
    h2 = jnp.maximum(h2 + b2_ref[...], 0.0).astype(jnp.bfloat16)
    # fc3 + relu
    h3 = jnp.dot(h2, w3_ref[...].astype(jnp.bfloat16),
                 preferred_element_type=jnp.float32)
    o_ref[...] = jnp.maximum(h3 + b3_ref[...], 0.0).astype(o_ref.dtype)


def _choose_block_b(B):
    # One tile for small batches; 512-row tiles for large ones (fills the MXU
    # M dim, >=2 grid steps so the "parallel" axis can split across cores).
    return B if B <= 512 else 512


@jax.jit
def mlp_forward(x, w1, b1, w2, b2, w3, b3):
    B = x.shape[0]
    block_b = _choose_block_b(B)
    n_blocks = -(-B // block_b)          # cdiv
    B_pad = n_blocks * block_b
    if B_pad != B:
        x = jnp.pad(x, ((0, B_pad - B), (0, 0)))

    # Grid-invariant weights/biases: single pipeline buffer (their block index
    # never changes, so a second buffer would only burn VMEM).
    def weight_spec(shape):
        return pl.BlockSpec(shape, lambda i: (0, 0), pipeline_mode=pl.Buffered(1))

    flops = 2 * B_pad * (D_IN * D_H1 + D_H1 * D_H2 + D_H2 * D_OUT)
    bytes_accessed = (
        B_pad * D_IN * 4                                           # x
        + (D_IN * D_H1 + D_H1 * D_H2 + D_H2 * D_OUT) * 4           # weights
        + (D_H1 + D_H2 + D_OUT) * 4                                # biases
        + B_pad * D_OUT * 4                                        # output
    )

    out = pl.pallas_call(
        mlp_kernel,
        out_shape=jax.ShapeDtypeStruct((B_pad, D_OUT), jnp.float32),
        grid_spec=pltpu.PrefetchScalarGridSpec(
            num_scalar_prefetch=0,
            grid=(n_blocks,),
            in_specs=[
                pl.BlockSpec((block_b, D_IN), lambda i: (i, 0)),   # x tile
                weight_spec((D_IN, D_H1)),                          # W1
                weight_spec((1, D_H1)),                             # b1
                weight_spec((D_H1, D_H2)),                          # W2
                weight_spec((1, D_H2)),                             # b2
                weight_spec((D_H2, D_OUT)),                         # W3
                weight_spec((1, D_OUT)),                            # b3
            ],
            out_specs=pl.BlockSpec((block_b, D_OUT), lambda i: (i, 0)),
        ),
        compiler_params=pltpu.CompilerParams(
            dimension_semantics=("parallel",),
            vmem_limit_bytes=48 << 20,   # headroom on v7x's 64 MiB VMEM
        ),
        cost_estimate=pl.CostEstimate(
            flops=flops, transcendentals=0, bytes_accessed=bytes_accessed),
    )(x, w1, b1, w2, b2, w3, b3)

    return out[:B] if B_pad != B else out


def init_linear(key, fan_in, fan_out):
    # PyTorch nn.Linear default init: U(-1/sqrt(fan_in), 1/sqrt(fan_in))
    kw, kb = jax.random.split(key)
    bound = 1.0 / jnp.sqrt(fan_in)
    w = jax.random.uniform(kw, (fan_in, fan_out), jnp.float32, -bound, bound)
    b = jax.random.uniform(kb, (1, fan_out), jnp.float32, -bound, bound)
    return w, b


def reference_bf16(x, w1, b1, w2, b2, w3, b3):
    # Pure-JAX reference mirroring the kernel's precision policy:
    # bf16 matmul operands, f32 accumulation, bf16 between layers.
    def layer(h, w, b):
        acc = jnp.dot(h.astype(jnp.bfloat16), w.astype(jnp.bfloat16),
                      preferred_element_type=jnp.float32)
        return jnp.maximum(acc + b, 0.0)

    h = layer(x, w1, b1).astype(jnp.bfloat16)
    h = layer(h, w2, b2).astype(jnp.bfloat16)
    return layer(h, w3, b3)


def reference_f32(x, w1, b1, w2, b2, w3, b3):
    # Full-f32 reference matching the original PyTorch module.
    def layer(h, w, b):
        return jnp.maximum(
            jnp.dot(h, w, precision=jax.lax.Precision.HIGHEST) + b, 0.0)

    return layer(layer(layer(x, w1, b1), w2, b2), w3, b3)


if __name__ == "__main__":
    key = jax.random.PRNGKey(0)
    kx, k1, k2, k3 = jax.random.split(key, 4)

    B = 8  # small batch
    x = jax.random.normal(kx, (B, D_IN), jnp.float32)
    w1, b1 = init_linear(k1, D_IN, D_H1)
    w2, b2 = init_linear(k2, D_H1, D_H2)
    w3, b3 = init_linear(k3, D_H2, D_OUT)

    out = jax.block_until_ready(mlp_forward(x, w1, b1, w2, b2, w3, b3))

    assert out.shape == (B, D_OUT)
    # Tight check vs. a reference that mirrors the kernel's bf16/f32 policy.
    ref_bf = reference_bf16(x, w1, b1, w2, b2, w3, b3)
    assert jnp.allclose(out, ref_bf, atol=2e-2, rtol=2e-2), "mismatch vs bf16 ref"
    # Loose check vs. the full-f32 PyTorch-equivalent math.
    ref_f32 = reference_f32(x, w1, b1, w2, b2, w3, b3)
    assert jnp.allclose(out, ref_f32, atol=1e-1, rtol=1e-1), "mismatch vs f32 ref"

    print("KERNEL_OK")
</pallas_src>

<mosaic_0001>
module attributes {stable_mosaic.version = 11 : i64} {
  func.func @mlp_kernel(%arg0: i32, %arg1: memref<8x512xf32, #tpu.memory_space<vmem>>, %arg2: memref<512x2048xf32, #tpu.memory_space<vmem>>, %arg3: memref<1x2048xf32, #tpu.memory_space<vmem>>, %arg4: memref<2048x512xf32, #tpu.memory_space<vmem>>, %arg5: memref<1x512xf32, #tpu.memory_space<vmem>>, %arg6: memref<512x128xf32, #tpu.memory_space<vmem>>, %arg7: memref<1x128xf32, #tpu.memory_space<vmem>>, %arg8: memref<8x128xf32, #tpu.memory_space<vmem>>) attributes {dimension_semantics = [#tpu.dimension_semantics<parallel>], iteration_bounds = array<i64: 1>, scalar_prefetch = 0 : i64, scratch_operands = 0 : i64, tpu.core_type = #tpu.core_type<tc>, window_params = [{transform_indices = @transform_0, window_bounds = array<i64: 8, 512>}, {pipeline_mode = #tpu.pipeline_mode<synchronous>, transform_indices = @transform_1, window_bounds = array<i64: 512, 2048>}, {pipeline_mode = #tpu.pipeline_mode<synchronous>, transform_indices = @transform_2, window_bounds = array<i64: 1, 2048>}, {pipeline_mode = #tpu.pipeline_mode<synchronous>, transform_indices = @transform_3, window_bounds = array<i64: 2048, 512>}, {pipeline_mode = #tpu.pipeline_mode<synchronous>, transform_indices = @transform_4, window_bounds = array<i64: 1, 512>}, {pipeline_mode = #tpu.pipeline_mode<synchronous>, transform_indices = @transform_5, window_bounds = array<i64: 512, 128>}, {pipeline_mode = #tpu.pipeline_mode<synchronous>, transform_indices = @transform_6, window_bounds = array<i64: 1, 128>}, {transform_indices = @transform_7, window_bounds = array<i64: 8, 128>}]} {
    %c0 = arith.constant 0 : index
    %c0_0 = arith.constant 0 : index
    %0 = vector.load %arg1[%c0, %c0_0] : memref<8x512xf32, #tpu.memory_space<vmem>>, vector<8x512xf32>
    %1 = arith.truncf %0 : vector<8x512xf32> to vector<8x512xbf16>
    %c0_1 = arith.constant 0 : index
    %c0_2 = arith.constant 0 : index
    %2 = vector.load %arg2[%c0_1, %c0_2] : memref<512x2048xf32, #tpu.memory_space<vmem>>, vector<512x2048xf32>
    %3 = arith.truncf %2 : vector<512x2048xf32> to vector<512x2048xbf16>
    %cst = arith.constant dense<0.000000e+00> : vector<8x2048xf32>
    %4 = tpu.matmul %1, %3, %cst {dimension_numbers = #tpu.dot_dimension_numbers<[1], [0], [0], [1], [0, 0, 1, 1], [], []>} : vector<8x512xbf16>, vector<512x2048xbf16>, vector<8x2048xf32> -> vector<8x2048xf32>
    %c0_3 = arith.constant 0 : index
    %c0_4 = arith.constant 0 : index
    %5 = vector.load %arg3[%c0_3, %c0_4] : memref<1x2048xf32, #tpu.memory_space<vmem>>, vector<1x2048xf32>
    %6 = vector.broadcast %5 : vector<1x2048xf32> to vector<8x2048xf32>
    %7 = arith.addf %4, %6 : vector<8x2048xf32>
    %cst_5 = arith.constant 0.000000e+00 : f32
    %8 = vector.broadcast %cst_5 : f32 to vector<8x2048xf32>
    %9 = arith.maximumf %7, %8 : vector<8x2048xf32>
    %10 = arith.truncf %9 : vector<8x2048xf32> to vector<8x2048xbf16>
    %c0_6 = arith.constant 0 : index
    %c0_7 = arith.constant 0 : index
    %11 = vector.load %arg4[%c0_6, %c0_7] : memref<2048x512xf32, #tpu.memory_space<vmem>>, vector<2048x512xf32>
    %12 = arith.truncf %11 : vector<2048x512xf32> to vector<2048x512xbf16>
    %cst_8 = arith.constant dense<0.000000e+00> : vector<8x512xf32>
    %13 = tpu.matmul %10, %12, %cst_8 {dimension_numbers = #tpu.dot_dimension_numbers<[1], [0], [0], [1], [0, 0, 1, 1], [], []>} : vector<8x2048xbf16>, vector<2048x512xbf16>, vector<8x512xf32> -> vector<8x512xf32>
    %c0_9 = arith.constant 0 : index
    %c0_10 = arith.constant 0 : index
    %14 = vector.load %arg5[%c0_9, %c0_10] : memref<1x512xf32, #tpu.memory_space<vmem>>, vector<1x512xf32>
    %15 = vector.broadcast %14 : vector<1x512xf32> to vector<8x512xf32>
    %16 = arith.addf %13, %15 : vector<8x512xf32>
    %cst_11 = arith.constant 0.000000e+00 : f32
    %17 = vector.broadcast %cst_11 : f32 to vector<8x512xf32>
    %18 = arith.maximumf %16, %17 : vector<8x512xf32>
    %19 = arith.truncf %18 : vector<8x512xf32> to vector<8x512xbf16>
    %c0_12 = arith.constant 0 : index
    %c0_13 = arith.constant 0 : index
    %20 = vector.load %arg6[%c0_12, %c0_13] : memref<512x128xf32, #tpu.memory_space<vmem>>, vector<512x128xf32>
    %21 = arith.truncf %20 : vector<512x128xf32> to vector<512x128xbf16>
    %cst_14 = arith.constant dense<0.000000e+00> : vector<8x128xf32>
    %22 = tpu.matmul %19, %21, %cst_14 {dimension_numbers = #tpu.dot_dimension_numbers<[1], [0], [0], [1], [0, 0, 1, 1], [], []>} : vector<8x512xbf16>, vector<512x128xbf16>, vector<8x128xf32> -> vector<8x128xf32>
    %c0_15 = arith.constant 0 : index
    %c0_16 = arith.constant 0 : index
    %23 = vector.load %arg7[%c0_15, %c0_16] : memref<1x128xf32, #tpu.memory_space<vmem>>, vector<1x128xf32>
    %24 = vector.broadcast %23 : vector<1x128xf32> to vector<8x128xf32>
    %25 = arith.addf %22, %24 : vector<8x128xf32>
    %cst_17 = arith.constant 0.000000e+00 : f32
    %26 = vector.broadcast %cst_17 : f32 to vector<8x128xf32>
    %27 = arith.maximumf %25, %26 : vector<8x128xf32>
    %c0_18 = arith.constant 0 : index
    %c0_19 = arith.constant 0 : index
    %28 = vector.load %arg8[%c0_18, %c0_19] : memref<8x128xf32, #tpu.memory_space<vmem>>, vector<8x128xf32>
    tpu.vector_store %arg8[%c0_18, %c0_19], %27 {strides = array<i32>} : memref<8x128xf32, #tpu.memory_space<vmem>>, vector<8x128xf32>,
    return
  }
  func.func @transform_0(%arg0: i32) -> (i32, i32) {
    %c0_i32 = arith.constant 0 : i32
    %c0_i32_0 = arith.constant 0 : i32
    return %arg0, %c0_i32 : i32, i32
  }
  func.func @transform_1(%arg0: i32) -> (i32, i32) {
    %c0_i32 = arith.constant 0 : i32
    %c0_i32_0 = arith.constant 0 : i32
    %c0_i32_1 = arith.constant 0 : i32
    return %c0_i32, %c0_i32_0 : i32, i32
  }
  func.func @transform_2(%arg0: i32) -> (i32, i32) {
    %c0_i32 = arith.constant 0 : i32
    %c0_i32_0 = arith.constant 0 : i32
    %c0_i32_1 = arith.constant 0 : i32
    return %c0_i32, %c0_i32_0 : i32, i32
  }
  func.func @transform_3(%arg0: i32) -> (i32, i32) {
    %c0_i32 = arith.constant 0 : i32
    %c0_i32_0 = arith.constant 0 : i32
    %c0_i32_1 = arith.constant 0 : i32
    return %c0_i32, %c0_i32_0 : i32, i32
  }
  func.func @transform_4(%arg0: i32) -> (i32, i32) {
    %c0_i32 = arith.constant 0 : i32
    %c0_i32_0 = arith.constant 0 : i32
    %c0_i32_1 = arith.constant 0 : i32
    return %c0_i32, %c0_i32_0 : i32, i32
  }
  func.func @transform_5(%arg0: i32) -> (i32, i32) {
    %c0_i32 = arith.constant 0 : i32
    %c0_i32_0 = arith.constant 0 : i32
    %c0_i32_1 = arith.constant 0 : i32
    return %c0_i32, %c0_i32_0 : i32, i32
  }
  func.func @transform_6(%arg0: i32) -> (i32, i32) {
    %c0_i32 = arith.constant 0 : i32
    %c0_i32_0 = arith.constant 0 : i32
    %c0_i32_1 = arith.constant 0 : i32
    return %c0_i32, %c0_i32_0 : i32, i32
  }
  func.func @transform_7(%arg0: i32) -> (i32, i32) {
    %c0_i32 = arith.constant 0 : i32
    %c0_i32_0 = arith.constant 0 : i32
    return %arg0, %c0_i32 : i32, i32
  }
}

</mosaic_0001>

<llo_original>
// kernel: mlp_forward.1
$region0: #{mlp_forward.1}
  #allocation0 [shape = 'u32[]', space=smem, size = 0x4, offset = 0x4, fixed_abs, tag = 'smem constant byte address 0x4 - core index']
  #allocation1 [shape = 'u32[144,128]{1,0:T(1,128)}', space=vmem, size = 0x12000, scoped, tag = 'internal scratch']
  %s0 = inlined_call_operand.hbm [shape: f32[8,512], index: 0, kind: input, shape index: {}]
  %s1 = inlined_call_operand.hbm [shape: f32[512,2048], index: 1, kind: input, shape index: {}]
  %s2 = inlined_call_operand.hbm [shape: f32[1,2048], index: 2, kind: input, shape index: {}]
  %s3 = inlined_call_operand.hbm [shape: f32[2048,512], index: 3, kind: input, shape index: {}]
  %s4 = inlined_call_operand.hbm [shape: f32[1,512], index: 4, kind: input, shape index: {}]
  %s5 = inlined_call_operand.hbm [shape: f32[512,128], index: 5, kind: input, shape index: {}]
  %s6 = inlined_call_operand.hbm [shape: f32[1,128], index: 6, kind: input, shape index: {}]
  %s7 = inlined_call_operand.hbm [shape: f32[8,128], index: 7, kind: output, shape index: {}]
  %s8 = sld [smem:[#allocation0]]
  $region66: #{mlp_forward.1} parent=0
    _
  %s10 = ssub.s32 1, %s8
  %s11 = scalar_select 0, %s10, %s8
  $region1: #{mlp_forward.1} parent=0
    #allocation2 [shape = 'u8[16384]{0}', space=vmem, size = 0x4000, scoped, tag = 'input window, operand 0, single buffered']
    #allocation3 [shape = 's32[1]{0}', space=sflag, size = 0x4, scoped, tag = 'scoped memory for mlp_forward.1']
    #allocation4 [shape = 's32[1]{0}', space=sflag, size = 0x4, scoped, tag = 'scoped memory for mlp_forward.1']
    #allocation5 [shape = 'u8[4194304]{0}', space=vmem, size = 0x400000, scoped, tag = 'input window, operand 1, single buffered']
    #allocation6 [shape = 's32[1]{0}', space=sflag, size = 0x4, scoped, tag = 'scoped memory for mlp_forward.1']
    #allocation7 [shape = 'u8[8192]{0}', space=vmem, size = 0x2000, scoped, tag = 'input window, operand 2, single buffered']
    #allocation8 [shape = 'u8[4194304]{0}', space=vmem, size = 0x400000, scoped, tag = 'input window, operand 3, single buffered']
    #allocation9 [shape = 's32[1]{0}', space=sflag, size = 0x4, scoped, tag = 'scoped memory for mlp_forward.1']
    #allocation10 [shape = 'u8[2048]{0}', space=vmem, size = 0x800, scoped, tag = 'input window, operand 4, single buffered']
    #allocation11 [shape = 'u8[262144]{0}', space=vmem, size = 0x40000, scoped, tag = 'input window, operand 5, single buffered']
    #allocation12 [shape = 's32[1]{0}', space=sflag, size = 0x4, scoped, tag = 'scoped memory for mlp_forward.1']
    #allocation13 [shape = 'u8[512]{0}', space=vmem, size = 0x400, scoped, tag = 'input window, operand 6, single buffered']
    #allocation14 [shape = 'u8[4096]{0}', space=vmem, size = 0x1000, scoped, tag = 'output window, operand 0, single buffered']
    %12 = vsyncpa [#allocation3], 0
    %13 = vsyncpa [#allocation6], 0
    %14 = vsyncpa [#allocation9], 0
    %15 = vsyncpa [#allocation12], 0
    %16 = vsyncpa [#allocation4], 0
    // Predicated region
    $region2: #{mlp_forward.1} parent=1 // pred_check
      _
    $region3: #{mlp_forward.1} parent=1 // pred_check_branch
      %18 = sbr.rel (0) target = $region5
    $region4: #{mlp_forward.1} parent=1 // pred_region
      %s20 = ssub.s32 512, 512
      %21 = vsyncadd [#allocation3], %s20
      %s23 = sshll.u32 [#allocation2], 4
      %s24 = int_to_ptr.vmem [resolvable:$true] %s23
      %26 = dma.hbm_to_vmem [thread:$0]  %s0, 512, %s24, [#allocation3]
    $region5: #{mlp_forward.1} parent=1 // pred_fallthru
      _
    // Predicated region
    $region6: #{mlp_forward.1} parent=1 // pred_check
      _
    $region7: #{mlp_forward.1} parent=1 // pred_check_branch
      %28 = sbr.rel (0) target = $region9
    $region8: #{mlp_forward.1} parent=1 // pred_region
      %s30 = ssub.s32 131072, 131072
      %31 = vsyncadd [#allocation6], %s30
      %s32 = sshll.u32 [#allocation5], 4
      %s33 = int_to_ptr.vmem [resolvable:$true] %s32
      %38 = dma.hbm_to_vmem [thread:$0]  %s1, 131072, %s33, [#allocation6], 2048, 2048, 128
    $region9: #{mlp_forward.1} parent=1 // pred_fallthru
      _
    // Predicated region
    $region10: #{mlp_forward.1} parent=1 // pred_check
      _
    $region11: #{mlp_forward.1} parent=1 // pred_check_branch
      %40 = sbr.rel (0) target = $region13
    $region12: #{mlp_forward.1} parent=1 // pred_region
      %s42 = ssub.s32 256, 256
      %43 = vsyncadd [#allocation6], %s42
      %s45 = sshll.u32 [#allocation7], 4
      %s46 = int_to_ptr.vmem [resolvable:$true] %s45
      %48 = dma.hbm_to_vmem [thread:$0]  %s2, 256, %s46, [#allocation6]
    $region13: #{mlp_forward.1} parent=1 // pred_fallthru
      _
    // Predicated region
    $region14: #{mlp_forward.1} parent=1 // pred_check
      _
    $region15: #{mlp_forward.1} parent=1 // pred_check_branch
      %50 = sbr.rel (0) target = $region17
    $region16: #{mlp_forward.1} parent=1 // pred_region
      %s52 = ssub.s32 131072, 131072
      %53 = vsyncadd [#allocation9], %s52
      %s54 = sshll.u32 [#allocation8], 4
      %s55 = int_to_ptr.vmem [resolvable:$true] %s54
      %60 = dma.hbm_to_vmem [thread:$0]  %s3, 131072, %s55, [#allocation9], 512, 512, 32
    $region17: #{mlp_forward.1} parent=1 // pred_fallthru
      _
    // Predicated region
    $region18: #{mlp_forward.1} parent=1 // pred_check
      _
    $region19: #{mlp_forward.1} parent=1 // pred_check_branch
      %62 = sbr.rel (0) target = $region21
    $region20: #{mlp_forward.1} parent=1 // pred_region
      %s64 = ssub.s32 64, 64
      %65 = vsyncadd [#allocation9], %s64
      %s67 = sshll.u32 [#allocation10], 4
      %s68 = int_to_ptr.vmem [resolvable:$true] %s67
      %70 = dma.hbm_to_vmem [thread:$0]  %s4, 64, %s68, [#allocation9]
    $region21: #{mlp_forward.1} parent=1 // pred_fallthru
      _
    // Predicated region
    $region22: #{mlp_forward.1} parent=1 // pred_check
      _
    $region23: #{mlp_forward.1} parent=1 // pred_check_branch
      %72 = sbr.rel (0) target = $region25
    $region24: #{mlp_forward.1} parent=1 // pred_region
      %s74 = ssub.s32 8192, 8192
      %75 = vsyncadd [#allocation12], %s74
      %s76 = sshll.u32 [#allocation11], 4
      %s77 = int_to_ptr.vmem [resolvable:$true] %s76
      %82 = dma.hbm_to_vmem [thread:$0]  %s5, 8192, %s77, [#allocation12], 128, 128, 8
    $region25: #{mlp_forward.1} parent=1 // pred_fallthru
      _
    // Predicated region
    $region26: #{mlp_forward.1} parent=1 // pred_check
      _
    $region27: #{mlp_forward.1} parent=1 // pred_check_branch
      %84 = sbr.rel (0) target = $region29
    $region28: #{mlp_forward.1} parent=1 // pred_region
      %s86 = ssub.s32 16, 16
      %87 = vsyncadd [#allocation12], %s86
      %s89 = sshll.u32 [#allocation13], 4
      %s90 = int_to_ptr.vmem [resolvable:$true] %s89
      %92 = dma.hbm_to_vmem [thread:$0]  %s6, 16, %s90, [#allocation12]
    $region29: #{mlp_forward.1} parent=1 // pred_fallthru
      _
    // Predicated region
    $region30: #{mlp_forward.1} parent=1 // pred_check
      _
    $region31: #{mlp_forward.1} parent=1 // pred_check_branch
      %94 = sbr.rel (0) target = $region33
    $region32: #{mlp_forward.1} parent=1 // pred_region
      %95 = dma.done [#allocation3], 512
    $region33: #{mlp_forward.1} parent=1 // pred_fallthru
      _
    // Predicated region
    $region34: #{mlp_forward.1} parent=1 // pred_check
      _
    $region35: #{mlp_forward.1} parent=1 // pred_check_branch
      %97 = sbr.rel (0) target = $region37
    $region36: #{mlp_forward.1} parent=1 // pred_region
      %98 = dma.done [#allocation6], 131072
    $region37: #{mlp_forward.1} parent=1 // pred_fallthru
      _
    // Predicated region
    $region38: #{mlp_forward.1} parent=1 // pred_check
      _
    $region39: #{mlp_forward.1} parent=1 // pred_check_branch
      %100 = sbr.rel (0) target = $region41
    $region40: #{mlp_forward.1} parent=1 // pred_region
      %101 = dma.done [#allocation6], 256
    $region41: #{mlp_forward.1} parent=1 // pred_fallthru
      _
    // Predicated region
    $region42: #{mlp_forward.1} parent=1 // pred_check
      _
    $region43: #{mlp_forward.1} parent=1 // pred_check_branch
      %103 = sbr.rel (0) target = $region45
    $region44: #{mlp_forward.1} parent=1 // pred_region
      %104 = dma.done [#allocation9], 131072
    $region45: #{mlp_forward.1} parent=1 // pred_fallthru
      _
    // Predicated region
    $region46: #{mlp_forward.1} parent=1 // pred_check
      _
    $region47: #{mlp_forward.1} parent=1 // pred_check_branch
      %106 = sbr.rel (0) target = $region49
    $region48: #{mlp_forward.1} parent=1 // pred_region
      %107 = dma.done [#allocation9], 64
    $region49: #{mlp_forward.1} parent=1 // pred_fallthru
      _
    // Predicated region
    $region50: #{mlp_forward.1} parent=1 // pred_check
      _
    $region51: #{mlp_forward.1} parent=1 // pred_check_branch
      %109 = sbr.rel (0) target = $region53
    $region52: #{mlp_forward.1} parent=1 // pred_region
      %110 = dma.done [#allocation12], 8192
    $region53: #{mlp_forward.1} parent=1 // pred_fallthru
      _
    // Predicated region
    $region54: #{mlp_forward.1} parent=1 // pred_check
      _
    $region55: #{mlp_forward.1} parent=1 // pred_check_branch
      %112 = sbr.rel (0) target = $region57
    $region56: #{mlp_forward.1} parent=1 // pred_region
      %113 = dma.done [#allocation12], 16
    $region57: #{mlp_forward.1} parent=1 // pred_fallthru
      _
    %v115 = vld [vmem:[#allocation2] sm:$0xff]
    %v116 = vld [vmem:[#allocation2 + $0x8] sm:$0xff]
    %v117 = vld [vmem:[#allocation2 + $0x10] sm:$0xff]
    %v118 = vld [vmem:[#allocation2 + $0x18] sm:$0xff]
    %v119 = vpack.c.bf16 %v115, %v115
    %v120 = vpack.c.bf16 %v116, %v116
    %v121 = vpack.c.bf16 %v117, %v117
    %v122 = vpack.c.bf16 %v118, %v118
    %v123 = vld [vmem:[#allocation5] sm:$0xff]
    %v124 = vld [vmem:[#allocation5 + $0x8] sm:$0xff]
    %v125 = vld [vmem:[#allocation5 + $0x10] sm:$0xff]
    %v126 = vld [vmem:[#allocation5 + $0x18] sm:$0xff]
    %v127 = vld [vmem:[#allocation5 + $0x20] sm:$0xff]
    %v128 = vld [vmem:[#allocation5 + $0x28] sm:$0xff]
    %v129 = vld [vmem:[#allocation5 + $0x30] sm:$0xff]
    %v130 = vld [vmem:[#allocation5 + $0x38] sm:$0xff]
    %v131 = vld [vmem:[#allocation5 + $0x40] sm:$0xff]
    %v132 = vld [vmem:[#allocation5 + $0x48] sm:$0xff]
    %v133 = vld [vmem:[#allocation5 + $0x50] sm:$0xff]
    %v134 = vld [vmem:[#allocation5 + $0x58] sm:$0xff]
    %v135 = vld [vmem:[#allocation5 + $0x60] sm:$0xff]
    %v136 = vld [vmem:[#allocation5 + $0x68] sm:$0xff]
    %v137 = vld [vmem:[#allocation5 + $0x70] sm:$0xff]
    %v138 = vld [vmem:[#allocation5 + $0x78] sm:$0xff]
    %v139 = vld [vmem:[#allocation5 + $0x80] sm:$0xff]
    %v140 = vld [vmem:[#allocation5 + $0x88] sm:$0xff]
    %v141 = vld [vmem:[#allocation5 + $0x90] sm:$0xff]
    %v142 = vld [vmem:[#allocation5 + $0x98] sm:$0xff]
    %v143 = vld [vmem:[#allocation5 + $0xa0] sm:$0xff]
    %v144 = vld [vmem:[#allocation5 + $0xa8] sm:$0xff]
    %v145 = vld [vmem:[#allocation5 + $0xb0] sm:$0xff]
    %v146 = vld [vmem:[#allocation5 + $0xb8] sm:$0xff]
    %v147 = vld [vmem:[#allocation5 + $0xc0] sm:$0xff]
    %v148 = vld [vmem:[#allocation5 + $0xc8] sm:$0xff]
    %v149 = vld [vmem:[#allocation5 + $0xd0] sm:$0xff]
    %v150 = vld [vmem:[#allocation5 + $0xd8] sm:$0xff]
    %v151 = vld [vmem:[#allocation5 + $0xe0] sm:$0xff]
    %v152 = vld [vmem:[#allocation5 + $0xe8] sm:$0xff]
    %v153 = vld [vmem:[#allocation5 + $0xf0] sm:$0xff]
    %v154 = vld [vmem:[#allocation5 + $0xf8] sm:$0xff]
    %v155 = vld [vmem:[#allocation5 + $0x100] sm:$0xff]
    %v156 = vld [vmem:[#allocation5 + $0x108] sm:$0xff]
    %v157 = vld [vmem:[#allocation5 + $0x110] sm:$0xff]
    %v158 = vld [vmem:[#allocation5 + $0x118] sm:$0xff]
    %v159 = vld [vmem:[#allocation5 + $0x120] sm:$0xff]
    %v160 = vld [vmem:[#allocation5 + $0x128] sm:$0xff]
    %v161 = vld [vmem:[#allocation5 + $0x130] sm:$0xff]
    %v162 = vld [vmem:[#allocation5 + $0x138] sm:$0xff]
    %v163 = vld [vmem:[#allocation5 + $0x140] sm:$0xff]
    %v164 = vld [vmem:[#allocation5 + $0x148] sm:$0xff]
    %v165 = vld [vmem:[#allocation5 + $0x150] sm:$0xff]
    %v166 = vld [vmem:[#allocation5 + $0x158] sm:$0xff]
    %v167 = vld [vmem:[#allocation5 + $0x160] sm:$0xff]
    %v168 = vld [vmem:[#allocation5 + $0x168] sm:$0xff]
    %v169 = vld [vmem:[#allocation5 + $0x170] sm:$0xff]
    %v170 = vld [vmem:[#allocation5 + $0x178] sm:$0xff]
    %v171 = vld [vmem:[#allocation5 + $0x180] sm:$0xff]
    %v172 = vld [vmem:[#allocation5 + $0x188] sm:$0xff]
    %v173 = vld [vmem:[#allocation5 + $0x190] sm:$0xff]
    %v174 = vld [vmem:[#allocation5 + $0x198] sm:$0xff]
    %v175 = vld [vmem:[#allocation5 + $0x1a0] sm:$0xff]
    %v176 = vld [vmem:[#allocation5 + $0x1a8] sm:$0xff]
    %v177 = vld [vmem:[#allocation5 + $0x1b0] sm:$0xff]
    %v178 = vld [vmem:[#allocation5 + $0x1b8] sm:$0xff]
    %v179 = vld [vmem:[#allocation5 + $0x1c0] sm:$0xff]
    %v180 = vld [vmem:[#allocation5 + $0x1c8] sm:$0xff]
    %v181 = vld [vmem:[#allocation5 + $0x1d0] sm:$0xff]
    %v182 = vld [vmem:[#allocation5 + $0x1d8] sm:$0xff]
    %v183 = vld [vmem:[#allocation5 + $0x1e0] sm:$0xff]
    %v184 = vld [vmem:[#allocation5 + $0x1e8] sm:$0xff]
    %v185 = vld [vmem:[#allocation5 + $0x1f0] sm:$0xff]
    %v186 = vld [vmem:[#allocation5 + $0x1f8] sm:$0xff]
    %v187 = vld [vmem:[#allocation5 + $0x200] sm:$0xff]
    %v188 = vld [vmem:[#allocation5 + $0x208] sm:$0xff]
    %v189 = vld [vmem:[#allocation5 + $0x210] sm:$0xff]
    %v190 = vld [vmem:[#allocation5 + $0x218] sm:$0xff]
    %v191 = vld [vmem:[#allocation5 + $0x220] sm:$0xff]
    %v192 = vld [vmem:[#allocation5 + $0x228] sm:$0xff]
    %v193 = vld [vmem:[#allocation5 + $0x230] sm:$0xff]
    %v194 = vld [vmem:[#allocation5 + $0x238] sm:$0xff]
    %v195 = vld [vmem:[#allocation5 + $0x240] sm:$0xff]
    %v196 = vld [vmem:[#allocation5 + $0x248] sm:$0xff]
    %v197 = vld [vmem:[#allocation5 + $0x250] sm:$0xff]
    %v198 = vld [vmem:[#allocation5 + $0x258] sm:$0xff]
    %v199 = vld [vmem:[#allocation5 + $0x260] sm:$0xff]
    %v200 = vld [vmem:[#allocation5 + $0x268] sm:$0xff]
    %v201 = vld [vmem:[#allocation5 + $0x270] sm:$0xff]
    %v202 = vld [vmem:[#allocation5 + $0x278] sm:$0xff]
    %v203 = vld [vmem:[#allocation5 + $0x280] sm:$0xff]
    %v204 = vld [vmem:[#allocation5 + $0x288] sm:$0xff]
    %v205 = vld [vmem:[#allocation5 + $0x290] sm:$0xff]
    %v206 = vld [vmem:[#allocation5 + $0x298] sm:$0xff]
    %v207 = vld [vmem:[#allocation5 + $0x2a0] sm:$0xff]
    %v208 = vld [vmem:[#allocation5 + $0x2a8] sm:$0xff]
    %v209 = vld [vmem:[#allocation5 + $0x2b0] sm:$0xff]
    %v210 = vld [vmem:[#allocation5 + $0x2b8] sm:$0xff]
    %v211 = vld [vmem:[#allocation5 + $0x2c0] sm:$0xff]
    %v212 = vld [vmem:[#allocation5 + $0x2c8] sm:$0xff]
    %v213 = vld [vmem:[#allocation5 + $0x2d0] sm:$0xff]
    %v214 = vld [vmem:[#allocation5 + $0x2d8] sm:$0xff]
    %v215 = vld [vmem:[#allocation5 + $0x2e0] sm:$0xff]
    %v216 = vld [vmem:[#allocation5 + $0x2e8] sm:$0xff]
    %v217 = vld [vmem:[#allocation5 + $0x2f0] sm:$0xff]
    %v218 = vld [vmem:[#allocation5 + $0x2f8] sm:$0xff]
    %v219 = vld [vmem:[#allocation5 + $0x300] sm:$0xff]
    %v220 = vld [vmem:[#allocation5 + $0x308] sm:$0xff]
    %v221 = vld [vmem:[#allocation5 + $0x310] sm:$0xff]
    %v222 = vld [vmem:[#allocation5 + $0x318] sm:$0xff]
    %v223 = vld [vmem:[#allocation5 + $0x320] sm:$0xff]
    %v224 = vld [vmem:[#allocation5 + $0x328] sm:$0xff]
    %v225 = vld [vmem:[#allocation5 + $0x330] sm:$0xff]
    %v226 = vld [vmem:[#allocation5 + $0x338] sm:$0xff]
    %v227 = vld [vmem:[#allocation5 + $0x340] sm:$0xff]
    %v228 = vld [vmem:[#allocation5 + $0x348] sm:$0xff]
    %v229 = vld [vmem:[#allocation5 + $0x350] sm:$0xff]
    %v230 = vld [vmem:[#allocation5 + $0x358] sm:$0xff]
    %v231 = vld [vmem:[#allocation5 + $0x360] sm:$0xff]
    %v232 = vld [vmem:[#allocation5 + $0x368] sm:$0xff]
    %v233 = vld [vmem:[#allocation5 + $0x370] sm:$0xff]
    %v234 = vld [vmem:[#allocation5 + $0x378] sm:$0xff]
    %v235 = vld [vmem:[#allocation5 + $0x380] sm:$0xff]
    %v236 = vld [vmem:[#allocation5 + $0x388] sm:$0xff]
    %v237 = vld [vmem:[#allocation5 + $0x390] sm:$0xff]
    %v238 = vld [vmem:[#allocation5 + $0x398] sm:$0xff]
    %v239 = vld [vmem:[#allocation5 + $0x3a0] sm:$0xff]
    %v240 = vld [vmem:[#allocation5 + $0x3a8] sm:$0xff]
    %v241 = vld [vmem:[#allocation5 + $0x3b0] sm:$0xff]
    %v242 = vld [vmem:[#allocation5 + $0x3b8] sm:$0xff]
    %v243 = vld [vmem:[#allocation5 + $0x3c0] sm:$0xff]
    %v244 = vld [vmem:[#allocation5 + $0x3c8] sm:$0xff]
    %v245 = vld [vmem:[#allocation5 + $0x3d0] sm:$0xff]
    %v246 = vld [vmem:[#allocation5 + $0x3d8] sm:$0xff]
    %v247 = vld [vmem:[#allocation5 + $0x3e0] sm:$0xff]
    %v248 = vld [vmem:[#allocation5 + $0x3e8] sm:$0xff]
    %v249 = vld [vmem:[#allocation5 + $0x3f0] sm:$0xff]
    %v250 = vld [vmem:[#allocation5 + $0x3f8] sm:$0xff]
    %v251 = vld [vmem:[#allocation5 + $0x400] sm:$0xff]
    %v252 = vld [vmem:[#allocation5 + $0x408] sm:$0xff]
    %v253 = vld [vmem:[#allocation5 + $0x410] sm:$0xff]
    %v254 = vld [vmem:[#allocation5 + $0x418] sm:$0xff]
    %v255 = vld [vmem:[#allocation5 + $0x420] sm:$0xff]
    %v256 = vld [vmem:[#allocation5 + $0x428] sm:$0xff]
    %v257 = vld [vmem:[#allocation5 + $0x430] sm:$0xff]
    %v258 = vld [vmem:[#allocation5 + $0x438] sm:$0xff]
    %v259 = vld [vmem:[#allocation5 + $0x440] sm:$0xff]
    %v260 = vld [vmem:[#allocation5 + $0x448] sm:$0xff]
    %v261 = vld [vmem:[#allocation5 + $0x450] sm:$0xff]
    %v262 = vld [vmem:[#allocation5 + $0x458] sm:$0xff]
    %v263 = vld [vmem:[#allocation5 + $0x460] sm:$0xff]
    %v264 = vld [vmem:[#allocation5 + $0x468] sm:$0xff]
    %v265 = vld [vmem:[#allocation5 + $0x470] sm:$0xff]
    %v266 = vld [vmem:[#allocation5 + $0x478] sm:$0xff]
    %v267 = vld [vmem:[#allocation5 + $0x480] sm:$0xff]
    %v268 = vld [vmem:[#allocation5 + $0x488] sm:$0xff]
    %v269 = vld [vmem:[#allocation5 + $0x490] sm:$0xff]
    %v270 = vld [vmem:[#allocation5 + $0x498] sm:$0xff]
    %v271 = vld [vmem:[#allocation5 + $0x4a0] sm:$0xff]
    %v272 = vld [vmem:[#allocation5 + $0x4a8] sm:$0xff]
    %v273 = vld [vmem:[#allocation5 + $0x4b0] sm:$0xff]
    %v274 = vld [vmem:[#allocation5 + $0x4b8] sm:$0xff]
    %v275 = vld [vmem:[#allocation5 + $0x4c0] sm:$0xff]
    %v276 = vld [vmem:[#allocation5 + $0x4c8] sm:$0xff]
    %v277 = vld [vmem:[#allocation5 + $0x4d0] sm:$0xff]
    %v278 = vld [vmem:[#allocation5 + $0x4d8] sm:$0xff]
    %v279 = vld [vmem:[#allocation5 + $0x4e0] sm:$0xff]
    %v280 = vld [vmem:[#allocation5 + $0x4e8] sm:$0xff]
    %v281 = vld [vmem:[#allocation5 + $0x4f0] sm:$0xff]
    %v282 = vld [vmem:[#allocation5 + $0x4f8] sm:$0xff]
    %v283 = vld [vmem:[#allocation5 + $0x500] sm:$0xff]
    %v284 = vld [vmem:[#allocation5 + $0x508] sm:$0xff]
    %v285 = vld [vmem:[#allocation5 + $0x510] sm:$0xff]
    %v286 = vld [vmem:[#allocation5 + $0x518] sm:$0xff]
    %v287 = vld [vmem:[#allocation5 + $0x520] sm:$0xff]
    %v288 = vld [vmem:[#allocation5 + $0x528] sm:$0xff]
    %v289 = vld [vmem:[#allocation5 + $0x530] sm:$0xff]
    %v290 = vld [vmem:[#allocation5 + $0x538] sm:$0xff]
    %v291 = vld [vmem:[#allocation5 + $0x540] sm:$0xff]
    %v292 = vld [vmem:[#allocation5 + $0x548] sm:$0xff]
    %v293 = vld [vmem:[#allocation5 + $0x550] sm:$0xff]
    %v294 = vld [vmem:[#allocation5 + $0x558] sm:$0xff]
    %v295 = vld [vmem:[#allocation5 + $0x560] sm:$0xff]
    %v296 = vld [vmem:[#allocation5 + $0x568] sm:$0xff]
    %v297 = vld [vmem:[#allocation5 + $0x570] sm:$0xff]
    %v298 = vld [vmem:[#allocation5 + $0x578] sm:$0xff]
    %v299 = vld [vmem:[#allocation5 + $0x580] sm:$0xff]
    %v300 = vld [vmem:[#allocation5 + $0x588] sm:$0xff]
    %v301 = vld [vmem:[#allocation5 + $0x590] sm:$0xff]
    %v302 = vld [vmem:[#allocation5 + $0x598] sm:$0xff]
    %v303 = vld [vmem:[#allocation5 + $0x5a0] sm:$0xff]
    %v304 = vld [vmem:[#allocation5 + $0x5a8] sm:$0xff]
    %v305 = vld [vmem:[#allocation5 + $0x5b0] sm:$0xff]
    %v306 = vld [vmem:[#allocation5 + $0x5b8] sm:$0xff]
    %v307 = vld [vmem:[#allocation5 + $0x5c0] sm:$0xff]
    %v308 = vld [vmem:[#allocation5 + $0x5c8] sm:$0xff]
    %v309 = vld [vmem:[#allocation5 + $0x5d0] sm:$0xff]
    %v310 = vld [vmem:[#allocation5 + $0x5d8] sm:$0xff]
    %v311 = vld [vmem:[#allocation5 + $0x5e0] sm:$0xff]
    %v312 = vld [vmem:[#allocation5 + $0x5e8] sm:$0xff]
    %v313 = vld [vmem:[#allocation5 + $0x5f0] sm:$0xff]
    %v314 = vld [vmem:[#allocation5 + $0x5f8] sm:$0xff]
    %v315 = vld [vmem:[#allocation5 + $0x600] sm:$0xff]
    %v316 = vld [vmem:[#allocation5 + $0x608] sm:$0xff]
    %v317 = vld [vmem:[#allocation5 + $0x610] sm:$0xff]
    %v318 = vld [vmem:[#allocation5 + $0x618] sm:$0xff]
    %v319 = vld [vmem:[#allocation5 + $0x620] sm:$0xff]
    %v320 = vld [vmem:[#allocation5 + $0x628] sm:$0xff]
    %v321 = vld [vmem:[#allocation5 + $0x630] sm:$0xff]
    %v322 = vld [vmem:[#allocation5 + $0x638] sm:$0xff]
    %v323 = vld [vmem:[#allocation5 + $0x640] sm:$0xff]
    %v324 = vld [vmem:[#allocation5 + $0x648] sm:$0xff]
    %v325 = vld [vmem:[#allocation5 + $0x650] sm:$0xff]
    %v326 = vld [vmem:[#allocation5 + $0x658] sm:$0xff]
    %v327 = vld [vmem:[#allocation5 + $0x660] sm:$0xff]
    %v328 = vld [vmem:[#allocation5 + $0x668] sm:$0xff]
    %v329 = vld [vmem:[#allocation5 + $0x670] sm:$0xff]
    %v330 = vld [vmem:[#allocation5 + $0x678] sm:$0xff]
    %v331 = vld [vmem:[#allocation5 + $0x680] sm:$0xff]
    %v332 = vld [vmem:[#allocation5 + $0x688] sm:$0xff]
    %v333 = vld [vmem:[#allocation5 + $0x690] sm:$0xff]
    %v334 = vld [vmem:[#allocation5 + $0x698] sm:$0xff]
    %v335 = vld [vmem:[#allocation5 + $0x6a0] sm:$0xff]
    %v336 = vld [vmem:[#allocation5 + $0x6a8] sm:$0xff]
    %v337 = vld [vmem:[#allocation5 + $0x6b0] sm:$0xff]
    %v338 = vld [vmem:[#allocation5 + $0x6b8] sm:$0xff]
    %v339 = vld [vmem:[#allocation5 + $0x6c0] sm:$0xff]
    %v340 = vld [vmem:[#allocation5 + $0x6c8] sm:$0xff]
    %v341 = vld [vmem:[#allocation5 + $0x6d0] sm:$0xff]
    %v342 = vld [vmem:[#allocation5 + $0x6d8] sm:$0xff]
    %v343 = vld [vmem:[#allocation5 + $0x6e0] sm:$0xff]
    %v344 = vld [vmem:[#allocation5 + $0x6e8] sm:$0xff]
    %v345 = vld [vmem:[#allocation5 + $0x6f0] sm:$0xff]
    %v346 = vld [vmem:[#allocation5 + $0x6f8] sm:$0xff]
    %v347 = vld [vmem:[#allocation5 + $0x700] sm:$0xff]
    %v348 = vld [vmem:[#allocation5 + $0x708] sm:$0xff]
    %v349 = vld [vmem:[#allocation5 + $0x710] sm:$0xff]
    %v350 = vld [vmem:[#allocation5 + $0x718] sm:$0xff]
    %v351 = vld [vmem:[#allocation5 + $0x720] sm:$0xff]
    %v352 = vld [vmem:[#allocation5 + $0x728] sm:$0xff]
    %v353 = vld [vmem:[#allocation5 + $0x730] sm:$0xff]
    %v354 = vld [vmem:[#allocation5 + $0x738] sm:$0xff]
    %v355 = vld [vmem:[#allocation5 + $0x740] sm:$0xff]
    %v356 = vld [vmem:[#allocation5 + $0x748] sm:$0xff]
    %v357 = vld [vmem:[#allocation5 + $0x750] sm:$0xff]
    %v358 = vld [vmem:[#allocation5 + $0x758] sm:$0xff]
    %v359 = vld [vmem:[#allocation5 + $0x760] sm:$0xff]
    %v360 = vld [vmem:[#allocation5 + $0x768] sm:$0xff]
    %v361 = vld [vmem:[#allocation5 + $0x770] sm:$0xff]
    %v362 = vld [vmem:[#allocation5 + $0x778] sm:$0xff]
    %v363 = vld [vmem:[#allocation5 + $0x780] sm:$0xff]
    %v364 = vld [vmem:[#allocation5 + $0x788] sm:$0xff]
    %v365 = vld [vmem:[#allocation5 + $0x790] sm:$0xff]
    %v366 = vld [vmem:[#allocation5 + $0x798] sm:$0xff]
    %v367 = vld [vmem:[#allocation5 + $0x7a0] sm:$0xff]
    %v368 = vld [vmem:[#allocation5 + $0x7a8] sm:$0xff]
    %v369 = vld [vmem:[#allocation5 + $0x7b0] sm:$0xff]
    %v370 = vld [vmem:[#allocation5 + $0x7b8] sm:$0xff]
    %v371 = vld [vmem:[#allocation5 + $0x7c0] sm:$0xff]
    %v372 = vld [vmem:[#allocation5 + $0x7c8] sm:$0xff]
    %v373 = vld [vmem:[#allocation5 + $0x7d0] sm:$0xff]
    %v374 = vld [vmem:[#allocation5 + $0x7d8] sm:$0xff]
    %v375 = vld [vmem:[#allocation5 + $0x7e0] sm:$0xff]
    %v376 = vld [vmem:[#allocation5 + $0x7e8] sm:$0xff]
    %v377 = vld [vmem:[#allocation5 + $0x7f0] sm:$0xff]
    %v378 = vld [vmem:[#allocation5 + $0x7f8] sm:$0xff]
    %v379 = vld [vmem:[#allocation5 + $0x800] sm:$0xff]
    %v380 = vld [vmem:[#allocation5 + $0x808] sm:$0xff]
    %v381 = vld [vmem:[#allocation5 + $0x810] sm:$0xff]
    %v382 = vld [vmem:[#allocation5 + $0x818] sm:$0xff]
    %v383 = vld [vmem:[#allocation5 + $0x820] sm:$0xff]
    %v384 = vld [vmem:[#allocation5 + $0x828] sm:$0xff]
    %v385 = vld [vmem:[#allocation5 + $0x830] sm:$0xff]
    %v386 = vld [vmem:[#allocation5 + $0x838] sm:$0xff]
    %v387 = vld [vmem:[#allocation5 + $0x840] sm:$0xff]
    %v388 = vld [vmem:[#allocation5 + $0x848] sm:$0xff]
    %v389 = vld [vmem:[#allocation5 + $0x850] sm:$0xff]
    %v390 = vld [vmem:[#allocation5 + $0x858] sm:$0xff]
    %v391 = vld [vmem:[#allocation5 + $0x860] sm:$0xff]
    %v392 = vld [vmem:[#allocation5 + $0x868] sm:$0xff]
    %v393 = vld [vmem:[#allocation5 + $0x870] sm:$0xff]
    %v394 = vld [vmem:[#allocation5 + $0x878] sm:$0xff]
    %v395 = vld [vmem:[#allocation5 + $0x880] sm:$0xff]
    %v396 = vld [vmem:[#allocation5 + $0x888] sm:$0xff]
    %v397 = vld [vmem:[#allocation5 + $0x890] sm:$0xff]
    %v398 = vld [vmem:[#allocation5 + $0x898] sm:$0xff]
    %v399 = vld [vmem:[#allocation5 + $0x8a0] sm:$0xff]
    %v400 = vld [vmem:[#allocation5 + $0x8a8] sm:$0xff]
    %v401 = vld [vmem:[#allocation5 + $0x8b0] sm:$0xff]
    %v402 = vld [vmem:[#allocation5 + $0x8b8] sm:$0xff]
    %v403 = vld [vmem:[#allocation5 + $0x8c0] sm:$0xff]
    %v404 = vld [vmem:[#allocation5 + $0x8c8] sm:$0xff]
    %v405 = vld [vmem:[#allocation5 + $0x8d0] sm:$0xff]
    %v406 = vld [vmem:[#allocation5 + $0x8d8] sm:$0xff]
    %v407 = vld [vmem:[#allocation5 + $0x8e0] sm:$0xff]
    %v408 = vld [vmem:[#allocation5 + $0x8e8] sm:$0xff]
    %v409 = vld [vmem:[#allocation5 + $0x8f0] sm:$0xff]
    %v410 = vld [vmem:[#allocation5 + $0x8f8] sm:$0xff]
    %v411 = vld [vmem:[#allocation5 + $0x900] sm:$0xff]
    %v412 = vld [vmem:[#allocation5 + $0x908] sm:$0xff]
    %v413 = vld [vmem:[#allocation5 + $0x910] sm:$0xff]
    %v414 = vld [vmem:[#allocation5 + $0x918] sm:$0xff]
    %v415 = vld [vmem:[#allocation5 + $0x920] sm:$0xff]
    %v416 = vld [vmem:[#allocation5 + $0x928] sm:$0xff]
    %v417 = vld [vmem:[#allocation5 + $0x930] sm:$0xff]
    %v418 = vld [vmem:[#allocation5 + $0x938] sm:$0xff]
    %v419 = vld [vmem:[#allocation5 + $0x940] sm:$0xff]
    %v420 = vld [vmem:[#allocation5 + $0x948] sm:$0xff]
    %v421 = vld [vmem:[#allocation5 + $0x950] sm:$0xff]
    %v422 = vld [vmem:[#allocation5 + $0x958] sm:$0xff]
    %v423 = vld [vmem:[#allocation5 + $0x960] sm:$0xff]
    %v424 = vld [vmem:[#allocation5 + $0x968] sm:$0xff]
    %v425 = vld [vmem:[#allocation5 + $0x970] sm:$0xff]
    %v426 = vld [vmem:[#allocation5 + $0x978] sm:$0xff]
    %v427 = vld [vmem:[#allocation5 + $0x980] sm:$0xff]
    %v428 = vld [vmem:[#allocation5 + $0x988] sm:$0xff]
    %v429 = vld [vmem:[#allocation5 + $0x990] sm:$0xff]
    %v430 = vld [vmem:[#allocation5 + $0x998] sm:$0xff]
    %v431 = vld [vmem:[#allocation5 + $0x9a0] sm:$0xff]
    %v432 = vld [vmem:[#allocation5 + $0x9a8] sm:$0xff]
    %v433 = vld [vmem:[#allocation5 + $0x9b0] sm:$0xff]
    %v434 = vld [vmem:[#allocation5 + $0x9b8] sm:$0xff]
    %v435 = vld [vmem:[#allocation5 + $0x9c0] sm:$0xff]
    %v436 = vld [vmem:[#allocation5 + $0x9c8] sm:$0xff]
    %v437 = vld [vmem:[#allocation5 + $0x9d0] sm:$0xff]
    %v438 = vld [vmem:[#allocation5 + $0x9d8] sm:$0xff]
    %v439 = vld [vmem:[#allocation5 + $0x9e0] sm:$0xff]
    %v440 = vld [vmem:[#allocation5 + $0x9e8] sm:$0xff]
    %v441 = vld [vmem:[#allocation5 + $0x9f0] sm:$0xff]
    %v442 = vld [vmem:[#allocation5 + $0x9f8] sm:$0xff]
    %v443 = vld [vmem:[#allocation5 + $0xa00] sm:$0xff]
    %v444 = vld [vmem:[#allocation5 + $0xa08] sm:$0xff]
    %v445 = vld [vmem:[#allocation5 + $0xa10] sm:$0xff]
    %v446 = vld [vmem:[#allocation5 + $0xa18] sm:$0xff]
    %v447 = vld [vmem:[#allocation5 + $0xa20] sm:$0xff]
    %v448 = vld [vmem:[#allocation5 + $0xa28] sm:$0xff]
    %v449 = vld [vmem:[#allocation5 + $0xa30] sm:$0xff]
    %v450 = vld [vmem:[#allocation5 + $0xa38] sm:$0xff]
    %v451 = vld [vmem:[#allocation5 + $0xa40] sm:$0xff]
    %v452 = vld [vmem:[#allocation5 + $0xa48] sm:$0xff]
    %v453 = vld [vmem:[#allocation5 + $0xa50] sm:$0xff]
    %v454 = vld [vmem:[#allocation5 + $0xa58] sm:$0xff]
    %v455 = vld [vmem:[#allocation5 + $0xa60] sm:$0xff]
    %v456 = vld [vmem:[#allocation5 + $0xa68] sm:$0xff]
    %v457 = vld [vmem:[#allocation5 + $0xa70] sm:$0xff]
    %v458 = vld [vmem:[#allocation5 + $0xa78] sm:$0xff]
    %v459 = vld [vmem:[#allocation5 + $0xa80] sm:$0xff]
    %v460 = vld [vmem:[#allocation5 + $0xa88] sm:$0xff]
    %v461 = vld [vmem:[#allocation5 + $0xa90] sm:$0xff]
    %v462 = vld [vmem:[#allocation5 + $0xa98] sm:$0xff]
    %v463 = vld [vmem:[#allocation5 + $0xaa0] sm:$0xff]
    %v464 = vld [vmem:[#allocation5 + $0xaa8] sm:$0xff]
    %v465 = vld [vmem:[#allocation5 + $0xab0] sm:$0xff]
    %v466 = vld [vmem:[#allocation5 + $0xab8] sm:$0xff]
    %v467 = vld [vmem:[#allocation5 + $0xac0] sm:$0xff]
    %v468 = vld [vmem:[#allocation5 + $0xac8] sm:$0xff]
    %v469 = vld [vmem:[#allocation5 + $0xad0] sm:$0xff]
    %v470 = vld [vmem:[#allocation5 + $0xad8] sm:$0xff]
    %v471 = vld [vmem:[#allocation5 + $0xae0] sm:$0xff]
    %v472 = vld [vmem:[#allocation5 + $0xae8] sm:$0xff]
    %v473 = vld [vmem:[#allocation5 + $0xaf0] sm:$0xff]
    %v474 = vld [vmem:[#allocation5 + $0xaf8] sm:$0xff]
    %v475 = vld [vmem:[#allocation5 + $0xb00] sm:$0xff]
    %v476 = vld [vmem:[#allocation5 + $0xb08] sm:$0xff]
    %v477 = vld [vmem:[#allocation5 + $0xb10] sm:$0xff]
    %v478 = vld [vmem:[#allocation5 + $0xb18] sm:$0xff]
    %v479 = vld [vmem:[#allocation5 + $0xb20] sm:$0xff]
    %v480 = vld [vmem:[#allocation5 + $0xb28] sm:$0xff]
    %v481 = vld [vmem:[#allocation5 + $0xb30] sm:$0xff]
    %v482 = vld [vmem:[#allocation5 + $0xb38] sm:$0xff]
    %v483 = vld [vmem:[#allocation5 + $0xb40] sm:$0xff]
    %v484 = vld [vmem:[#allocation5 + $0xb48] sm:$0xff]
    %v485 = vld [vmem:[#allocation5 + $0xb50] sm:$0xff]
    %v486 = vld [vmem:[#allocation5 + $0xb58] sm:$0xff]
    %v487 = vld [vmem:[#allocation5 + $0xb60] sm:$0xff]
    %v488 = vld [vmem:[#allocation5 + $0xb68] sm:$0xff]
    %v489 = vld [vmem:[#allocation5 + $0xb70] sm:$0xff]
    %v490 = vld [vmem:[#allocation5 + $0xb78] sm:$0xff]
    %v491 = vld [vmem:[#allocation5 + $0xb80] sm:$0xff]
    %v492 = vld [vmem:[#allocation5 + $0xb88] sm:$0xff]
    %v493 = vld [vmem:[#allocation5 + $0xb90] sm:$0xff]
    %v494 = vld [vmem:[#allocation5 + $0xb98] sm:$0xff]
    %v495 = vld [vmem:[#allocation5 + $0xba0] sm:$0xff]
    %v496 = vld [vmem:[#allocation5 + $0xba8] sm:$0xff]
    %v497 = vld [vmem:[#allocation5 + $0xbb0] sm:$0xff]
    %v498 = vld [vmem:[#allocation5 + $0xbb8] sm:$0xff]
    %v499 = vld [vmem:[#allocation5 + $0xbc0] sm:$0xff]
    %v500 = vld [vmem:[#allocation5 + $0xbc8] sm:$0xff]
    %v501 = vld [vmem:[#allocation5 + $0xbd0] sm:$0xff]
    %v502 = vld [vmem:[#allocation5 + $0xbd8] sm:$0xff]
    %v503 = vld [vmem:[#allocation5 + $0xbe0] sm:$0xff]
    %v504 = vld [vmem:[#allocation5 + $0xbe8] sm:$0xff]
    %v505 = vld [vmem:[#allocation5 + $0xbf0] sm:$0xff]
    %v506 = vld [vmem:[#allocation5 + $0xbf8] sm:$0xff]
    %v507 = vld [vmem:[#allocation5 + $0xc00] sm:$0xff]
    %v508 = vld [vmem:[#allocation5 + $0xc08] sm:$0xff]
    %v509 = vld [vmem:[#allocation5 + $0xc10] sm:$0xff]
    %v510 = vld [vmem:[#allocation5 + $0xc18] sm:$0xff]
    %v511 = vld [vmem:[#allocation5 + $0xc20] sm:$0xff]
    %v512 = vld [vmem:[#allocation5 + $0xc28] sm:$0xff]
    %v513 = vld [vmem:[#allocation5 + $0xc30] sm:$0xff]
    %v514 = vld [vmem:[#allocation5 + $0xc38] sm:$0xff]
    %v515 = vld [vmem:[#allocation5 + $0xc40] sm:$0xff]
    %v516 = vld [vmem:[#allocation5 + $0xc48] sm:$0xff]
    %v517 = vld [vmem:[#allocation5 + $0xc50] sm:$0xff]
    %v518 = vld [vmem:[#allocation5 + $0xc58] sm:$0xff]
    %v519 = vld [vmem:[#allocation5 + $0xc60] sm:$0xff]
    %v520 = vld [vmem:[#allocation5 + $0xc68] sm:$0xff]
    %v521 = vld [vmem:[#allocation5 + $0xc70] sm:$0xff]
    %v522 = vld [vmem:[#allocation5 + $0xc78] sm:$0xff]
    %v523 = vld [vmem:[#allocation5 + $0xc80] sm:$0xff]
    %v524 = vld [vmem:[#allocation5 + $0xc88] sm:$0xff]
    %v525 = vld [vmem:[#allocation5 + $0xc90] sm:$0xff]
    %v526 = vld [vmem:[#allocation5 + $0xc98] sm:$0xff]
    %v527 = vld [vmem:[#allocation5 + $0xca0] sm:$0xff]
    %v528 = vld [vmem:[#allocation5 + $0xca8] sm:$0xff]
    %v529 = vld [vmem:[#allocation5 + $0xcb0] sm:$0xff]
    %v530 = vld [vmem:[#allocation5 + $0xcb8] sm:$0xff]
    %v531 = vld [vmem:[#allocation5 + $0xcc0] sm:$0xff]
    %v532 = vld [vmem:[#allocation5 + $0xcc8] sm:$0xff]
    %v533 = vld [vmem:[#allocation5 + $0xcd0] sm:$0xff]
    %v534 = vld [vmem:[#allocation5 + $0xcd8] sm:$0xff]
    %v535 = vld [vmem:[#allocation5 + $0xce0] sm:$0xff]
    %v536 = vld [vmem:[#allocation5 + $0xce8] sm:$0xff]
    %v537 = vld [vmem:[#allocation5 + $0xcf0] sm:$0xff]
    %v538 = vld [vmem:[#allocation5 + $0xcf8] sm:$0xff]
    %v539 = vld [vmem:[#allocation5 + $0xd00] sm:$0xff]
    %v540 = vld [vmem:[#allocation5 + $0xd08] sm:$0xff]
    %v541 = vld [vmem:[#allocation5 + $0xd10] sm:$0xff]
    %v542 = vld [vmem:[#allocation5 + $0xd18] sm:$0xff]
    %v543 = vld [vmem:[#allocation5 + $0xd20] sm:$0xff]
    %v544 = vld [vmem:[#allocation5 + $0xd28] sm:$0xff]
    %v545 = vld [vmem:[#allocation5 + $0xd30] sm:$0xff]
    %v546 = vld [vmem:[#allocation5 + $0xd38] sm:$0xff]
    %v547 = vld [vmem:[#allocation5 + $0xd40] sm:$0xff]
    %v548 = vld [vmem:[#allocation5 + $0xd48] sm:$0xff]
    %v549 = vld [vmem:[#allocation5 + $0xd50] sm:$0xff]
    %v550 = vld [vmem:[#allocation5 + $0xd58] sm:$0xff]
    %v551 = vld [vmem:[#allocation5 + $0xd60] sm:$0xff]
    %v552 = vld [vmem:[#allocation5 + $0xd68] sm:$0xff]
    %v553 = vld [vmem:[#allocation5 + $0xd70] sm:$0xff]
    %v554 = vld [vmem:[#allocation5 + $0xd78] sm:$0xff]
    %v555 = vld [vmem:[#allocation5 + $0xd80] sm:$0xff]
    %v556 = vld [vmem:[#allocation5 + $0xd88] sm:$0xff]
    %v557 = vld [vmem:[#allocation5 + $0xd90] sm:$0xff]
    %v558 = vld [vmem:[#allocation5 + $0xd98] sm:$0xff]
    %v559 = vld [vmem:[#allocation5 + $0xda0] sm:$0xff]
    %v560 = vld [vmem:[#allocation5 + $0xda8] sm:$0xff]
    %v561 = vld [vmem:[#allocation5 + $0xdb0] sm:$0xff]
    %v562 = vld [vmem:[#allocation5 + $0xdb8] sm:$0xff]
    %v563 = vld [vmem:[#allocation5 + $0xdc0] sm:$0xff]
    %v564 = vld [vmem:[#allocation5 + $0xdc8] sm:$0xff]
    %v565 = vld [vmem:[#allocation5 + $0xdd0] sm:$0xff]
    %v566 = vld [vmem:[#allocation5 + $0xdd8] sm:$0xff]
    %v567 = vld [vmem:[#allocation5 + $0xde0] sm:$0xff]
    %v568 = vld [vmem:[#allocation5 + $0xde8] sm:$0xff]
    %v569 = vld [vmem:[#allocation5 + $0xdf0] sm:$0xff]
    %v570 = vld [vmem:[#allocation5 + $0xdf8] sm:$0xff]
    %v571 = vld [vmem:[#allocation5 + $0xe00] sm:$0xff]
    %v572 = vld [vmem:[#allocation5 + $0xe08] sm:$0xff]
    %v573 = vld [vmem:[#allocation5 + $0xe10] sm:$0xff]
    %v574 = vld [vmem:[#allocation5 + $0xe18] sm:$0xff]
    %v575 = vld [vmem:[#allocation5 + $0xe20] sm:$0xff]
    %v576 = vld [vmem:[#allocation5 + $0xe28] sm:$0xff]
    %v577 = vld [vmem:[#allocation5 + $0xe30] sm:$0xff]
    %v578 = vld [vmem:[#allocation5 + $0xe38] sm:$0xff]
    %v579 = vld [vmem:[#allocation5 + $0xe40] sm:$0xff]
    %v580 = vld [vmem:[#allocation5 + $0xe48] sm:$0xff]
    %v581 = vld [vmem:[#allocation5 + $0xe50] sm:$0xff]
    %v582 = vld [vmem:[#allocation5 + $0xe58] sm:$0xff]
    %v583 = vld [vmem:[#allocation5 + $0xe60] sm:$0xff]
    %v584 = vld [vmem:[#allocation5 + $0xe68] sm:$0xff]
    %v585 = vld [vmem:[#allocation5 + $0xe70] sm:$0xff]
    %v586 = vld [vmem:[#allocation5 + $0xe78] sm:$0xff]
    %v587 = vld [vmem:[#allocation5 + $0xe80] sm:$0xff]
    %v588 = vld [vmem:[#allocation5 + $0xe88] sm:$0xff]
    %v589 = vld [vmem:[#allocation5 + $0xe90] sm:$0xff]
    %v590 = vld [vmem:[#allocation5 + $0xe98] sm:$0xff]
    %v591 = vld [vmem:[#allocation5 + $0xea0] sm:$0xff]
    %v592 = vld [vmem:[#allocation5 + $0xea8] sm:$0xff]
    %v593 = vld [vmem:[#allocation5 + $0xeb0] sm:$0xff]
    %v594 = vld [vmem:[#allocation5 + $0xeb8] sm:$0xff]
    %v595 = vld [vmem:[#allocation5 + $0xec0] sm:$0xff]
    %v596 = vld [vmem:[#allocation5 + $0xec8] sm:$0xff]
    %v597 = vld [vmem:[#allocation5 + $0xed0] sm:$0xff]
    %v598 = vld [vmem:[#allocation5 + $0xed8] sm:$0xff]
    %v599 = vld [vmem:[#allocation5 + $0xee0] sm:$0xff]
    %v600 = vld [vmem:[#allocation5 + $0xee8] sm:$0xff]
    %v601 = vld [vmem:[#allocation5 + $0xef0] sm:$0xff]
    %v602 = vld [vmem:[#allocation5 + $0xef8] sm:$0xff]
    %v603 = vld [vmem:[#allocation5 + $0xf00] sm:$0xff]
    %v604 = vld [vmem:[#allocation5 + $0xf08] sm:$0xff]
    %v605 = vld [vmem:[#allocation5 + $0xf10] sm:$0xff]
    %v606 = vld [vmem:[#allocation5 + $0xf18] sm:$0xff]
    %v607 = vld [vmem:[#allocation5 + $0xf20] sm:$0xff]
    %v608 = vld [vmem:[#allocation5 + $0xf28] sm:$0xff]
    %v609 = vld [vmem:[#allocation5 + $0xf30] sm:$0xff]
    %v610 = vld [vmem:[#allocation5 + $0xf38] sm:$0xff]
    %v611 = vld [vmem:[#allocation5 + $0xf40] sm:$0xff]
    %v612 = vld [vmem:[#allocation5 + $0xf48] sm:$0xff]
    %v613 = vld [vmem:[#allocation5 + $0xf50] sm:$0xff]
    %v614 = vld [vmem:[#allocation5 + $0xf58] sm:$0xff]
    %v615 = vld [vmem:[#allocation5 + $0xf60] sm:$0xff]
    %v616 = vld [vmem:[#allocation5 + $0xf68] sm:$0xff]
    %v617 = vld [vmem:[#allocation5 + $0xf70] sm:$0xff]
    %v618 = vld [vmem:[#allocation5 + $0xf78] sm:$0xff]
    %v619 = vld [vmem:[#allocation5 + $0xf80] sm:$0xff]
    %v620 = vld [vmem:[#allocation5 + $0xf88] sm:$0xff]
    %v621 = vld [vmem:[#allocation5 + $0xf90] sm:$0xff]
    %v622 = vld [vmem:[#allocation5 + $0xf98] sm:$0xff]
    %v623 = vld [vmem:[#allocation5 + $0xfa0] sm:$0xff]
    %v624 = vld [vmem:[#allocation5 + $0xfa8] sm:$0xff]
    %v625 = vld [vmem:[#allocation5 + $0xfb0] sm:$0xff]
    %v626 = vld [vmem:[#allocation5 + $0xfb8] sm:$0xff]
    %v627 = vld [vmem:[#allocation5 + $0xfc0] sm:$0xff]
    %v628 = vld [vmem:[#allocation5 + $0xfc8] sm:$0xff]
    %v629 = vld [vmem:[#allocation5 + $0xfd0] sm:$0xff]
    %v630 = vld [vmem:[#allocation5 + $0xfd8] sm:$0xff]
    %v631 = vld [vmem:[#allocation5 + $0xfe0] sm:$0xff]
    %v632 = vld [vmem:[#allocation5 + $0xfe8] sm:$0xff]
    %v633 = vld [vmem:[#allocation5 + $0xff0] sm:$0xff]
    %v634 = vld [vmem:[#allocation5 + $0xff8] sm:$0xff]
    %v635 = vld [vmem:[#allocation5 + $0x1000] sm:$0xff]
    %v636 = vld [vmem:[#allocation5 + $0x1008] sm:$0xff]
    %v637 = vld [vmem:[#allocation5 + $0x1010] sm:$0xff]
    %v638 = vld [vmem:[#allocation5 + $0x1018] sm:$0xff]
    %v639 = vld [vmem:[#allocation5 + $0x1020] sm:$0xff]
    %v640 = vld [vmem:[#allocation5 + $0x1028] sm:$0xff]
    %v641 = vld [vmem:[#allocation5 + $0x1030] sm:$0xff]
    %v642 = vld [vmem:[#allocation5 + $0x1038] sm:$0xff]
    %v643 = vld [vmem:[#allocation5 + $0x1040] sm:$0xff]
    %v644 = vld [vmem:[#allocation5 + $0x1048] sm:$0xff]
    %v645 = vld [vmem:[#allocation5 + $0x1050] sm:$0xff]
    %v646 = vld [vmem:[#allocation5 + $0x1058] sm:$0xff]
    %v647 = vld [vmem:[#allocation5 + $0x1060] sm:$0xff]
    %v648 = vld [vmem:[#allocation5 + $0x1068] sm:$0xff]
    %v649 = vld [vmem:[#allocation5 + $0x1070] sm:$0xff]
    %v650 = vld [vmem:[#allocation5 + $0x1078] sm:$0xff]
    %v651 = vld [vmem:[#allocation5 + $0x1080] sm:$0xff]
    %v652 = vld [vmem:[#allocation5 + $0x1088] sm:$0xff]
    %v653 = vld [vmem:[#allocation5 + $0x1090] sm:$0xff]
    %v654 = vld [vmem:[#allocation5 + $0x1098] sm:$0xff]
    %v655 = vld [vmem:[#allocation5 + $0x10a0] sm:$0xff]
    %v656 = vld [vmem:[#allocation5 + $0x10a8] sm:$0xff]
    %v657 = vld [vmem:[#allocation5 + $0x10b0] sm:$0xff]
    %v658 = vld [vmem:[#allocation5 + $0x10b8] sm:$0xff]
    %v659 = vld [vmem:[#allocation5 + $0x10c0] sm:$0xff]
    %v660 = vld [vmem:[#allocation5 + $0x10c8] sm:$0xff]
    %v661 = vld [vmem:[#allocation5 + $0x10d0] sm:$0xff]
    %v662 = vld [vmem:[#allocation5 + $0x10d8] sm:$0xff]
    %v663 = vld [vmem:[#allocation5 + $0x10e0] sm:$0xff]
    %v664 = vld [vmem:[#allocation5 + $0x10e8] sm:$0xff]
    %v665 = vld [vmem:[#allocation5 + $0x10f0] sm:$0xff]
    %v666 = vld [vmem:[#allocation5 + $0x10f8] sm:$0xff]
    %v667 = vld [vmem:[#allocation5 + $0x1100] sm:$0xff]
    %v668 = vld [vmem:[#allocation5 + $0x1108] sm:$0xff]
    %v669 = vld [vmem:[#allocation5 + $0x1110] sm:$0xff]
    %v670 = vld [vmem:[#allocation5 + $0x1118] sm:$0xff]
    %v671 = vld [vmem:[#allocation5 + $0x1120] sm:$0xff]
    %v672 = vld [vmem:[#allocation5 + $0x1128] sm:$0xff]
    %v673 = vld [vmem:[#allocation5 + $0x1130] sm:$0xff]
    %v674 = vld [vmem:[#allocation5 + $0x1138] sm:$0xff]
    %v675 = vld [vmem:[#allocation5 + $0x1140] sm:$0xff]
    %v676 = vld [vmem:[#allocation5 + $0x1148] sm:$0xff]
    %v677 = vld [vmem:[#allocation5 + $0x1150] sm:$0xff]
    %v678 = vld [vmem:[#allocation5 + $0x1158] sm:$0xff]
    %v679 = vld [vmem:[#allocation5 + $0x1160] sm:$0xff]
    %v680 = vld [vmem:[#allocation5 + $0x1168] sm:$0xff]
    %v681 = vld [vmem:[#allocation5 + $0x1170] sm:$0xff]
    %v682 = vld [vmem:[#allocation5 + $0x1178] sm:$0xff]
    %v683 = vld [vmem:[#allocation5 + $0x1180] sm:$0xff]
    %v684 = vld [vmem:[#allocation5 + $0x1188] sm:$0xff]
    %v685 = vld [vmem:[#allocation5 + $0x1190] sm:$0xff]
    %v686 = vld [vmem:[#allocation5 + $0x1198] sm:$0xff]
    %v687 = vld [vmem:[#allocation5 + $0x11a0] sm:$0xff]
    %v688 = vld [vmem:[#allocation5 + $0x11a8] sm:$0xff]
    %v689 = vld [vmem:[#allocation5 + $0x11b0] sm:$0xff]
    %v690 = vld [vmem:[#allocation5 + $0x11b8] sm:$0xff]
    %v691 = vld [vmem:[#allocation5 + $0x11c0] sm:$0xff]
    %v692 = vld [vmem:[#allocation5 + $0x11c8] sm:$0xff]
    %v693 = vld [vmem:[#allocation5 + $0x11d0] sm:$0xff]
    %v694 = vld [vmem:[#allocation5 + $0x11d8] sm:$0xff]
    %v695 = vld [vmem:[#allocation5 + $0x11e0] sm:$0xff]
    %v696 = vld [vmem:[#allocation5 + $0x11e8] sm:$0xff]
    %v697 = vld [vmem:[#allocation5 + $0x11f0] sm:$0xff]
    %v698 = vld [vmem:[#allocation5 + $0x11f8] sm:$0xff]
    %v699 = vld [vmem:[#allocation5 + $0x1200] sm:$0xff]
    %v700 = vld [vmem:[#allocation5 + $0x1208] sm:$0xff]
    %v701 = vld [vmem:[#allocation5 + $0x1210] sm:$0xff]
    %v702 = vld [vmem:[#allocation5 + $0x1218] sm:$0xff]
    %v703 = vld [vmem:[#allocation5 + $0x1220] sm:$0xff]
    %v704 = vld [vmem:[#allocation5 + $0x1228] sm:$0xff]
    %v705 = vld [vmem:[#allocation5 + $0x1230] sm:$0xff]
    %v706 = vld [vmem:[#allocation5 + $0x1238] sm:$0xff]
    %v707 = vld [vmem:[#allocation5 + $0x1240] sm:$0xff]
    %v708 = vld [vmem:[#allocation5 + $0x1248] sm:$0xff]
    %v709 = vld [vmem:[#allocation5 + $0x1250] sm:$0xff]
    %v710 = vld [vmem:[#allocation5 + $0x1258] sm:$0xff]
    %v711 = vld [vmem:[#allocation5 + $0x1260] sm:$0xff]
    %v712 = vld [vmem:[#allocation5 + $0x1268] sm:$0xff]
    %v713 = vld [vmem:[#allocation5 + $0x1270] sm:$0xff]
    %v714 = vld [vmem:[#allocation5 + $0x1278] sm:$0xff]
    %v715 = vld [vmem:[#allocation5 + $0x1280] sm:$0xff]
    %v716 = vld [vmem:[#allocation5 + $0x1288] sm:$0xff]
    %v717 = vld [vmem:[#allocation5 + $0x1290] sm:$0xff]
    %v718 = vld [vmem:[#allocation5 + $0x1298] sm:$0xff]
    %v719 = vld [vmem:[#allocation5 + $0x12a0] sm:$0xff]
    %v720 = vld [vmem:[#allocation5 + $0x12a8] sm:$0xff]
    %v721 = vld [vmem:[#allocation5 + $0x12b0] sm:$0xff]
    %v722 = vld [vmem:[#allocation5 + $0x12b8] sm:$0xff]
    %v723 = vld [vmem:[#allocation5 + $0x12c0] sm:$0xff]
    %v724 = vld [vmem:[#allocation5 + $0x12c8] sm:$0xff]
    %v725 = vld [vmem:[#allocation5 + $0x12d0] sm:$0xff]
    %v726 = vld [vmem:[#allocation5 + $0x12d8] sm:$0xff]
    %v727 = vld [vmem:[#allocation5 + $0x12e0] sm:$0xff]
    %v728 = vld [vmem:[#allocation5 + $0x12e8] sm:$0xff]
    %v729 = vld [vmem:[#allocation5 + $0x12f0] sm:$0xff]
    %v730 = vld [vmem:[#allocation5 + $0x12f8] sm:$0xff]
    %v731 = vld [vmem:[#allocation5 + $0x1300] sm:$0xff]
    %v732 = vld [vmem:[#allocation5 + $0x1308] sm:$0xff]
    %v733 = vld [vmem:[#allocation5 + $0x1310] sm:$0xff]
    %v734 = vld [vmem:[#allocation5 + $0x1318] sm:$0xff]
    %v735 = vld [vmem:[#allocation5 + $0x1320] sm:$0xff]
    %v736 = vld [vmem:[#allocation5 + $0x1328] sm:$0xff]
    %v737 = vld [vmem:[#allocation5 + $0x1330] sm:$0xff]
    %v738 = vld [vmem:[#allocation5 + $0x1338] sm:$0xff]
    %v739 = vld [vmem:[#allocation5 + $0x1340] sm:$0xff]
    %v740 = vld [vmem:[#allocation5 + $0x1348] sm:$0xff]
    %v741 = vld [vmem:[#allocation5 + $0x1350] sm:$0xff]
    %v742 = vld [vmem:[#allocation5 + $0x1358] sm:$0xff]
    %v743 = vld [vmem:[#allocation5 + $0x1360] sm:$0xff]
    %v744 = vld [vmem:[#allocation5 + $0x1368] sm:$0xff]
    %v745 = vld [vmem:[#allocation5 + $0x1370] sm:$0xff]
    %v746 = vld [vmem:[#allocation5 + $0x1378] sm:$0xff]
    %v747 = vld [vmem:[#allocation5 + $0x1380] sm:$0xff]
    %v748 = vld [vmem:[#allocation5 + $0x1388] sm:$0xff]
    %v749 = vld [vmem:[#allocation5 + $0x1390] sm:$0xff]
    %v750 = vld [vmem:[#allocation5 + $0x1398] sm:$0xff]
    %v751 = vld [vmem:[#allocation5 + $0x13a0] sm:$0xff]
    %v752 = vld [vmem:[#allocation5 + $0x13a8] sm:$0xff]
    %v753 = vld [vmem:[#allocation5 + $0x13b0] sm:$0xff]
    %v754 = vld [vmem:[#allocation5 + $0x13b8] sm:$0xff]
    %v755 = vld [vmem:[#allocation5 + $0x13c0] sm:$0xff]
    %v756 = vld [vmem:[#allocation5 + $0x13c8] sm:$0xff]
    %v757 = vld [vmem:[#allocation5 + $0x13d0] sm:$0xff]
    %v758 = vld [vmem:[#allocation5 + $0x13d8] sm:$0xff]
    %v759 = vld [vmem:[#allocation5 + $0x13e0] sm:$0xff]
    %v760 = vld [vmem:[#allocation5 + $0x13e8] sm:$0xff]
    %v761 = vld [vmem:[#allocation5 + $0x13f0] sm:$0xff]
    %v762 = vld [vmem:[#allocation5 + $0x13f8] sm:$0xff]
    %v763 = vld [vmem:[#allocation5 + $0x1400] sm:$0xff]
    %v764 = vld [vmem:[#allocation5 + $0x1408] sm:$0xff]
    %v765 = vld [vmem:[#allocation5 + $0x1410] sm:$0xff]
    %v766 = vld [vmem:[#allocation5 + $0x1418] sm:$0xff]
    %v767 = vld [vmem:[#allocation5 + $0x1420] sm:$0xff]
    %v768 = vld [vmem:[#allocation5 + $0x1428] sm:$0xff]
    %v769 = vld [vmem:[#allocation5 + $0x1430] sm:$0xff]
    %v770 = vld [vmem:[#allocation5 + $0x1438] sm:$0xff]
    %v771 = vld [vmem:[#allocation5 + $0x1440] sm:$0xff]
    %v772 = vld [vmem:[#allocation5 + $0x1448] sm:$0xff]
    %v773 = vld [vmem:[#allocation5 + $0x1450] sm:$0xff]
    %v774 = vld [vmem:[#allocation5 + $0x1458] sm:$0xff]
    %v775 = vld [vmem:[#allocation5 + $0x1460] sm:$0xff]
    %v776 = vld [vmem:[#allocation5 + $0x1468] sm:$0xff]
    %v777 = vld [vmem:[#allocation5 + $0x1470] sm:$0xff]
    %v778 = vld [vmem:[#allocation5 + $0x1478] sm:$0xff]
    %v779 = vld [vmem:[#allocation5 + $0x1480] sm:$0xff]
    %v780 = vld [vmem:[#allocation5 + $0x1488] sm:$0xff]
    %v781 = vld [vmem:[#allocation5 + $0x1490] sm:$0xff]
    %v782 = vld [vmem:[#allocation5 + $0x1498] sm:$0xff]
    %v783 = vld [vmem:[#allocation5 + $0x14a0] sm:$0xff]
    %v784 = vld [vmem:[#allocation5 + $0x14a8] sm:$0xff]
    %v785 = vld [vmem:[#allocation5 + $0x14b0] sm:$0xff]
    %v786 = vld [vmem:[#allocation5 + $0x14b8] sm:$0xff]
    %v787 = vld [vmem:[#allocation5 + $0x14c0] sm:$0xff]
    %v788 = vld [vmem:[#allocation5 + $0x14c8] sm:$0xff]
    %v789 = vld [vmem:[#allocation5 + $0x14d0] sm:$0xff]
    %v790 = vld [vmem:[#allocation5 + $0x14d8] sm:$0xff]
    %v791 = vld [vmem:[#allocation5 + $0x14e0] sm:$0xff]
    %v792 = vld [vmem:[#allocation5 + $0x14e8] sm:$0xff]
    %v793 = vld [vmem:[#allocation5 + $0x14f0] sm:$0xff]
    %v794 = vld [vmem:[#allocation5 + $0x14f8] sm:$0xff]
    %v795 = vld [vmem:[#allocation5 + $0x1500] sm:$0xff]
    %v796 = vld [vmem:[#allocation5 + $0x1508] sm:$0xff]
    %v797 = vld [vmem:[#allocation5 + $0x1510] sm:$0xff]
    %v798 = vld [vmem:[#allocation5 + $0x1518] sm:$0xff]
    %v799 = vld [vmem:[#allocation5 + $0x1520] sm:$0xff]
    %v800 = vld [vmem:[#allocation5 + $0x1528] sm:$0xff]
    %v801 = vld [vmem:[#allocation5 + $0x1530] sm:$0xff]
    %v802 = vld [vmem:[#allocation5 + $0x1538] sm:$0xff]
    %v803 = vld [vmem:[#allocation5 + $0x1540] sm:$0xff]
    %v804 = vld [vmem:[#allocation5 + $0x1548] sm:$0xff]
    %v805 = vld [vmem:[#allocation5 + $0x1550] sm:$0xff]
    %v806 = vld [vmem:[#allocation5 + $0x1558] sm:$0xff]
    %v807 = vld [vmem:[#allocation5 + $0x1560] sm:$0xff]
    %v808 = vld [vmem:[#allocation5 + $0x1568] sm:$0xff]
    %v809 = vld [vmem:[#allocation5 + $0x1570] sm:$0xff]
    %v810 = vld [vmem:[#allocation5 + $0x1578] sm:$0xff]
    %v811 = vld [vmem:[#allocation5 + $0x1580] sm:$0xff]
    %v812 = vld [vmem:[#allocation5 + $0x1588] sm:$0xff]
    %v813 = vld [vmem:[#allocation5 + $0x1590] sm:$0xff]
    %v814 = vld [vmem:[#allocation5 + $0x1598] sm:$0xff]
    %v815 = vld [vmem:[#allocation5 + $0x15a0] sm:$0xff]
    %v816 = vld [vmem:[#allocation5 + $0x15a8] sm:$0xff]
    %v817 = vld [vmem:[#allocation5 + $0x15b0] sm:$0xff]
    %v818 = vld [vmem:[#allocation5 + $0x15b8] sm:$0xff]
    %v819 = vld [vmem:[#allocation5 + $0x15c0] sm:$0xff]
    %v820 = vld [vmem:[#allocation5 + $0x15c8] sm:$0xff]
    %v821 = vld [vmem:[#allocation5 + $0x15d0] sm:$0xff]
    %v822 = vld [vmem:[#allocation5 + $0x15d8] sm:$0xff]
    %v823 = vld [vmem:[#allocation5 + $0x15e0] sm:$0xff]
    %v824 = vld [vmem:[#allocation5 + $0x15e8] sm:$0xff]
    %v825 = vld [vmem:[#allocation5 + $0x15f0] sm:$0xff]
    %v826 = vld [vmem:[#allocation5 + $0x15f8] sm:$0xff]
    %v827 = vld [vmem:[#allocation5 + $0x1600] sm:$0xff]
    %v828 = vld [vmem:[#allocation5 + $0x1608] sm:$0xff]
    %v829 = vld [vmem:[#allocation5 + $0x1610] sm:$0xff]
    %v830 = vld [vmem:[#allocation5 + $0x1618] sm:$0xff]
    %v831 = vld [vmem:[#allocation5 + $0x1620] sm:$0xff]
    %v832 = vld [vmem:[#allocation5 + $0x1628] sm:$0xff]
    %v833 = vld [vmem:[#allocation5 + $0x1630] sm:$0xff]
    %v834 = vld [vmem:[#allocation5 + $0x1638] sm:$0xff]
    %v835 = vld [vmem:[#allocation5 + $0x1640] sm:$0xff]
    %v836 = vld [vmem:[#allocation5 + $0x1648] sm:$0xff]
    %v837 = vld [vmem:[#allocation5 + $0x1650] sm:$0xff]
    %v838 = vld [vmem:[#allocation5 + $0x1658] sm:$0xff]
    %v839 = vld [vmem:[#allocation5 + $0x1660] sm:$0xff]
    %v840 = vld [vmem:[#allocation5 + $0x1668] sm:$0xff]
    %v841 = vld [vmem:[#allocation5 + $0x1670] sm:$0xff]
    %v842 = vld [vmem:[#allocation5 + $0x1678] sm:$0xff]
    %v843 = vld [vmem:[#allocation5 + $0x1680] sm:$0xff]
    %v844 = vld [vmem:[#allocation5 + $0x1688] sm:$0xff]
    %v845 = vld [vmem:[#allocation5 + $0x1690] sm:$0xff]
    %v846 = vld [vmem:[#allocation5 + $0x1698] sm:$0xff]
    %v847 = vld [vmem:[#allocation5 + $0x16a0] sm:$0xff]
    %v848 = vld [vmem:[#allocation5 + $0x16a8] sm:$0xff]
    %v849 = vld [vmem:[#allocation5 + $0x16b0] sm:$0xff]
    %v850 = vld [vmem:[#allocation5 + $0x16b8] sm:$0xff]
    %v851 = vld [vmem:[#allocation5 + $0x16c0] sm:$0xff]
    %v852 = vld [vmem:[#allocation5 + $0x16c8] sm:$0xff]
    %v853 = vld [vmem:[#allocation5 + $0x16d0] sm:$0xff]
    %v854 = vld [vmem:[#allocation5 + $0x16d8] sm:$0xff]
    %v855 = vld [vmem:[#allocation5 + $0x16e0] sm:$0xff]
    %v856 = vld [vmem:[#allocation5 + $0x16e8] sm:$0xff]
    %v857 = vld [vmem:[#allocation5 + $0x16f0] sm:$0xff]
    %v858 = vld [vmem:[#allocation5 + $0x16f8] sm:$0xff]
    %v859 = vld [vmem:[#allocation5 + $0x1700] sm:$0xff]
    %v860 = vld [vmem:[#allocation5 + $0x1708] sm:$0xff]
    %v861 = vld [vmem:[#allocation5 + $0x1710] sm:$0xff]
    %v862 = vld [vmem:[#allocation5 + $0x1718] sm:$0xff]
    %v863 = vld [vmem:[#allocation5 + $0x1720] sm:$0xff]
    %v864 = vld [vmem:[#allocation5 + $0x1728] sm:$0xff]
    %v865 = vld [vmem:[#allocation5 + $0x1730] sm:$0xff]
    %v866 = vld [vmem:[#allocation5 + $0x1738] sm:$0xff]
    %v867 = vld [vmem:[#allocation5 + $0x1740] sm:$0xff]
    %v868 = vld [vmem:[#allocation5 + $0x1748] sm:$0xff]
    %v869 = vld [vmem:[#allocation5 + $0x1750] sm:$0xff]
    %v870 = vld [vmem:[#allocation5 + $0x1758] sm:$0xff]
    %v871 = vld [vmem:[#allocation5 + $0x1760] sm:$0xff]
    %v872 = vld [vmem:[#allocation5 + $0x1768] sm:$0xff]
    %v873 = vld [vmem:[#allocation5 + $0x1770] sm:$0xff]
    %v874 = vld [vmem:[#allocation5 + $0x1778] sm:$0xff]
    %v875 = vld [vmem:[#allocation5 + $0x1780] sm:$0xff]
    %v876 = vld [vmem:[#allocation5 + $0x1788] sm:$0xff]
    %v877 = vld [vmem:[#allocation5 + $0x1790] sm:$0xff]
    %v878 = vld [vmem:[#allocation5 + $0x1798] sm:$0xff]
    %v879 = vld [vmem:[#allocation5 + $0x17a0] sm:$0xff]
    %v880 = vld [vmem:[#allocation5 + $0x17a8] sm:$0xff]
    %v881 = vld [vmem:[#allocation5 + $0x17b0] sm:$0xff]
    %v882 = vld [vmem:[#allocation5 + $0x17b8] sm:$0xff]
    %v883 = vld [vmem:[#allocation5 + $0x17c0] sm:$0xff]
    %v884 = vld [vmem:[#allocation5 + $0x17c8] sm:$0xff]
    %v885 = vld [vmem:[#allocation5 + $0x17d0] sm:$0xff]
    %v886 = vld [vmem:[#allocation5 + $0x17d8] sm:$0xff]
    %v887 = vld [vmem:[#allocation5 + $0x17e0] sm:$0xff]
    %v888 = vld [vmem:[#allocation5 + $0x17e8] sm:$0xff]
    %v889 = vld [vmem:[#allocation5 + $0x17f0] sm:$0xff]
    %v890 = vld [vmem:[#allocation5 + $0x17f8] sm:$0xff]
    %v891 = vld [vmem:[#allocation5 + $0x1800] sm:$0xff]
    %v892 = vld [vmem:[#allocation5 + $0x1808] sm:$0xff]
    %v893 = vld [vmem:[#allocation5 + $0x1810] sm:$0xff]
    %v894 = vld [vmem:[#allocation5 + $0x1818] sm:$0xff]
    %v895 = vld [vmem:[#allocation5 + $0x1820] sm:$0xff]
    %v896 = vld [vmem:[#allocation5 + $0x1828] sm:$0xff]
    %v897 = vld [vmem:[#allocation5 + $0x1830] sm:$0xff]
    %v898 = vld [vmem:[#allocation5 + $0x1838] sm:$0xff]
    %v899 = vld [vmem:[#allocation5 + $0x1840] sm:$0xff]
    %v900 = vld [vmem:[#allocation5 + $0x1848] sm:$0xff]
    %v901 = vld [vmem:[#allocation5 + $0x1850] sm:$0xff]
    %v902 = vld [vmem:[#allocation5 + $0x1858] sm:$0xff]
    %v903 = vld [vmem:[#allocation5 + $0x1860] sm:$0xff]
    %v904 = vld [vmem:[#allocation5 + $0x1868] sm:$0xff]
    %v905 = vld [vmem:[#allocation5 + $0x1870] sm:$0xff]
    %v906 = vld [vmem:[#allocation5 + $0x1878] sm:$0xff]
    %v907 = vld [vmem:[#allocation5 + $0x1880] sm:$0xff]
    %v908 = vld [vmem:[#allocation5 + $0x1888] sm:$0xff]
    %v909 = vld [vmem:[#allocation5 + $0x1890] sm:$0xff]
    %v910 = vld [vmem:[#allocation5 + $0x1898] sm:$0xff]
    %v911 = vld [vmem:[#allocation5 + $0x18a0] sm:$0xff]
    %v912 = vld [vmem:[#allocation5 + $0x18a8] sm:$0xff]
    %v913 = vld [vmem:[#allocation5 + $0x18b0] sm:$0xff]
    %v914 = vld [vmem:[#allocation5 + $0x18b8] sm:$0xff]
    %v915 = vld [vmem:[#allocation5 + $0x18c0] sm:$0xff]
    %v916 = vld [vmem:[#allocation5 + $0x18c8] sm:$0xff]
    %v917 = vld [vmem:[#allocation5 + $0x18d0] sm:$0xff]
    %v918 = vld [vmem:[#allocation5 + $0x18d8] sm:$0xff]
    %v919 = vld [vmem:[#allocation5 + $0x18e0] sm:$0xff]
    %v920 = vld [vmem:[#allocation5 + $0x18e8] sm:$0xff]
    %v921 = vld [vmem:[#allocation5 + $0x18f0] sm:$0xff]
    %v922 = vld [vmem:[#allocation5 + $0x18f8] sm:$0xff]
    %v923 = vld [vmem:[#allocation5 + $0x1900] sm:$0xff]
    %v924 = vld [vmem:[#allocation5 + $0x1908] sm:$0xff]
    %v925 = vld [vmem:[#allocation5 + $0x1910] sm:$0xff]
    %v926 = vld [vmem:[#allocation5 + $0x1918] sm:$0xff]
    %v927 = vld [vmem:[#allocation5 + $0x1920] sm:$0xff]
    %v928 = vld [vmem:[#allocation5 + $0x1928] sm:$0xff]
    %v929 = vld [vmem:[#allocation5 + $0x1930] sm:$0xff]
    %v930 = vld [vmem:[#allocation5 + $0x1938] sm:$0xff]
    %v931 = vld [vmem:[#allocation5 + $0x1940] sm:$0xff]
    %v932 = vld [vmem:[#allocation5 + $0x1948] sm:$0xff]
    %v933 = vld [vmem:[#allocation5 + $0x1950] sm:$0xff]
    %v934 = vld [vmem:[#allocation5 + $0x1958] sm:$0xff]
    %v935 = vld [vmem:[#allocation5 + $0x1960] sm:$0xff]
    %v936 = vld [vmem:[#allocation5 + $0x1968] sm:$0xff]
    %v937 = vld [vmem:[#allocation5 + $0x1970] sm:$0xff]
    %v938 = vld [vmem:[#allocation5 + $0x1978] sm:$0xff]
    %v939 = vld [vmem:[#allocation5 + $0x1980] sm:$0xff]
    %v940 = vld [vmem:[#allocation5 + $0x1988] sm:$0xff]
    %v941 = vld [vmem:[#allocation5 + $0x1990] sm:$0xff]
    %v942 = vld [vmem:[#allocation5 + $0x1998] sm:$0xff]
    %v943 = vld [vmem:[#allocation5 + $0x19a0] sm:$0xff]
    %v944 = vld [vmem:[#allocation5 + $0x19a8] sm:$0xff]
    %v945 = vld [vmem:[#allocation5 + $0x19b0] sm:$0xff]
    %v946 = vld [vmem:[#allocation5 + $0x19b8] sm:$0xff]
    %v947 = vld [vmem:[#allocation5 + $0x19c0] sm:$0xff]
    %v948 = vld [vmem:[#allocation5 + $0x19c8] sm:$0xff]
    %v949 = vld [vmem:[#allocation5 + $0x19d0] sm:$0xff]
    %v950 = vld [vmem:[#allocation5 + $0x19d8] sm:$0xff]
    %v951 = vld [vmem:[#allocation5 + $0x19e0] sm:$0xff]
    %v952 = vld [vmem:[#allocation5 + $0x19e8] sm:$0xff]
    %v953 = vld [vmem:[#allocation5 + $0x19f0] sm:$0xff]
    %v954 = vld [vmem:[#allocation5 + $0x19f8] sm:$0xff]
    %v955 = vld [vmem:[#allocation5 + $0x1a00] sm:$0xff]
    %v956 = vld [vmem:[#allocation5 + $0x1a08] sm:$0xff]
    %v957 = vld [vmem:[#allocation5 + $0x1a10] sm:$0xff]
    %v958 = vld [vmem:[#allocation5 + $0x1a18] sm:$0xff]
    %v959 = vld [vmem:[#allocation5 + $0x1a20] sm:$0xff]
    %v960 = vld [vmem:[#allocation5 + $0x1a28] sm:$0xff]
    %v961 = vld [vmem:[#allocation5 + $0x1a30] sm:$0xff]
    %v962 = vld [vmem:[#allocation5 + $0x1a38] sm:$0xff]
    %v963 = vld [vmem:[#allocation5 + $0x1a40] sm:$0xff]
    %v964 = vld [vmem:[#allocation5 + $0x1a48] sm:$0xff]
    %v965 = vld [vmem:[#allocation5 + $0x1a50] sm:$0xff]
    %v966 = vld [vmem:[#allocation5 + $0x1a58] sm:$0xff]
    %v967 = vld [vmem:[#allocation5 + $0x1a60] sm:$0xff]
    %v968 = vld [vmem:[#allocation5 + $0x1a68] sm:$0xff]
    %v969 = vld [vmem:[#allocation5 + $0x1a70] sm:$0xff]
    %v970 = vld [vmem:[#allocation5 + $0x1a78] sm:$0xff]
    %v971 = vld [vmem:[#allocation5 + $0x1a80] sm:$0xff]
    %v972 = vld [vmem:[#allocation5 + $0x1a88] sm:$0xff]
    %v973 = vld [vmem:[#allocation5 + $0x1a90] sm:$0xff]
    %v974 = vld [vmem:[#allocation5 + $0x1a98] sm:$0xff]
    %v975 = vld [vmem:[#allocation5 + $0x1aa0] sm:$0xff]
    %v976 = vld [vmem:[#allocation5 + $0x1aa8] sm:$0xff]
    %v977 = vld [vmem:[#allocation5 + $0x1ab0] sm:$0xff]
    %v978 = vld [vmem:[#allocation5 + $0x1ab8] sm:$0xff]
    %v979 = vld [vmem:[#allocation5 + $0x1ac0] sm:$0xff]
    %v980 = vld [vmem:[#allocation5 + $0x1ac8] sm:$0xff]
    %v981 = vld [vmem:[#allocation5 + $0x1ad0] sm:$0xff]
    %v982 = vld [vmem:[#allocation5 + $0x1ad8] sm:$0xff]
    %v983 = vld [vmem:[#allocation5 + $0x1ae0] sm:$0xff]
    %v984 = vld [vmem:[#allocation5 + $0x1ae8] sm:$0xff]
    %v985 = vld [vmem:[#allocation5 + $0x1af0] sm:$0xff]
    %v986 = vld [vmem:[#allocation5 + $0x1af8] sm:$0xff]
    %v987 = vld [vmem:[#allocation5 + $0x1b00] sm:$0xff]
    %v988 = vld [vmem:[#allocation5 + $0x1b08] sm:$0xff]
    %v989 = vld [vmem:[#allocation5 + $0x1b10] sm:$0xff]
    %v990 = vld [vmem:[#allocation5 + $0x1b18] sm:$0xff]
    %v991 = vld [vmem:[#allocation5 + $0x1b20] sm:$0xff]
    %v992 = vld [vmem:[#allocation5 + $0x1b28] sm:$0xff]
    %v993 = vld [vmem:[#allocation5 + $0x1b30] sm:$0xff]
    %v994 = vld [vmem:[#allocation5 + $0x1b38] sm:$0xff]
    %v995 = vld [vmem:[#allocation5 + $0x1b40] sm:$0xff]
    %v996 = vld [vmem:[#allocation5 + $0x1b48] sm:$0xff]
    %v997 = vld [vmem:[#allocation5 + $0x1b50] sm:$0xff]
    %v998 = vld [vmem:[#allocation5 + $0x1b58] sm:$0xff]
    %v999 = vld [vmem:[#allocation5 + $0x1b60] sm:$0xff]
    %v1000 = vld [vmem:[#allocation5 + $0x1b68] sm:$0xff]
    %v1001 = vld [vmem:[#allocation5 + $0x1b70] sm:$0xff]
    %v1002 = vld [vmem:[#allocation5 + $0x1b78] sm:$0xff]
    %v1003 = vld [vmem:[#allocation5 + $0x1b80] sm:$0xff]
    %v1004 = vld [vmem:[#allocation5 + $0x1b88] sm:$0xff]
    %v1005 = vld [vmem:[#allocation5 + $0x1b90] sm:$0xff]
    %v1006 = vld [vmem:[#allocation5 + $0x1b98] sm:$0xff]
    %v1007 = vld [vmem:[#allocation5 + $0x1ba0] sm:$0xff]
    %v1008 = vld [vmem:[#allocation5 + $0x1ba8] sm:$0xff]
    %v1009 = vld [vmem:[#allocation5 + $0x1bb0] sm:$0xff]
    %v1010 = vld [vmem:[#allocation5 + $0x1bb8] sm:$0xff]
    %v1011 = vld [vmem:[#allocation5 + $0x1bc0] sm:$0xff]
    %v1012 = vld [vmem:[#allocation5 + $0x1bc8] sm:$0xff]
    %v1013 = vld [vmem:[#allocation5 + $0x1bd0] sm:$0xff]
    %v1014 = vld [vmem:[#allocation5 + $0x1bd8] sm:$0xff]
    %v1015 = vld [vmem:[#allocation5 + $0x1be0] sm:$0xff]
    %v1016 = vld [vmem:[#allocation5 + $0x1be8] sm:$0xff]
    %v1017 = vld [vmem:[#allocation5 + $0x1bf0] sm:$0xff]
    %v1018 = vld [vmem:[#allocation5 + $0x1bf8] sm:$0xff]
    %v1019 = vld [vmem:[#allocation5 + $0x1c00] sm:$0xff]
    %v1020 = vld [vmem:[#allocation5 + $0x1c08] sm:$0xff]
    %v1021 = vld [vmem:[#allocation5 + $0x1c10] sm:$0xff]
    %v1022 = vld [vmem:[#allocation5 + $0x1c18] sm:$0xff]
    %v1023 = vld [vmem:[#allocation5 + $0x1c20] sm:$0xff]
    %v1024 = vld [vmem:[#allocation5 + $0x1c28] sm:$0xff]
    %v1025 = vld [vmem:[#allocation5 + $0x1c30] sm:$0xff]
    %v1026 = vld [vmem:[#allocation5 + $0x1c38] sm:$0xff]
    %v1027 = vld [vmem:[#allocation5 + $0x1c40] sm:$0xff]
    %v1028 = vld [vmem:[#allocation5 + $0x1c48] sm:$0xff]
    %v1029 = vld [vmem:[#allocation5 + $0x1c50] sm:$0xff]
    %v1030 = vld [vmem:[#allocation5 + $0x1c58] sm:$0xff]
    %v1031 = vld [vmem:[#allocation5 + $0x1c60] sm:$0xff]
    %v1032 = vld [vmem:[#allocation5 + $0x1c68] sm:$0xff]
    %v1033 = vld [vmem:[#allocation5 + $0x1c70] sm:$0xff]
    %v1034 = vld [vmem:[#allocation5 + $0x1c78] sm:$0xff]
    %v1035 = vld [vmem:[#allocation5 + $0x1c80] sm:$0xff]
    %v1036 = vld [vmem:[#allocation5 + $0x1c88] sm:$0xff]
    %v1037 = vld [vmem:[#allocation5 + $0x1c90] sm:$0xff]
    %v1038 = vld [vmem:[#allocation5 + $0x1c98] sm:$0xff]
    %v1039 = vld [vmem:[#allocation5 + $0x1ca0] sm:$0xff]
    %v1040 = vld [vmem:[#allocation5 + $0x1ca8] sm:$0xff]
    %v1041 = vld [vmem:[#allocation5 + $0x1cb0] sm:$0xff]
    %v1042 = vld [vmem:[#allocation5 + $0x1cb8] sm:$0xff]
    %v1043 = vld [vmem:[#allocation5 + $0x1cc0] sm:$0xff]
    %v1044 = vld [vmem:[#allocation5 + $0x1cc8] sm:$0xff]
    %v1045 = vld [vmem:[#allocation5 + $0x1cd0] sm:$0xff]
    %v1046 = vld [vmem:[#allocation5 + $0x1cd8] sm:$0xff]
    %v1047 = vld [vmem:[#allocation5 + $0x1ce0] sm:$0xff]
    %v1048 = vld [vmem:[#allocation5 + $0x1ce8] sm:$0xff]
    %v1049 = vld [vmem:[#allocation5 + $0x1cf0] sm:$0xff]
    %v1050 = vld [vmem:[#allocation5 + $0x1cf8] sm:$0xff]
    %v1051 = vld [vmem:[#allocation5 + $0x1d00] sm:$0xff]
    %v1052 = vld [vmem:[#allocation5 + $0x1d08] sm:$0xff]
    %v1053 = vld [vmem:[#allocation5 + $0x1d10] sm:$0xff]
    %v1054 = vld [vmem:[#allocation5 + $0x1d18] sm:$0xff]
    %v1055 = vld [vmem:[#allocation5 + $0x1d20] sm:$0xff]
    %v1056 = vld [vmem:[#allocation5 + $0x1d28] sm:$0xff]
    %v1057 = vld [vmem:[#allocation5 + $0x1d30] sm:$0xff]
    %v1058 = vld [vmem:[#allocation5 + $0x1d38] sm:$0xff]
    %v1059 = vld [vmem:[#allocation5 + $0x1d40] sm:$0xff]
    %v1060 = vld [vmem:[#allocation5 + $0x1d48] sm:$0xff]
    %v1061 = vld [vmem:[#allocation5 + $0x1d50] sm:$0xff]
    %v1062 = vld [vmem:[#allocation5 + $0x1d58] sm:$0xff]
    %v1063 = vld [vmem:[#allocation5 + $0x1d60] sm:$0xff]
    %v1064 = vld [vmem:[#allocation5 + $0x1d68] sm:$0xff]
    %v1065 = vld [vmem:[#allocation5 + $0x1d70] sm:$0xff]
    %v1066 = vld [vmem:[#allocation5 + $0x1d78] sm:$0xff]
    %v1067 = vld [vmem:[#allocation5 + $0x1d80] sm:$0xff]
    %v1068 = vld [vmem:[#allocation5 + $0x1d88] sm:$0xff]
    %v1069 = vld [vmem:[#allocation5 + $0x1d90] sm:$0xff]
    %v1070 = vld [vmem:[#allocation5 + $0x1d98] sm:$0xff]
    %v1071 = vld [vmem:[#allocation5 + $0x1da0] sm:$0xff]
    %v1072 = vld [vmem:[#allocation5 + $0x1da8] sm:$0xff]
    %v1073 = vld [vmem:[#allocation5 + $0x1db0] sm:$0xff]
    %v1074 = vld [vmem:[#allocation5 + $0x1db8] sm:$0xff]
    %v1075 = vld [vmem:[#allocation5 + $0x1dc0] sm:$0xff]
    %v1076 = vld [vmem:[#allocation5 + $0x1dc8] sm:$0xff]
    %v1077 = vld [vmem:[#allocation5 + $0x1dd0] sm:$0xff]
    %v1078 = vld [vmem:[#allocation5 + $0x1dd8] sm:$0xff]
    %v1079 = vld [vmem:[#allocation5 + $0x1de0] sm:$0xff]
    %v1080 = vld [vmem:[#allocation5 + $0x1de8] sm:$0xff]
    %v1081 = vld [vmem:[#allocation5 + $0x1df0] sm:$0xff]
    %v1082 = vld [vmem:[#allocation5 + $0x1df8] sm:$0xff]
    %v1083 = vld [vmem:[#allocation5 + $0x1e00] sm:$0xff]
    %v1084 = vld [vmem:[#allocation5 + $0x1e08] sm:$0xff]
    %v1085 = vld [vmem:[#allocation5 + $0x1e10] sm:$0xff]
    %v1086 = vld [vmem:[#allocation5 + $0x1e18] sm:$0xff]
    %v1087 = vld [vmem:[#allocation5 + $0x1e20] sm:$0xff]
    %v1088 = vld [vmem:[#allocation5 + $0x1e28] sm:$0xff]
    %v1089 = vld [vmem:[#allocation5 + $0x1e30] sm:$0xff]
    %v1090 = vld [vmem:[#allocation5 + $0x1e38] sm:$0xff]
    %v1091 = vld [vmem:[#allocation5 + $0x1e40] sm:$0xff]
    %v1092 = vld [vmem:[#allocation5 + $0x1e48] sm:$0xff]
    %v1093 = vld [vmem:[#allocation5 + $0x1e50] sm:$0xff]
    %v1094 = vld [vmem:[#allocation5 + $0x1e58] sm:$0xff]
    %v1095 = vld [vmem:[#allocation5 + $0x1e60] sm:$0xff]
    %v1096 = vld [vmem:[#allocation5 + $0x1e68] sm:$0xff]
    %v1097 = vld [vmem:[#allocation5 + $0x1e70] sm:$0xff]
    %v1098 = vld [vmem:[#allocation5 + $0x1e78] sm:$0xff]
    %v1099 = vld [vmem:[#allocation5 + $0x1e80] sm:$0xff]
    %v1100 = vld [vmem:[#allocation5 + $0x1e88] sm:$0xff]
    %v1101 = vld [vmem:[#allocation5 + $0x1e90] sm:$0xff]
    %v1102 = vld [vmem:[#allocation5 + $0x1e98] sm:$0xff]
    %v1103 = vld [vmem:[#allocation5 + $0x1ea0] sm:$0xff]
    %v1104 = vld [vmem:[#allocation5 + $0x1ea8] sm:$0xff]
    %v1105 = vld [vmem:[#allocation5 + $0x1eb0] sm:$0xff]
    %v1106 = vld [vmem:[#allocation5 + $0x1eb8] sm:$0xff]
    %v1107 = vld [vmem:[#allocation5 + $0x1ec0] sm:$0xff]
    %v1108 = vld [vmem:[#allocation5 + $0x1ec8] sm:$0xff]
    %v1109 = vld [vmem:[#allocation5 + $0x1ed0] sm:$0xff]
    %v1110 = vld [vmem:[#allocation5 + $0x1ed8] sm:$0xff]
    %v1111 = vld [vmem:[#allocation5 + $0x1ee0] sm:$0xff]
    %v1112 = vld [vmem:[#allocation5 + $0x1ee8] sm:$0xff]
    %v1113 = vld [vmem:[#allocation5 + $0x1ef0] sm:$0xff]
    %v1114 = vld [vmem:[#allocation5 + $0x1ef8] sm:$0xff]
    %v1115 = vld [vmem:[#allocation5 + $0x1f00] sm:$0xff]
    %v1116 = vld [vmem:[#allocation5 + $0x1f08] sm:$0xff]
    %v1117 = vld [vmem:[#allocation5 + $0x1f10] sm:$0xff]
    %v1118 = vld [vmem:[#allocation5 + $0x1f18] sm:$0xff]
    %v1119 = vld [vmem:[#allocation5 + $0x1f20] sm:$0xff]
    %v1120 = vld [vmem:[#allocation5 + $0x1f28] sm:$0xff]
    %v1121 = vld [vmem:[#allocation5 + $0x1f30] sm:$0xff]
    %v1122 = vld [vmem:[#allocation5 + $0x1f38] sm:$0xff]
    %v1123 = vld [vmem:[#allocation5 + $0x1f40] sm:$0xff]
    %v1124 = vld [vmem:[#allocation5 + $0x1f48] sm:$0xff]
    %v1125 = vld [vmem:[#allocation5 + $0x1f50] sm:$0xff]
    %v1126 = vld [vmem:[#allocation5 + $0x1f58] sm:$0xff]
    %v1127 = vld [vmem:[#allocation5 + $0x1f60] sm:$0xff]
    %v1128 = vld [vmem:[#allocation5 + $0x1f68] sm:$0xff]
    %v1129 = vld [vmem:[#allocation5 + $0x1f70] sm:$0xff]
    %v1130 = vld [vmem:[#allocation5 + $0x1f78] sm:$0xff]
    %v1131 = vld [vmem:[#allocation5 + $0x1f80] sm:$0xff]
    %v1132 = vld [vmem:[#allocation5 + $0x1f88] sm:$0xff]
    %v1133 = vld [vmem:[#allocation5 + $0x1f90] sm:$0xff]
    %v1134 = vld [vmem:[#allocation5 + $0x1f98] sm:$0xff]
    %v1135 = vld [vmem:[#allocation5 + $0x1fa0] sm:$0xff]
    %v1136 = vld [vmem:[#allocation5 + $0x1fa8] sm:$0xff]
    %v1137 = vld [vmem:[#allocation5 + $0x1fb0] sm:$0xff]
    %v1138 = vld [vmem:[#allocation5 + $0x1fb8] sm:$0xff]
    %v1139 = vld [vmem:[#allocation5 + $0x1fc0] sm:$0xff]
    %v1140 = vld [vmem:[#allocation5 + $0x1fc8] sm:$0xff]
    %v1141 = vld [vmem:[#allocation5 + $0x1fd0] sm:$0xff]
    %v1142 = vld [vmem:[#allocation5 + $0x1fd8] sm:$0xff]
    %v1143 = vld [vmem:[#allocation5 + $0x1fe0] sm:$0xff]
    %v1144 = vld [vmem:[#allocation5 + $0x1fe8] sm:$0xff]
    %v1145 = vld [vmem:[#allocation5 + $0x1ff0] sm:$0xff]
    %v1146 = vld [vmem:[#allocation5 + $0x1ff8] sm:$0xff]
    %v1147 = vpack.c.bf16 %v139, %v123
    %v1148 = vpack.c.bf16 %v140, %v124
    %v1149 = vpack.c.bf16 %v141, %v125
    %v1150 = vpack.c.bf16 %v142, %v126
    %v1151 = vpack.c.bf16 %v143, %v127
    %v1152 = vpack.c.bf16 %v144, %v128
    %v1153 = vpack.c.bf16 %v145, %v129
    %v1154 = vpack.c.bf16 %v146, %v130
    %v1155 = vpack.c.bf16 %v147, %v131
    %v1156 = vpack.c.bf16 %v148, %v132
    %v1157 = vpack.c.bf16 %v149, %v133
    %v1158 = vpack.c.bf16 %v150, %v134
    %v1159 = vpack.c.bf16 %v151, %v135
    %v1160 = vpack.c.bf16 %v152, %v136
    %v1161 = vpack.c.bf16 %v153, %v137
    %v1162 = vpack.c.bf16 %v154, %v138
    %v1163 = vpack.c.bf16 %v171, %v155
    %v1164 = vpack.c.bf16 %v172, %v156
    %v1165 = vpack.c.bf16 %v173, %v157
    %v1166 = vpack.c.bf16 %v174, %v158
    %v1167 = vpack.c.bf16 %v175, %v159
    %v1168 = vpack.c.bf16 %v176, %v160
    %v1169 = vpack.c.bf16 %v177, %v161
    %v1170 = vpack.c.bf16 %v178, %v162
    %v1171 = vpack.c.bf16 %v179, %v163
    %v1172 = vpack.c.bf16 %v180, %v164
    %v1173 = vpack.c.bf16 %v181, %v165
    %v1174 = vpack.c.bf16 %v182, %v166
    %v1175 = vpack.c.bf16 %v183, %v167
    %v1176 = vpack.c.bf16 %v184, %v168
    %v1177 = vpack.c.bf16 %v185, %v169
    %v1178 = vpack.c.bf16 %v186, %v170
    %v1179 = vpack.c.bf16 %v203, %v187
    %v1180 = vpack.c.bf16 %v204, %v188
    %v1181 = vpack.c.bf16 %v205, %v189
    %v1182 = vpack.c.bf16 %v206, %v190
    %v1183 = vpack.c.bf16 %v207, %v191
    %v1184 = vpack.c.bf16 %v208, %v192
    %v1185 = vpack.c.bf16 %v209, %v193
    %v1186 = vpack.c.bf16 %v210, %v194
    %v1187 = vpack.c.bf16 %v211, %v195
    %v1188 = vpack.c.bf16 %v212, %v196
    %v1189 = vpack.c.bf16 %v213, %v197
    %v1190 = vpack.c.bf16 %v214, %v198
    %v1191 = vpack.c.bf16 %v215, %v199
    %v1192 = vpack.c.bf16 %v216, %v200
    %v1193 = vpack.c.bf16 %v217, %v201
    %v1194 = vpack.c.bf16 %v218, %v202
    %v1195 = vpack.c.bf16 %v235, %v219
    %v1196 = vpack.c.bf16 %v236, %v220
    %v1197 = vpack.c.bf16 %v237, %v221
    %v1198 = vpack.c.bf16 %v238, %v222
    %v1199 = vpack.c.bf16 %v239, %v223
    %v1200 = vpack.c.bf16 %v240, %v224
    %v1201 = vpack.c.bf16 %v241, %v225
    %v1202 = vpack.c.bf16 %v242, %v226
    %v1203 = vpack.c.bf16 %v243, %v227
    %v1204 = vpack.c.bf16 %v244, %v228
    %v1205 = vpack.c.bf16 %v245, %v229
    %v1206 = vpack.c.bf16 %v246, %v230
    %v1207 = vpack.c.bf16 %v247, %v231
    %v1208 = vpack.c.bf16 %v248, %v232
    %v1209 = vpack.c.bf16 %v249, %v233
    %v1210 = vpack.c.bf16 %v250, %v234
    %v1211 = vpack.c.bf16 %v267, %v251
    %v1212 = vpack.c.bf16 %v268, %v252
    %v1213 = vpack.c.bf16 %v269, %v253
    %v1214 = vpack.c.bf16 %v270, %v254
    %v1215 = vpack.c.bf16 %v271, %v255
    %v1216 = vpack.c.bf16 %v272, %v256
    %v1217 = vpack.c.bf16 %v273, %v257
    %v1218 = vpack.c.bf16 %v274, %v258
    %v1219 = vpack.c.bf16 %v275, %v259
    %v1220 = vpack.c.bf16 %v276, %v260
    %v1221 = vpack.c.bf16 %v277, %v261
    %v1222 = vpack.c.bf16 %v278, %v262
    %v1223 = vpack.c.bf16 %v279, %v263
    %v1224 = vpack.c.bf16 %v280, %v264
    %v1225 = vpack.c.bf16 %v281, %v265
    %v1226 = vpack.c.bf16 %v282, %v266
    %v1227 = vpack.c.bf16 %v299, %v283
    %v1228 = vpack.c.bf16 %v300, %v284
    %v1229 = vpack.c.bf16 %v301, %v285
    %v1230 = vpack.c.bf16 %v302, %v286
    %v1231 = vpack.c.bf16 %v303, %v287
    %v1232 = vpack.c.bf16 %v304, %v288
    %v1233 = vpack.c.bf16 %v305, %v289
    %v1234 = vpack.c.bf16 %v306, %v290
    %v1235 = vpack.c.bf16 %v307, %v291
    %v1236 = vpack.c.bf16 %v308, %v292
    %v1237 = vpack.c.bf16 %v309, %v293
    %v1238 = vpack.c.bf16 %v310, %v294
    %v1239 = vpack.c.bf16 %v311, %v295
    %v1240 = vpack.c.bf16 %v312, %v296
    %v1241 = vpack.c.bf16 %v313, %v297
    %v1242 = vpack.c.bf16 %v314, %v298
    %v1243 = vpack.c.bf16 %v331, %v315
    %v1244 = vpack.c.bf16 %v332, %v316
    %v1245 = vpack.c.bf16 %v333, %v317
    %v1246 = vpack.c.bf16 %v334, %v318
    %v1247 = vpack.c.bf16 %v335, %v319
    %v1248 = vpack.c.bf16 %v336, %v320
    %v1249 = vpack.c.bf16 %v337, %v321
    %v1250 = vpack.c.bf16 %v338, %v322
    %v1251 = vpack.c.bf16 %v339, %v323
    %v1252 = vpack.c.bf16 %v340, %v324
    %v1253 = vpack.c.bf16 %v341, %v325
    %v1254 = vpack.c.bf16 %v342, %v326
    %v1255 = vpack.c.bf16 %v343, %v327
    %v1256 = vpack.c.bf16 %v344, %v328
    %v1257 = vpack.c.bf16 %v345, %v329
    %v1258 = vpack.c.bf16 %v346, %v330
    %v1259 = vpack.c.bf16 %v363, %v347
    %v1260 = vpack.c.bf16 %v364, %v348
    %v1261 = vpack.c.bf16 %v365, %v349
    %v1262 = vpack.c.bf16 %v366, %v350
    %v1263 = vpack.c.bf16 %v367, %v351
    %v1264 = vpack.c.bf16 %v368, %v352
    %v1265 = vpack.c.bf16 %v369, %v353
    %v1266 = vpack.c.bf16 %v370, %v354
    %v1267 = vpack.c.bf16 %v371, %v355
    %v1268 = vpack.c.bf16 %v372, %v356
    %v1269 = vpack.c.bf16 %v373, %v357
    %v1270 = vpack.c.bf16 %v374, %v358
    %v1271 = vpack.c.bf16 %v375, %v359
    %v1272 = vpack.c.bf16 %v376, %v360
    %v1273 = vpack.c.bf16 %v377, %v361
    %v1274 = vpack.c.bf16 %v378, %v362
    %v1275 = vpack.c.bf16 %v395, %v379
    %v1276 = vpack.c.bf16 %v396, %v380
    %v1277 = vpack.c.bf16 %v397, %v381
    %v1278 = vpack.c.bf16 %v398, %v382
    %v1279 = vpack.c.bf16 %v399, %v383
    %v1280 = vpack.c.bf16 %v400, %v384
    %v1281 = vpack.c.bf16 %v401, %v385
    %v1282 = vpack.c.bf16 %v402, %v386
    %v1283 = vpack.c.bf16 %v403, %v387
    %v1284 = vpack.c.bf16 %v404, %v388
    %v1285 = vpack.c.bf16 %v405, %v389
    %v1286 = vpack.c.bf16 %v406, %v390
    %v1287 = vpack.c.bf16 %v407, %v391
    %v1288 = vpack.c.bf16 %v408, %v392
    %v1289 = vpack.c.bf16 %v409, %v393
    %v1290 = vpack.c.bf16 %v410, %v394
    %v1291 = vpack.c.bf16 %v427, %v411
    %v1292 = vpack.c.bf16 %v428, %v412
    %v1293 = vpack.c.bf16 %v429, %v413
    %v1294 = vpack.c.bf16 %v430, %v414
    %v1295 = vpack.c.bf16 %v431, %v415
    %v1296 = vpack.c.bf16 %v432, %v416
    %v1297 = vpack.c.bf16 %v433, %v417
    %v1298 = vpack.c.bf16 %v434, %v418
    %v1299 = vpack.c.bf16 %v435, %v419
    %v1300 = vpack.c.bf16 %v436, %v420
    %v1301 = vpack.c.bf16 %v437, %v421
    %v1302 = vpack.c.bf16 %v438, %v422
    %v1303 = vpack.c.bf16 %v439, %v423
    %v1304 = vpack.c.bf16 %v440, %v424
    %v1305 = vpack.c.bf16 %v441, %v425
    %v1306 = vpack.c.bf16 %v442, %v426
    %v1307 = vpack.c.bf16 %v459, %v443
    %v1308 = vpack.c.bf16 %v460, %v444
    %v1309 = vpack.c.bf16 %v461, %v445
    %v1310 = vpack.c.bf16 %v462, %v446
    %v1311 = vpack.c.bf16 %v463, %v447
    %v1312 = vpack.c.bf16 %v464, %v448
    %v1313 = vpack.c.bf16 %v465, %v449
    %v1314 = vpack.c.bf16 %v466, %v450
    %v1315 = vpack.c.bf16 %v467, %v451
    %v1316 = vpack.c.bf16 %v468, %v452
    %v1317 = vpack.c.bf16 %v469, %v453
    %v1318 = vpack.c.bf16 %v470, %v454
    %v1319 = vpack.c.bf16 %v471, %v455
    %v1320 = vpack.c.bf16 %v472, %v456
    %v1321 = vpack.c.bf16 %v473, %v457
    %v1322 = vpack.c.bf16 %v474, %v458
    %v1323 = vpack.c.bf16 %v491, %v475
    %v1324 = vpack.c.bf16 %v492, %v476
    %v1325 = vpack.c.bf16 %v493, %v477
    %v1326 = vpack.c.bf16 %v494, %v478
    %v1327 = vpack.c.bf16 %v495, %v479
    %v1328 = vpack.c.bf16 %v496, %v480
    %v1329 = vpack.c.bf16 %v497, %v481
    %v1330 = vpack.c.bf16 %v498, %v482
    %v1331 = vpack.c.bf16 %v499, %v483
    %v1332 = vpack.c.bf16 %v500, %v484
    %v1333 = vpack.c.bf16 %v501, %v485
    %v1334 = vpack.c.bf16 %v502, %v486
    %v1335 = vpack.c.bf16 %v503, %v487
    %v1336 = vpack.c.bf16 %v504, %v488
    %v1337 = vpack.c.bf16 %v505, %v489
    %v1338 = vpack.c.bf16 %v506, %v490
    %v1339 = vpack.c.bf16 %v523, %v507
    %v1340 = vpack.c.bf16 %v524, %v508
    %v1341 = vpack.c.bf16 %v525, %v509
    %v1342 = vpack.c.bf16 %v526, %v510
    %v1343 = vpack.c.bf16 %v527, %v511
    %v1344 = vpack.c.bf16 %v528, %v512
    %v1345 = vpack.c.bf16 %v529, %v513
    %v1346 = vpack.c.bf16 %v530, %v514
    %v1347 = vpack.c.bf16 %v531, %v515
    %v1348 = vpack.c.bf16 %v532, %v516
    %v1349 = vpack.c.bf16 %v533, %v517
    %v1350 = vpack.c.bf16 %v534, %v518
    %v1351 = vpack.c.bf16 %v535, %v519
    %v1352 = vpack.c.bf16 %v536, %v520
    %v1353 = vpack.c.bf16 %v537, %v521
    %v1354 = vpack.c.bf16 %v538, %v522
    %v1355 = vpack.c.bf16 %v555, %v539
    %v1356 = vpack.c.bf16 %v556, %v540
    %v1357 = vpack.c.bf16 %v557, %v541
    %v1358 = vpack.c.bf16 %v558, %v542
    %v1359 = vpack.c.bf16 %v559, %v543
    %v1360 = vpack.c.bf16 %v560, %v544
    %v1361 = vpack.c.bf16 %v561, %v545
    %v1362 = vpack.c.bf16 %v562, %v546
    %v1363 = vpack.c.bf16 %v563, %v547
    %v1364 = vpack.c.bf16 %v564, %v548
    %v1365 = vpack.c.bf16 %v565, %v549
    %v1366 = vpack.c.bf16 %v566, %v550
    %v1367 = vpack.c.bf16 %v567, %v551
    %v1368 = vpack.c.bf16 %v568, %v552
    %v1369 = vpack.c.bf16 %v569, %v553
    %v1370 = vpack.c.bf16 %v570, %v554
    %v1371 = vpack.c.bf16 %v587, %v571
    %v1372 = vpack.c.bf16 %v588, %v572
    %v1373 = vpack.c.bf16 %v589, %v573
    %v1374 = vpack.c.bf16 %v590, %v574
    %v1375 = vpack.c.bf16 %v591, %v575
    %v1376 = vpack.c.bf16 %v592, %v576
    %v1377 = vpack.c.bf16 %v593, %v577
    %v1378 = vpack.c.bf16 %v594, %v578
    %v1379 = vpack.c.bf16 %v595, %v579
    %v1380 = vpack.c.bf16 %v596, %v580
    %v1381 = vpack.c.bf16 %v597, %v581
    %v1382 = vpack.c.bf16 %v598, %v582
    %v1383 = vpack.c.bf16 %v599, %v583
    %v1384 = vpack.c.bf16 %v600, %v584
    %v1385 = vpack.c.bf16 %v601, %v585
    %v1386 = vpack.c.bf16 %v602, %v586
    %v1387 = vpack.c.bf16 %v619, %v603
    %v1388 = vpack.c.bf16 %v620, %v604
    %v1389 = vpack.c.bf16 %v621, %v605
    %v1390 = vpack.c.bf16 %v622, %v606
    %v1391 = vpack.c.bf16 %v623, %v607
    %v1392 = vpack.c.bf16 %v624, %v608
    %v1393 = vpack.c.bf16 %v625, %v609
    %v1394 = vpack.c.bf16 %v626, %v610
    %v1395 = vpack.c.bf16 %v627, %v611
    %v1396 = vpack.c.bf16 %v628, %v612
    %v1397 = vpack.c.bf16 %v629, %v613
    %v1398 = vpack.c.bf16 %v630, %v614
    %v1399 = vpack.c.bf16 %v631, %v615
    %v1400 = vpack.c.bf16 %v632, %v616
    %v1401 = vpack.c.bf16 %v633, %v617
    %v1402 = vpack.c.bf16 %v634, %v618
    %v1403 = vpack.c.bf16 %v651, %v635
    %v1404 = vpack.c.bf16 %v652, %v636
    %v1405 = vpack.c.bf16 %v653, %v637
    %v1406 = vpack.c.bf16 %v654, %v638
    %v1407 = vpack.c.bf16 %v655, %v639
    %v1408 = vpack.c.bf16 %v656, %v640
    %v1409 = vpack.c.bf16 %v657, %v641
    %v1410 = vpack.c.bf16 %v658, %v642
    %v1411 = vpack.c.bf16 %v659, %v643
    %v1412 = vpack.c.bf16 %v660, %v644
    %v1413 = vpack.c.bf16 %v661, %v645
    %v1414 = vpack.c.bf16 %v662, %v646
    %v1415 = vpack.c.bf16 %v663, %v647
    %v1416 = vpack.c.bf16 %v664, %v648
    %v1417 = vpack.c.bf16 %v665, %v649
    %v1418 = vpack.c.bf16 %v666, %v650
    %v1419 = vpack.c.bf16 %v683, %v667
    %v1420 = vpack.c.bf16 %v684, %v668
    %v1421 = vpack.c.bf16 %v685, %v669
    %v1422 = vpack.c.bf16 %v686, %v670
    %v1423 = vpack.c.bf16 %v687, %v671
    %v1424 = vpack.c.bf16 %v688, %v672
    %v1425 = vpack.c.bf16 %v689, %v673
    %v1426 = vpack.c.bf16 %v690, %v674
    %v1427 = vpack.c.bf16 %v691, %v675
    %v1428 = vpack.c.bf16 %v692, %v676
    %v1429 = vpack.c.bf16 %v693, %v677
    %v1430 = vpack.c.bf16 %v694, %v678
    %v1431 = vpack.c.bf16 %v695, %v679
    %v1432 = vpack.c.bf16 %v696, %v680
    %v1433 = vpack.c.bf16 %v697, %v681
    %v1434 = vpack.c.bf16 %v698, %v682
    %v1435 = vpack.c.bf16 %v715, %v699
    %v1436 = vpack.c.bf16 %v716, %v700
    %v1437 = vpack.c.bf16 %v717, %v701
    %v1438 = vpack.c.bf16 %v718, %v702
    %v1439 = vpack.c.bf16 %v719, %v703
    %v1440 = vpack.c.bf16 %v720, %v704
    %v1441 = vpack.c.bf16 %v721, %v705
    %v1442 = vpack.c.bf16 %v722, %v706
    %v1443 = vpack.c.bf16 %v723, %v707
    %v1444 = vpack.c.bf16 %v724, %v708
    %v1445 = vpack.c.bf16 %v725, %v709
    %v1446 = vpack.c.bf16 %v726, %v710
    %v1447 = vpack.c.bf16 %v727, %v711
    %v1448 = vpack.c.bf16 %v728, %v712
    %v1449 = vpack.c.bf16 %v729, %v713
    %v1450 = vpack.c.bf16 %v730, %v714
    %v1451 = vpack.c.bf16 %v747, %v731
    %v1452 = vpack.c.bf16 %v748, %v732
    %v1453 = vpack.c.bf16 %v749, %v733
    %v1454 = vpack.c.bf16 %v750, %v734
    %v1455 = vpack.c.bf16 %v751, %v735
    %v1456 = vpack.c.bf16 %v752, %v736
    %v1457 = vpack.c.bf16 %v753, %v737
    %v1458 = vpack.c.bf16 %v754, %v738
    %v1459 = vpack.c.bf16 %v755, %v739
    %v1460 = vpack.c.bf16 %v756, %v740
    %v1461 = vpack.c.bf16 %v757, %v741
    %v1462 = vpack.c.bf16 %v758, %v742
    %v1463 = vpack.c.bf16 %v759, %v743
    %v1464 = vpack.c.bf16 %v760, %v744
    %v1465 = vpack.c.bf16 %v761, %v745
    %v1466 = vpack.c.bf16 %v762, %v746
    %v1467 = vpack.c.bf16 %v779, %v763
    %v1468 = vpack.c.bf16 %v780, %v764
    %v1469 = vpack.c.bf16 %v781, %v765
    %v1470 = vpack.c.bf16 %v782, %v766
    %v1471 = vpack.c.bf16 %v783, %v767
    %v1472 = vpack.c.bf16 %v784, %v768
    %v1473 = vpack.c.bf16 %v785, %v769
    %v1474 = vpack.c.bf16 %v786, %v770
    %v1475 = vpack.c.bf16 %v787, %v771
    %v1476 = vpack.c.bf16 %v788, %v772
    %v1477 = vpack.c.bf16 %v789, %v773
    %v1478 = vpack.c.bf16 %v790, %v774
    %v1479 = vpack.c.bf16 %v791, %v775
    %v1480 = vpack.c.bf16 %v792, %v776
    %v1481 = vpack.c.bf16 %v793, %v777
    %v1482 = vpack.c.bf16 %v794, %v778
    %v1483 = vpack.c.bf16 %v811, %v795
    %v1484 = vpack.c.bf16 %v812, %v796
    %v1485 = vpack.c.bf16 %v813, %v797
    %v1486 = vpack.c.bf16 %v814, %v798
    %v1487 = vpack.c.bf16 %v815, %v799
    %v1488 = vpack.c.bf16 %v816, %v800
    %v1489 = vpack.c.bf16 %v817, %v801
    %v1490 = vpack.c.bf16 %v818, %v802
    %v1491 = vpack.c.bf16 %v819, %v803
    %v1492 = vpack.c.bf16 %v820, %v804
    %v1493 = vpack.c.bf16 %v821, %v805
    %v1494 = vpack.c.bf16 %v822, %v806
    %v1495 = vpack.c.bf16 %v823, %v807
    %v1496 = vpack.c.bf16 %v824, %v808
    %v1497 = vpack.c.bf16 %v825, %v809
    %v1498 = vpack.c.bf16 %v826, %v810
    %v1499 = vpack.c.bf16 %v843, %v827
    %v1500 = vpack.c.bf16 %v844, %v828
    %v1501 = vpack.c.bf16 %v845, %v829
    %v1502 = vpack.c.bf16 %v846, %v830
    %v1503 = vpack.c.bf16 %v847, %v831
    %v1504 = vpack.c.bf16 %v848, %v832
    %v1505 = vpack.c.bf16 %v849, %v833
    %v1506 = vpack.c.bf16 %v850, %v834
    %v1507 = vpack.c.bf16 %v851, %v835
    %v1508 = vpack.c.bf16 %v852, %v836
    %v1509 = vpack.c.bf16 %v853, %v837
    %v1510 = vpack.c.bf16 %v854, %v838
    %v1511 = vpack.c.bf16 %v855, %v839
    %v1512 = vpack.c.bf16 %v856, %v840
    %v1513 = vpack.c.bf16 %v857, %v841
    %v1514 = vpack.c.bf16 %v858, %v842
    %v1515 = vpack.c.bf16 %v875, %v859
    %v1516 = vpack.c.bf16 %v876, %v860
    %v1517 = vpack.c.bf16 %v877, %v861
    %v1518 = vpack.c.bf16 %v878, %v862
    %v1519 = vpack.c.bf16 %v879, %v863
    %v1520 = vpack.c.bf16 %v880, %v864
    %v1521 = vpack.c.bf16 %v881, %v865
    %v1522 = vpack.c.bf16 %v882, %v866
    %v1523 = vpack.c.bf16 %v883, %v867
    %v1524 = vpack.c.bf16 %v884, %v868
    %v1525 = vpack.c.bf16 %v885, %v869
    %v1526 = vpack.c.bf16 %v886, %v870
    %v1527 = vpack.c.bf16 %v887, %v871
    %v1528 = vpack.c.bf16 %v888, %v872
    %v1529 = vpack.c.bf16 %v889, %v873
    %v1530 = vpack.c.bf16 %v890, %v874
    %v1531 = vpack.c.bf16 %v907, %v891
    %v1532 = vpack.c.bf16 %v908, %v892
    %v1533 = vpack.c.bf16 %v909, %v893
    %v1534 = vpack.c.bf16 %v910, %v894
    %v1535 = vpack.c.bf16 %v911, %v895
    %v1536 = vpack.c.bf16 %v912, %v896
    %v1537 = vpack.c.bf16 %v913, %v897
    %v1538 = vpack.c.bf16 %v914, %v898
    %v1539 = vpack.c.bf16 %v915, %v899
    %v1540 = vpack.c.bf16 %v916, %v900
    %v1541 = vpack.c.bf16 %v917, %v901
    %v1542 = vpack.c.bf16 %v918, %v902
    %v1543 = vpack.c.bf16 %v919, %v903
    %v1544 = vpack.c.bf16 %v920, %v904
    %v1545 = vpack.c.bf16 %v921, %v905
    %v1546 = vpack.c.bf16 %v922, %v906
    %v1547 = vpack.c.bf16 %v939, %v923
    %v1548 = vpack.c.bf16 %v940, %v924
    %v1549 = vpack.c.bf16 %v941, %v925
    %v1550 = vpack.c.bf16 %v942, %v926
    %v1551 = vpack.c.bf16 %v943, %v927
    %v1552 = vpack.c.bf16 %v944, %v928
    %v1553 = vpack.c.bf16 %v945, %v929
    %v1554 = vpack.c.bf16 %v946, %v930
    %v1555 = vpack.c.bf16 %v947, %v931
    %v1556 = vpack.c.bf16 %v948, %v932
    %v1557 = vpack.c.bf16 %v949, %v933
    %v1558 = vpack.c.bf16 %v950, %v934
    %v1559 = vpack.c.bf16 %v951, %v935
    %v1560 = vpack.c.bf16 %v952, %v936
    %v1561 = vpack.c.bf16 %v953, %v937
    %v1562 = vpack.c.bf16 %v954, %v938
    %v1563 = vpack.c.bf16 %v971, %v955
    %v1564 = vpack.c.bf16 %v972, %v956
    %v1565 = vpack.c.bf16 %v973, %v957
    %v1566 = vpack.c.bf16 %v974, %v958
    %v1567 = vpack.c.bf16 %v975, %v959
    %v1568 = vpack.c.bf16 %v976, %v960
    %v1569 = vpack.c.bf16 %v977, %v961
    %v1570 = vpack.c.bf16 %v978, %v962
    %v1571 = vpack.c.bf16 %v979, %v963
    %v1572 = vpack.c.bf16 %v980, %v964
    %v1573 = vpack.c.bf16 %v981, %v965
    %v1574 = vpack.c.bf16 %v982, %v966
    %v1575 = vpack.c.bf16 %v983, %v967
    %v1576 = vpack.c.bf16 %v984, %v968
    %v1577 = vpack.c.bf16 %v985, %v969
    %v1578 = vpack.c.bf16 %v986, %v970
    %v1579 = vpack.c.bf16 %v1003, %v987
    %v1580 = vpack.c.bf16 %v1004, %v988
    %v1581 = vpack.c.bf16 %v1005, %v989
    %v1582 = vpack.c.bf16 %v1006, %v990
    %v1583 = vpack.c.bf16 %v1007, %v991
    %v1584 = vpack.c.bf16 %v1008, %v992
    %v1585 = vpack.c.bf16 %v1009, %v993
    %v1586 = vpack.c.bf16 %v1010, %v994
    %v1587 = vpack.c.bf16 %v1011, %v995
    %v1588 = vpack.c.bf16 %v1012, %v996
    %v1589 = vpack.c.bf16 %v1013, %v997
    %v1590 = vpack.c.bf16 %v1014, %v998
    %v1591 = vpack.c.bf16 %v1015, %v999
    %v1592 = vpack.c.bf16 %v1016, %v1000
    %v1593 = vpack.c.bf16 %v1017, %v1001
    %v1594 = vpack.c.bf16 %v1018, %v1002
    %v1595 = vpack.c.bf16 %v1035, %v1019
    %v1596 = vpack.c.bf16 %v1036, %v1020
    %v1597 = vpack.c.bf16 %v1037, %v1021
    %v1598 = vpack.c.bf16 %v1038, %v1022
    %v1599 = vpack.c.bf16 %v1039, %v1023
    %v1600 = vpack.c.bf16 %v1040, %v1024
    %v1601 = vpack.c.bf16 %v1041, %v1025
    %v1602 = vpack.c.bf16 %v1042, %v1026
    %v1603 = vpack.c.bf16 %v1043, %v1027
    %v1604 = vpack.c.bf16 %v1044, %v1028
    %v1605 = vpack.c.bf16 %v1045, %v1029
    %v1606 = vpack.c.bf16 %v1046, %v1030
    %v1607 = vpack.c.bf16 %v1047, %v1031
    %v1608 = vpack.c.bf16 %v1048, %v1032
    %v1609 = vpack.c.bf16 %v1049, %v1033
    %v1610 = vpack.c.bf16 %v1050, %v1034
    %v1611 = vpack.c.bf16 %v1067, %v1051
    %v1612 = vpack.c.bf16 %v1068, %v1052
    %v1613 = vpack.c.bf16 %v1069, %v1053
    %v1614 = vpack.c.bf16 %v1070, %v1054
    %v1615 = vpack.c.bf16 %v1071, %v1055
    %v1616 = vpack.c.bf16 %v1072, %v1056
    %v1617 = vpack.c.bf16 %v1073, %v1057
    %v1618 = vpack.c.bf16 %v1074, %v1058
    %v1619 = vpack.c.bf16 %v1075, %v1059
    %v1620 = vpack.c.bf16 %v1076, %v1060
    %v1621 = vpack.c.bf16 %v1077, %v1061
    %v1622 = vpack.c.bf16 %v1078, %v1062
    %v1623 = vpack.c.bf16 %v1079, %v1063
    %v1624 = vpack.c.bf16 %v1080, %v1064
    %v1625 = vpack.c.bf16 %v1081, %v1065
    %v1626 = vpack.c.bf16 %v1082, %v1066
    %v1627 = vpack.c.bf16 %v1099, %v1083
    %v1628 = vpack.c.bf16 %v1100, %v1084
    %v1629 = vpack.c.bf16 %v1101, %v1085
    %v1630 = vpack.c.bf16 %v1102, %v1086
    %v1631 = vpack.c.bf16 %v1103, %v1087
    %v1632 = vpack.c.bf16 %v1104, %v1088
    %v1633 = vpack.c.bf16 %v1105, %v1089
    %v1634 = vpack.c.bf16 %v1106, %v1090
    %v1635 = vpack.c.bf16 %v1107, %v1091
    %v1636 = vpack.c.bf16 %v1108, %v1092
    %v1637 = vpack.c.bf16 %v1109, %v1093
    %v1638 = vpack.c.bf16 %v1110, %v1094
    %v1639 = vpack.c.bf16 %v1111, %v1095
    %v1640 = vpack.c.bf16 %v1112, %v1096
    %v1641 = vpack.c.bf16 %v1113, %v1097
    %v1642 = vpack.c.bf16 %v1114, %v1098
    %v1643 = vpack.c.bf16 %v1131, %v1115
    %v1644 = vpack.c.bf16 %v1132, %v1116
    %v1645 = vpack.c.bf16 %v1133, %v1117
    %v1646 = vpack.c.bf16 %v1134, %v1118
    %v1647 = vpack.c.bf16 %v1135, %v1119
    %v1648 = vpack.c.bf16 %v1136, %v1120
    %v1649 = vpack.c.bf16 %v1137, %v1121
    %v1650 = vpack.c.bf16 %v1138, %v1122
    %v1651 = vpack.c.bf16 %v1139, %v1123
    %v1652 = vpack.c.bf16 %v1140, %v1124
    %v1653 = vpack.c.bf16 %v1141, %v1125
    %v1654 = vpack.c.bf16 %v1142, %v1126
    %v1655 = vpack.c.bf16 %v1143, %v1127
    %v1656 = vpack.c.bf16 %v1144, %v1128
    %v1657 = vpack.c.bf16 %v1145, %v1129
    %v1658 = vpack.c.bf16 %v1146, %v1130
    %v1659 = vld [vmem:[#allocation7] sm:$0xff]
    %v1660 = vld [vmem:[#allocation7 + $0x8] sm:$0xff]
    %v1663 = vlaneseq
    %v1664 = vshrl.u32 %v1663, 7
    %v1665 = vsub.s32 0, %v1664
    %v1666 = vrot.slane %v1659, %v1665
    %v1667 = vlaneseq
    %v1668 = vshrl.u32 %v1667, 7
    %v1669 = vsub.s32 1, %v1668
    %v1670 = vrot.slane %v1659, %v1669
    %v1671 = vlaneseq
    %v1672 = vshrl.u32 %v1671, 7
    %v1673 = vsub.s32 2, %v1672
    %v1674 = vrot.slane %v1659, %v1673
    %v1675 = vlaneseq
    %v1676 = vshrl.u32 %v1675, 7
    %v1677 = vsub.s32 3, %v1676
    %v1678 = vrot.slane %v1659, %v1677
    %v1679 = vlaneseq
    %v1680 = vshrl.u32 %v1679, 7
    %v1681 = vsub.s32 4, %v1680
    %v1682 = vrot.slane %v1659, %v1681
    %v1683 = vlaneseq
    %v1684 = vshrl.u32 %v1683, 7
    %v1685 = vsub.s32 5, %v1684
    %v1686 = vrot.slane %v1659, %v1685
    %v1687 = vlaneseq
    %v1688 = vshrl.u32 %v1687, 7
    %v1689 = vsub.s32 6, %v1688
    %v1690 = vrot.slane %v1659, %v1689
    %v1691 = vlaneseq
    %v1692 = vshrl.u32 %v1691, 7
    %v1693 = vsub.s32 7, %v1692
    %v1694 = vrot.slane %v1659, %v1693
    %v1695 = vlaneseq
    %v1696 = vshrl.u32 %v1695, 7
    %v1697 = vsub.s32 0, %v1696
    %v1698 = vrot.slane %v1660, %v1697
    %v1699 = vlaneseq
    %v1700 = vshrl.u32 %v1699, 7
    %v1701 = vsub.s32 1, %v1700
    %v1702 = vrot.slane %v1660, %v1701
    %v1703 = vlaneseq
    %v1704 = vshrl.u32 %v1703, 7
    %v1705 = vsub.s32 2, %v1704
    %v1706 = vrot.slane %v1660, %v1705
    %v1707 = vlaneseq
    %v1708 = vshrl.u32 %v1707, 7
    %v1709 = vsub.s32 3, %v1708
    %v1710 = vrot.slane %v1660, %v1709
    %v1711 = vlaneseq
    %v1712 = vshrl.u32 %v1711, 7
    %v1713 = vsub.s32 4, %v1712
    %v1714 = vrot.slane %v1660, %v1713
    %v1715 = vlaneseq
    %v1716 = vshrl.u32 %v1715, 7
    %v1717 = vsub.s32 5, %v1716
    %v1718 = vrot.slane %v1660, %v1717
    %v1719 = vlaneseq
    %v1720 = vshrl.u32 %v1719, 7
    %v1721 = vsub.s32 6, %v1720
    %v1722 = vrot.slane %v1660, %v1721
    %v1723 = vlaneseq
    %v1724 = vshrl.u32 %v1723, 7
    %v1725 = vsub.s32 7, %v1724
    %v1726 = vrot.slane %v1660, %v1725
    %1743 = vmatprep.subr.bf16.mxu0 %v1260
    %1744 = vmatpush1.bf16.msra.mxu0 %v1259
    %1745 = vmatprep.subr.bf16.mxu0 %v1244
    %1746 = vmatpush1.bf16.msra.mxu0 %v1243
    %1747 = vmatprep.subr.bf16.mxu0 %v1228
    %1748 = vmatpush1.bf16.msra.mxu0 %v1227
    %1749 = vmatprep.subr.bf16.mxu0 %v1212
    %1750 = vmatpush1.bf16.msra.mxu0 %v1211
    %1751 = vmatprep.subr.bf16.mxu0 %v1196
    %1752 = vmatpush1.bf16.msra.mxu0 %v1195
    %1753 = vmatprep.subr.bf16.mxu0 %v1180
    %1754 = vmatpush1.bf16.msra.mxu0 %v1179
    %1755 = vmatprep.subr.bf16.mxu0 %v1164
    %1756 = vmatpush1.bf16.msra.mxu0 %v1163
    %1757 = vmatprep.subr.bf16.mxu0 %v1148
    %1758 = vmatpush1.bf16.msra.mxu0 %v1147
    %1759 = vmatprep.subr.bf16.mxu0 %v1388
    %1760 = vmatpush2.bf16.msra.mxu0 %v1387
    %1761 = vmatprep.subr.bf16.mxu0 %v1372
    %1762 = vmatpush2.bf16.msra.mxu0 %v1371
    %1763 = vmatprep.subr.bf16.mxu0 %v1356
    %1764 = vmatpush2.bf16.msra.mxu0 %v1355
    %1765 = vmatprep.subr.bf16.mxu0 %v1340
    %1766 = vmatpush2.bf16.msra.mxu0 %v1339
    %1767 = vmatprep.subr.bf16.mxu0 %v1324
    %1768 = vmatpush2.bf16.msra.mxu0 %v1323
    %1769 = vmatprep.subr.bf16.mxu0 %v1308
    %1770 = vmatpush2.bf16.msra.mxu0 %v1307
    %1771 = vmatprep.subr.bf16.mxu0 %v1292
    %1772 = vmatpush2.bf16.msra.mxu0 %v1291
    %1773 = vmatprep.subr.bf16.mxu0 %v1276
    %1774 = vmatpush2.bf16.msra.mxu0 %v1275
    %1775 = vmatprep.mubr.bf16.mxu0 %v120
    %1776 = vmatmul.mubr.bf16.gmra.mxu0 %v119
    %v1777 = vpop.f32.mrf.mxu0
    %v1778 = vadd.f32 %v1666, %v1777
    %v1779 = vpop.f32.mrf.mxu0
    %v1780 = vadd.f32 %v1670, %v1779
    %v1781 = vpop.f32.mrf.mxu0
    %v1782 = vpop.f32.mrf.mxu0
    %1783 = vdwg.mxu0
    %1784 = vmatprep.subr.bf16.mxu0 %v1516
    %1785 = vmatpush1.bf16.msra.mxu0 %v1515
    %1786 = vmatprep.subr.bf16.mxu0 %v1500
    %1787 = vmatpush1.bf16.msra.mxu0 %v1499
    %1788 = vmatprep.subr.bf16.mxu0 %v1484
    %1789 = vmatpush1.bf16.msra.mxu0 %v1483
    %1790 = vmatprep.subr.bf16.mxu0 %v1468
    %1791 = vmatpush1.bf16.msra.mxu0 %v1467
    %1792 = vmatprep.subr.bf16.mxu0 %v1452
    %1793 = vmatpush1.bf16.msra.mxu0 %v1451
    %1794 = vmatprep.subr.bf16.mxu0 %v1436
    %1795 = vmatpush1.bf16.msra.mxu0 %v1435
    %1796 = vmatprep.subr.bf16.mxu0 %v1420
    %1797 = vmatpush1.bf16.msra.mxu0 %v1419
    %1798 = vmatprep.subr.bf16.mxu0 %v1404
    %1799 = vmatpush1.bf16.msra.mxu0 %v1403
    %1800 = vmatprep.subr.bf16.mxu0 %v1644
    %1801 = vmatpush2.bf16.msra.mxu0 %v1643
    %1802 = vmatprep.subr.bf16.mxu0 %v1628
    %1803 = vmatpush2.bf16.msra.mxu0 %v1627
    %1804 = vmatprep.subr.bf16.mxu0 %v1612
    %1805 = vmatpush2.bf16.msra.mxu0 %v1611
    %1806 = vmatprep.subr.bf16.mxu0 %v1596
    %1807 = vmatpush2.bf16.msra.mxu0 %v1595
    %1808 = vmatprep.subr.bf16.mxu0 %v1580
    %1809 = vmatpush2.bf16.msra.mxu0 %v1579
    %1810 = vmatprep.subr.bf16.mxu0 %v1564
    %1811 = vmatpush2.bf16.msra.mxu0 %v1563
    %1812 = vmatprep.subr.bf16.mxu0 %v1548
    %1813 = vmatpush2.bf16.msra.mxu0 %v1547
    %1814 = vmatprep.subr.bf16.mxu0 %v1532
    %1815 = vmatpush2.bf16.msra.mxu0 %v1531
    %1816 = vmatprep.mubr.bf16.mxu0 %v122
    %1817 = vmatmul.mubr.bf16.gmra.mxu0 %v121
    %v1818 = vpop.f32.mrf.mxu0
    %v1819 = vadd.f32 %v1778, %v1818
    %v1820 = vpop.f32.mrf.mxu0
    %v1821 = vadd.f32 %v1780, %v1820
    %v1822 = vpop.f32.mrf.mxu0
    %v1823 = vpop.f32.mrf.mxu0
    %1824 = vdwg.mxu0
    %1825 = vmatprep.subr.bf16.mxu0 %v1262
    %1826 = vmatpush1.bf16.msra.mxu0 %v1261
    %1827 = vmatprep.subr.bf16.mxu0 %v1246
    %1828 = vmatpush1.bf16.msra.mxu0 %v1245
    %1829 = vmatprep.subr.bf16.mxu0 %v1230
    %1830 = vmatpush1.bf16.msra.mxu0 %v1229
    %1831 = vmatprep.subr.bf16.mxu0 %v1214
    %1832 = vmatpush1.bf16.msra.mxu0 %v1213
    %1833 = vmatprep.subr.bf16.mxu0 %v1198
    %1834 = vmatpush1.bf16.msra.mxu0 %v1197
    %1835 = vmatprep.subr.bf16.mxu0 %v1182
    %1836 = vmatpush1.bf16.msra.mxu0 %v1181
    %1837 = vmatprep.subr.bf16.mxu0 %v1166
    %1838 = vmatpush1.bf16.msra.mxu0 %v1165
    %1839 = vmatprep.subr.bf16.mxu0 %v1150
    %1840 = vmatpush1.bf16.msra.mxu0 %v1149
    %1841 = vmatprep.subr.bf16.mxu0 %v1390
    %1842 = vmatpush2.bf16.msra.mxu0 %v1389
    %1843 = vmatprep.subr.bf16.mxu0 %v1374
    %1844 = vmatpush2.bf16.msra.mxu0 %v1373
    %1845 = vmatprep.subr.bf16.mxu0 %v1358
    %1846 = vmatpush2.bf16.msra.mxu0 %v1357
    %1847 = vmatprep.subr.bf16.mxu0 %v1342
    %1848 = vmatpush2.bf16.msra.mxu0 %v1341
    %1849 = vmatprep.subr.bf16.mxu0 %v1326
    %1850 = vmatpush2.bf16.msra.mxu0 %v1325
    %1851 = vmatprep.subr.bf16.mxu0 %v1310
    %1852 = vmatpush2.bf16.msra.mxu0 %v1309
    %1853 = vmatprep.subr.bf16.mxu0 %v1294
    %1854 = vmatpush2.bf16.msra.mxu0 %v1293
    %1855 = vmatprep.subr.bf16.mxu0 %v1278
    %1856 = vmatpush2.bf16.msra.mxu0 %v1277
    %1857 = vmatprep.mubr.bf16.mxu0 %v120
    %1858 = vmatmul.mubr.bf16.gmra.mxu0 %v119
    %v1859 = vpop.f32.mrf.mxu0
    %v1860 = vadd.f32 %v1674, %v1859
    %v1861 = vpop.f32.mrf.mxu0
    %v1862 = vadd.f32 %v1678, %v1861
    %v1863 = vpop.f32.mrf.mxu0
    %v1864 = vpop.f32.mrf.mxu0
    %1865 = vdwg.mxu0
    %1866 = vmatprep.subr.bf16.mxu0 %v1518
    %1867 = vmatpush1.bf16.msra.mxu0 %v1517
    %1868 = vmatprep.subr.bf16.mxu0 %v1502
    %1869 = vmatpush1.bf16.msra.mxu0 %v1501
    %1870 = vmatprep.subr.bf16.mxu0 %v1486
    %1871 = vmatpush1.bf16.msra.mxu0 %v1485
    %1872 = vmatprep.subr.bf16.mxu0 %v1470
    %1873 = vmatpush1.bf16.msra.mxu0 %v1469
    %1874 = vmatprep.subr.bf16.mxu0 %v1454
    %1875 = vmatpush1.bf16.msra.mxu0 %v1453
    %1876 = vmatprep.subr.bf16.mxu0 %v1438
    %1877 = vmatpush1.bf16.msra.mxu0 %v1437
    %1878 = vmatprep.subr.bf16.mxu0 %v1422
    %1879 = vmatpush1.bf16.msra.mxu0 %v1421
    %1880 = vmatprep.subr.bf16.mxu0 %v1406
    %1881 = vmatpush1.bf16.msra.mxu0 %v1405
    %1882 = vmatprep.subr.bf16.mxu0 %v1646
    %1883 = vmatpush2.bf16.msra.mxu0 %v1645
    %1884 = vmatprep.subr.bf16.mxu0 %v1630
    %1885 = vmatpush2.bf16.msra.mxu0 %v1629
    %1886 = vmatprep.subr.bf16.mxu0 %v1614
    %1887 = vmatpush2.bf16.msra.mxu0 %v1613
    %1888 = vmatprep.subr.bf16.mxu0 %v1598
    %1889 = vmatpush2.bf16.msra.mxu0 %v1597
    %1890 = vmatprep.subr.bf16.mxu0 %v1582
    %1891 = vmatpush2.bf16.msra.mxu0 %v1581
    %1892 = vmatprep.subr.bf16.mxu0 %v1566
    %1893 = vmatpush2.bf16.msra.mxu0 %v1565
    %1894 = vmatprep.subr.bf16.mxu0 %v1550
    %1895 = vmatpush2.bf16.msra.mxu0 %v1549
    %1896 = vmatprep.subr.bf16.mxu0 %v1534
    %1897 = vmatpush2.bf16.msra.mxu0 %v1533
    %1898 = vmatprep.mubr.bf16.mxu0 %v122
    %1899 = vmatmul.mubr.bf16.gmra.mxu0 %v121
    %v1900 = vpop.f32.mrf.mxu0
    %v1901 = vadd.f32 %v1860, %v1900
    %v1902 = vpop.f32.mrf.mxu0
    %v1903 = vadd.f32 %v1862, %v1902
    %v1904 = vpop.f32.mrf.mxu0
    %v1905 = vpop.f32.mrf.mxu0
    %1906 = vdwg.mxu0
    %1907 = vmatprep.subr.bf16.mxu0 %v1264
    %1908 = vmatpush1.bf16.msra.mxu0 %v1263
    %1909 = vmatprep.subr.bf16.mxu0 %v1248
    %1910 = vmatpush1.bf16.msra.mxu0 %v1247
    %1911 = vmatprep.subr.bf16.mxu0 %v1232
    %1912 = vmatpush1.bf16.msra.mxu0 %v1231
    %1913 = vmatprep.subr.bf16.mxu0 %v1216
    %1914 = vmatpush1.bf16.msra.mxu0 %v1215
    %1915 = vmatprep.subr.bf16.mxu0 %v1200
    %1916 = vmatpush1.bf16.msra.mxu0 %v1199
    %1917 = vmatprep.subr.bf16.mxu0 %v1184
    %1918 = vmatpush1.bf16.msra.mxu0 %v1183
    %1919 = vmatprep.subr.bf16.mxu0 %v1168
    %1920 = vmatpush1.bf16.msra.mxu0 %v1167
    %1921 = vmatprep.subr.bf16.mxu0 %v1152
    %1922 = vmatpush1.bf16.msra.mxu0 %v1151
    %1923 = vmatprep.subr.bf16.mxu0 %v1392
    %1924 = vmatpush2.bf16.msra.mxu0 %v1391
    %1925 = vmatprep.subr.bf16.mxu0 %v1376
    %1926 = vmatpush2.bf16.msra.mxu0 %v1375
    %1927 = vmatprep.subr.bf16.mxu0 %v1360
    %1928 = vmatpush2.bf16.msra.mxu0 %v1359
    %1929 = vmatprep.subr.bf16.mxu0 %v1344
    %1930 = vmatpush2.bf16.msra.mxu0 %v1343
    %1931 = vmatprep.subr.bf16.mxu0 %v1328
    %1932 = vmatpush2.bf16.msra.mxu0 %v1327
    %1933 = vmatprep.subr.bf16.mxu0 %v1312
    %1934 = vmatpush2.bf16.msra.mxu0 %v1311
    %1935 = vmatprep.subr.bf16.mxu0 %v1296
    %1936 = vmatpush2.bf16.msra.mxu0 %v1295
    %1937 = vmatprep.subr.bf16.mxu0 %v1280
    %1938 = vmatpush2.bf16.msra.mxu0 %v1279
    %1939 = vmatprep.mubr.bf16.mxu0 %v120
    %1940 = vmatmul.mubr.bf16.gmra.mxu0 %v119
    %v1941 = vpop.f32.mrf.mxu0
    %v1942 = vadd.f32 %v1682, %v1941
    %v1943 = vpop.f32.mrf.mxu0
    %v1944 = vadd.f32 %v1686, %v1943
    %v1945 = vpop.f32.mrf.mxu0
    %v1946 = vpop.f32.mrf.mxu0
    %1947 = vdwg.mxu0
    %1948 = vmatprep.subr.bf16.mxu0 %v1520
    %1949 = vmatpush1.bf16.msra.mxu0 %v1519
    %1950 = vmatprep.subr.bf16.mxu0 %v1504
    %1951 = vmatpush1.bf16.msra.mxu0 %v1503
    %1952 = vmatprep.subr.bf16.mxu0 %v1488
    %1953 = vmatpush1.bf16.msra.mxu0 %v1487
    %1954 = vmatprep.subr.bf16.mxu0 %v1472
    %1955 = vmatpush1.bf16.msra.mxu0 %v1471
    %1956 = vmatprep.subr.bf16.mxu0 %v1456
    %1957 = vmatpush1.bf16.msra.mxu0 %v1455
    %1958 = vmatprep.subr.bf16.mxu0 %v1440
    %1959 = vmatpush1.bf16.msra.mxu0 %v1439
    %1960 = vmatprep.subr.bf16.mxu0 %v1424
    %1961 = vmatpush1.bf16.msra.mxu0 %v1423
    %1962 = vmatprep.subr.bf16.mxu0 %v1408
    %1963 = vmatpush1.bf16.msra.mxu0 %v1407
    %1964 = vmatprep.subr.bf16.mxu0 %v1648
    %1965 = vmatpush2.bf16.msra.mxu0 %v1647
    %1966 = vmatprep.subr.bf16.mxu0 %v1632
    %1967 = vmatpush2.bf16.msra.mxu0 %v1631
    %1968 = vmatprep.subr.bf16.mxu0 %v1616
    %1969 = vmatpush2.bf16.msra.mxu0 %v1615
    %1970 = vmatprep.subr.bf16.mxu0 %v1600
    %1971 = vmatpush2.bf16.msra.mxu0 %v1599
    %1972 = vmatprep.subr.bf16.mxu0 %v1584
    %1973 = vmatpush2.bf16.msra.mxu0 %v1583
    %1974 = vmatprep.subr.bf16.mxu0 %v1568
    %1975 = vmatpush2.bf16.msra.mxu0 %v1567
    %1976 = vmatprep.subr.bf16.mxu0 %v1552
    %1977 = vmatpush2.bf16.msra.mxu0 %v1551
    %1978 = vmatprep.subr.bf16.mxu0 %v1536
    %1979 = vmatpush2.bf16.msra.mxu0 %v1535
    %1980 = vmatprep.mubr.bf16.mxu0 %v122
    %1981 = vmatmul.mubr.bf16.gmra.mxu0 %v121
    %v1982 = vpop.f32.mrf.mxu0
    %v1983 = vadd.f32 %v1942, %v1982
    %v1984 = vpop.f32.mrf.mxu0
    %v1985 = vadd.f32 %v1944, %v1984
    %v1986 = vpop.f32.mrf.mxu0
    %v1987 = vpop.f32.mrf.mxu0
    %1988 = vdwg.mxu0
    %1989 = vmatprep.subr.bf16.mxu0 %v1266
    %1990 = vmatpush1.bf16.msra.mxu0 %v1265
    %1991 = vmatprep.subr.bf16.mxu0 %v1250
    %1992 = vmatpush1.bf16.msra.mxu0 %v1249
    %1993 = vmatprep.subr.bf16.mxu0 %v1234
    %1994 = vmatpush1.bf16.msra.mxu0 %v1233
    %1995 = vmatprep.subr.bf16.mxu0 %v1218
    %1996 = vmatpush1.bf16.msra.mxu0 %v1217
    %1997 = vmatprep.subr.bf16.mxu0 %v1202
    %1998 = vmatpush1.bf16.msra.mxu0 %v1201
    %1999 = vmatprep.subr.bf16.mxu0 %v1186
    %2000 = vmatpush1.bf16.msra.mxu0 %v1185
    %2001 = vmatprep.subr.bf16.mxu0 %v1170
    %2002 = vmatpush1.bf16.msra.mxu0 %v1169
    %2003 = vmatprep.subr.bf16.mxu0 %v1154
    %2004 = vmatpush1.bf16.msra.mxu0 %v1153
    %2005 = vmatprep.subr.bf16.mxu0 %v1394
    %2006 = vmatpush2.bf16.msra.mxu0 %v1393
    %2007 = vmatprep.subr.bf16.mxu0 %v1378
    %2008 = vmatpush2.bf16.msra.mxu0 %v1377
    %2009 = vmatprep.subr.bf16.mxu0 %v1362
    %2010 = vmatpush2.bf16.msra.mxu0 %v1361
    %2011 = vmatprep.subr.bf16.mxu0 %v1346
    %2012 = vmatpush2.bf16.msra.mxu0 %v1345
    %2013 = vmatprep.subr.bf16.mxu0 %v1330
    %2014 = vmatpush2.bf16.msra.mxu0 %v1329
    %2015 = vmatprep.subr.bf16.mxu0 %v1314
    %2016 = vmatpush2.bf16.msra.mxu0 %v1313
    %2017 = vmatprep.subr.bf16.mxu0 %v1298
    %2018 = vmatpush2.bf16.msra.mxu0 %v1297
    %2019 = vmatprep.subr.bf16.mxu0 %v1282
    %2020 = vmatpush2.bf16.msra.mxu0 %v1281
    %2021 = vmatprep.mubr.bf16.mxu0 %v120
    %2022 = vmatmul.mubr.bf16.gmra.mxu0 %v119
    %v2023 = vpop.f32.mrf.mxu0
    %v2024 = vadd.f32 %v1690, %v2023
    %v2025 = vpop.f32.mrf.mxu0
    %v2026 = vadd.f32 %v1694, %v2025
    %v2027 = vpop.f32.mrf.mxu0
    %v2028 = vpop.f32.mrf.mxu0
    %2029 = vdwg.mxu0
    %2030 = vmatprep.subr.bf16.mxu0 %v1522
    %2031 = vmatpush1.bf16.msra.mxu0 %v1521
    %2032 = vmatprep.subr.bf16.mxu0 %v1506
    %2033 = vmatpush1.bf16.msra.mxu0 %v1505
    %2034 = vmatprep.subr.bf16.mxu0 %v1490
    %2035 = vmatpush1.bf16.msra.mxu0 %v1489
    %2036 = vmatprep.subr.bf16.mxu0 %v1474
    %2037 = vmatpush1.bf16.msra.mxu0 %v1473
    %2038 = vmatprep.subr.bf16.mxu0 %v1458
    %2039 = vmatpush1.bf16.msra.mxu0 %v1457
    %2040 = vmatprep.subr.bf16.mxu0 %v1442
    %2041 = vmatpush1.bf16.msra.mxu0 %v1441
    %2042 = vmatprep.subr.bf16.mxu0 %v1426
    %2043 = vmatpush1.bf16.msra.mxu0 %v1425
    %2044 = vmatprep.subr.bf16.mxu0 %v1410
    %2045 = vmatpush1.bf16.msra.mxu0 %v1409
    %2046 = vmatprep.subr.bf16.mxu0 %v1650
    %2047 = vmatpush2.bf16.msra.mxu0 %v1649
    %2048 = vmatprep.subr.bf16.mxu0 %v1634
    %2049 = vmatpush2.bf16.msra.mxu0 %v1633
    %2050 = vmatprep.subr.bf16.mxu0 %v1618
    %2051 = vmatpush2.bf16.msra.mxu0 %v1617
    %2052 = vmatprep.subr.bf16.mxu0 %v1602
    %2053 = vmatpush2.bf16.msra.mxu0 %v1601
    %2054 = vmatprep.subr.bf16.mxu0 %v1586
    %2055 = vmatpush2.bf16.msra.mxu0 %v1585
    %2056 = vmatprep.subr.bf16.mxu0 %v1570
    %2057 = vmatpush2.bf16.msra.mxu0 %v1569
    %2058 = vmatprep.subr.bf16.mxu0 %v1554
    %2059 = vmatpush2.bf16.msra.mxu0 %v1553
    %2060 = vmatprep.subr.bf16.mxu0 %v1538
    %2061 = vmatpush2.bf16.msra.mxu0 %v1537
    %2062 = vmatprep.mubr.bf16.mxu0 %v122
    %2063 = vmatmul.mubr.bf16.gmra.mxu0 %v121
    %v2064 = vpop.f32.mrf.mxu0
    %v2065 = vadd.f32 %v2024, %v2064
    %v2066 = vpop.f32.mrf.mxu0
    %v2067 = vadd.f32 %v2026, %v2066
    %v2068 = vpop.f32.mrf.mxu0
    %v2069 = vpop.f32.mrf.mxu0
    %2070 = vdwg.mxu0
    %2071 = vmatprep.subr.bf16.mxu0 %v1268
    %2072 = vmatpush1.bf16.msra.mxu0 %v1267
    %2073 = vmatprep.subr.bf16.mxu0 %v1252
    %2074 = vmatpush1.bf16.msra.mxu0 %v1251
    %2075 = vmatprep.subr.bf16.mxu0 %v1236
    %2076 = vmatpush1.bf16.msra.mxu0 %v1235
    %2077 = vmatprep.subr.bf16.mxu0 %v1220
    %2078 = vmatpush1.bf16.msra.mxu0 %v1219
    %2079 = vmatprep.subr.bf16.mxu0 %v1204
    %2080 = vmatpush1.bf16.msra.mxu0 %v1203
    %2081 = vmatprep.subr.bf16.mxu0 %v1188
    %2082 = vmatpush1.bf16.msra.mxu0 %v1187
    %2083 = vmatprep.subr.bf16.mxu0 %v1172
    %2084 = vmatpush1.bf16.msra.mxu0 %v1171
    %2085 = vmatprep.subr.bf16.mxu0 %v1156
    %2086 = vmatpush1.bf16.msra.mxu0 %v1155
    %2087 = vmatprep.subr.bf16.mxu0 %v1396
    %2088 = vmatpush2.bf16.msra.mxu0 %v1395
    %2089 = vmatprep.subr.bf16.mxu0 %v1380
    %2090 = vmatpush2.bf16.msra.mxu0 %v1379
    %2091 = vmatprep.subr.bf16.mxu0 %v1364
    %2092 = vmatpush2.bf16.msra.mxu0 %v1363
    %2093 = vmatprep.subr.bf16.mxu0 %v1348
    %2094 = vmatpush2.bf16.msra.mxu0 %v1347
    %2095 = vmatprep.subr.bf16.mxu0 %v1332
    %2096 = vmatpush2.bf16.msra.mxu0 %v1331
    %2097 = vmatprep.subr.bf16.mxu0 %v1316
    %2098 = vmatpush2.bf16.msra.mxu0 %v1315
    %2099 = vmatprep.subr.bf16.mxu0 %v1300
    %2100 = vmatpush2.bf16.msra.mxu0 %v1299
    %2101 = vmatprep.subr.bf16.mxu0 %v1284
    %2102 = vmatpush2.bf16.msra.mxu0 %v1283
    %2103 = vmatprep.mubr.bf16.mxu0 %v120
    %2104 = vmatmul.mubr.bf16.gmra.mxu0 %v119
    %v2105 = vpop.f32.mrf.mxu0
    %v2106 = vadd.f32 %v1698, %v2105
    %v2107 = vpop.f32.mrf.mxu0
    %v2108 = vadd.f32 %v1702, %v2107
    %v2109 = vpop.f32.mrf.mxu0
    %v2110 = vpop.f32.mrf.mxu0
    %2111 = vdwg.mxu0
    %2112 = vmatprep.subr.bf16.mxu0 %v1524
    %2113 = vmatpush1.bf16.msra.mxu0 %v1523
    %2114 = vmatprep.subr.bf16.mxu0 %v1508
    %2115 = vmatpush1.bf16.msra.mxu0 %v1507
    %2116 = vmatprep.subr.bf16.mxu0 %v1492
    %2117 = vmatpush1.bf16.msra.mxu0 %v1491
    %2118 = vmatprep.subr.bf16.mxu0 %v1476
    %2119 = vmatpush1.bf16.msra.mxu0 %v1475
    %2120 = vmatprep.subr.bf16.mxu0 %v1460
    %2121 = vmatpush1.bf16.msra.mxu0 %v1459
    %2122 = vmatprep.subr.bf16.mxu0 %v1444
    %2123 = vmatpush1.bf16.msra.mxu0 %v1443
    %2124 = vmatprep.subr.bf16.mxu0 %v1428
    %2125 = vmatpush1.bf16.msra.mxu0 %v1427
    %2126 = vmatprep.subr.bf16.mxu0 %v1412
    %2127 = vmatpush1.bf16.msra.mxu0 %v1411
    %2128 = vmatprep.subr.bf16.mxu0 %v1652
    %2129 = vmatpush2.bf16.msra.mxu0 %v1651
    %2130 = vmatprep.subr.bf16.mxu0 %v1636
    %2131 = vmatpush2.bf16.msra.mxu0 %v1635
    %2132 = vmatprep.subr.bf16.mxu0 %v1620
    %2133 = vmatpush2.bf16.msra.mxu0 %v1619
    %2134 = vmatprep.subr.bf16.mxu0 %v1604
    %2135 = vmatpush2.bf16.msra.mxu0 %v1603
    %2136 = vmatprep.subr.bf16.mxu0 %v1588
    %2137 = vmatpush2.bf16.msra.mxu0 %v1587
    %2138 = vmatprep.subr.bf16.mxu0 %v1572
    %2139 = vmatpush2.bf16.msra.mxu0 %v1571
    %2140 = vmatprep.subr.bf16.mxu0 %v1556
    %2141 = vmatpush2.bf16.msra.mxu0 %v1555
    %2142 = vmatprep.subr.bf16.mxu0 %v1540
    %2143 = vmatpush2.bf16.msra.mxu0 %v1539
    %2144 = vmatprep.mubr.bf16.mxu0 %v122
    %2145 = vmatmul.mubr.bf16.gmra.mxu0 %v121
    %v2146 = vpop.f32.mrf.mxu0
    %v2147 = vadd.f32 %v2106, %v2146
    %v2148 = vpop.f32.mrf.mxu0
    %v2149 = vadd.f32 %v2108, %v2148
    %v2150 = vpop.f32.mrf.mxu0
    %v2151 = vpop.f32.mrf.mxu0
    %2152 = vdwg.mxu0
    %2153 = vmatprep.subr.bf16.mxu0 %v1270
    %2154 = vmatpush1.bf16.msra.mxu0 %v1269
    %2155 = vmatprep.subr.bf16.mxu0 %v1254
    %2156 = vmatpush1.bf16.msra.mxu0 %v1253
    %2157 = vmatprep.subr.bf16.mxu0 %v1238
    %2158 = vmatpush1.bf16.msra.mxu0 %v1237
    %2159 = vmatprep.subr.bf16.mxu0 %v1222
    %2160 = vmatpush1.bf16.msra.mxu0 %v1221
    %2161 = vmatprep.subr.bf16.mxu0 %v1206
    %2162 = vmatpush1.bf16.msra.mxu0 %v1205
    %2163 = vmatprep.subr.bf16.mxu0 %v1190
    %2164 = vmatpush1.bf16.msra.mxu0 %v1189
    %2165 = vmatprep.subr.bf16.mxu0 %v1174
    %2166 = vmatpush1.bf16.msra.mxu0 %v1173
    %2167 = vmatprep.subr.bf16.mxu0 %v1158
    %2168 = vmatpush1.bf16.msra.mxu0 %v1157
    %2169 = vmatprep.subr.bf16.mxu0 %v1398
    %2170 = vmatpush2.bf16.msra.mxu0 %v1397
    %2171 = vmatprep.subr.bf16.mxu0 %v1382
    %2172 = vmatpush2.bf16.msra.mxu0 %v1381
    %2173 = vmatprep.subr.bf16.mxu0 %v1366
    %2174 = vmatpush2.bf16.msra.mxu0 %v1365
    %2175 = vmatprep.subr.bf16.mxu0 %v1350
    %2176 = vmatpush2.bf16.msra.mxu0 %v1349
    %2177 = vmatprep.subr.bf16.mxu0 %v1334
    %2178 = vmatpush2.bf16.msra.mxu0 %v1333
    %2179 = vmatprep.subr.bf16.mxu0 %v1318
    %2180 = vmatpush2.bf16.msra.mxu0 %v1317
    %2181 = vmatprep.subr.bf16.mxu0 %v1302
    %2182 = vmatpush2.bf16.msra.mxu0 %v1301
    %2183 = vmatprep.subr.bf16.mxu0 %v1286
    %2184 = vmatpush2.bf16.msra.mxu0 %v1285
    %2185 = vmatprep.mubr.bf16.mxu0 %v120
    %2186 = vmatmul.mubr.bf16.gmra.mxu0 %v119
    %v2187 = vpop.f32.mrf.mxu0
    %v2188 = vadd.f32 %v1706, %v2187
    %v2189 = vpop.f32.mrf.mxu0
    %v2190 = vadd.f32 %v1710, %v2189
    %v2191 = vpop.f32.mrf.mxu0
    %v2192 = vpop.f32.mrf.mxu0
    %2193 = vdwg.mxu0
    %2194 = vmatprep.subr.bf16.mxu0 %v1526
    %2195 = vmatpush1.bf16.msra.mxu0 %v1525
    %2196 = vmatprep.subr.bf16.mxu0 %v1510
    %2197 = vmatpush1.bf16.msra.mxu0 %v1509
    %2198 = vmatprep.subr.bf16.mxu0 %v1494
    %2199 = vmatpush1.bf16.msra.mxu0 %v1493
    %2200 = vmatprep.subr.bf16.mxu0 %v1478
    %2201 = vmatpush1.bf16.msra.mxu0 %v1477
    %2202 = vmatprep.subr.bf16.mxu0 %v1462
    %2203 = vmatpush1.bf16.msra.mxu0 %v1461
    %2204 = vmatprep.subr.bf16.mxu0 %v1446
    %2205 = vmatpush1.bf16.msra.mxu0 %v1445
    %2206 = vmatprep.subr.bf16.mxu0 %v1430
    %2207 = vmatpush1.bf16.msra.mxu0 %v1429
    %2208 = vmatprep.subr.bf16.mxu0 %v1414
    %2209 = vmatpush1.bf16.msra.mxu0 %v1413
    %2210 = vmatprep.subr.bf16.mxu0 %v1654
    %2211 = vmatpush2.bf16.msra.mxu0 %v1653
    %2212 = vmatprep.subr.bf16.mxu0 %v1638
    %2213 = vmatpush2.bf16.msra.mxu0 %v1637
    %2214 = vmatprep.subr.bf16.mxu0 %v1622
    %2215 = vmatpush2.bf16.msra.mxu0 %v1621
    %2216 = vmatprep.subr.bf16.mxu0 %v1606
    %2217 = vmatpush2.bf16.msra.mxu0 %v1605
    %2218 = vmatprep.subr.bf16.mxu0 %v1590
    %2219 = vmatpush2.bf16.msra.mxu0 %v1589
    %2220 = vmatprep.subr.bf16.mxu0 %v1574
    %2221 = vmatpush2.bf16.msra.mxu0 %v1573
    %2222 = vmatprep.subr.bf16.mxu0 %v1558
    %2223 = vmatpush2.bf16.msra.mxu0 %v1557
    %2224 = vmatprep.subr.bf16.mxu0 %v1542
    %2225 = vmatpush2.bf16.msra.mxu0 %v1541
    %2226 = vmatprep.mubr.bf16.mxu0 %v122
    %2227 = vmatmul.mubr.bf16.gmra.mxu0 %v121
    %v2228 = vpop.f32.mrf.mxu0
    %v2229 = vadd.f32 %v2188, %v2228
    %v2230 = vpop.f32.mrf.mxu0
    %v2231 = vadd.f32 %v2190, %v2230
    %v2232 = vpop.f32.mrf.mxu0
    %v2233 = vpop.f32.mrf.mxu0
    %2234 = vdwg.mxu0
    %2235 = vmatprep.subr.bf16.mxu0 %v1272
    %2236 = vmatpush1.bf16.msra.mxu0 %v1271
    %2237 = vmatprep.subr.bf16.mxu0 %v1256
    %2238 = vmatpush1.bf16.msra.mxu0 %v1255
    %2239 = vmatprep.subr.bf16.mxu0 %v1240
    %2240 = vmatpush1.bf16.msra.mxu0 %v1239
    %2241 = vmatprep.subr.bf16.mxu0 %v1224
    %2242 = vmatpush1.bf16.msra.mxu0 %v1223
    %2243 = vmatprep.subr.bf16.mxu0 %v1208
    %2244 = vmatpush1.bf16.msra.mxu0 %v1207
    %2245 = vmatprep.subr.bf16.mxu0 %v1192
    %2246 = vmatpush1.bf16.msra.mxu0 %v1191
    %2247 = vmatprep.subr.bf16.mxu0 %v1176
    %2248 = vmatpush1.bf16.msra.mxu0 %v1175
    %2249 = vmatprep.subr.bf16.mxu0 %v1160
    %2250 = vmatpush1.bf16.msra.mxu0 %v1159
    %2251 = vmatprep.subr.bf16.mxu0 %v1400
    %2252 = vmatpush2.bf16.msra.mxu0 %v1399
    %2253 = vmatprep.subr.bf16.mxu0 %v1384
    %2254 = vmatpush2.bf16.msra.mxu0 %v1383
    %2255 = vmatprep.subr.bf16.mxu0 %v1368
    %2256 = vmatpush2.bf16.msra.mxu0 %v1367
    %2257 = vmatprep.subr.bf16.mxu0 %v1352
    %2258 = vmatpush2.bf16.msra.mxu0 %v1351
    %2259 = vmatprep.subr.bf16.mxu0 %v1336
    %2260 = vmatpush2.bf16.msra.mxu0 %v1335
    %2261 = vmatprep.subr.bf16.mxu0 %v1320
    %2262 = vmatpush2.bf16.msra.mxu0 %v1319
    %2263 = vmatprep.subr.bf16.mxu0 %v1304
    %2264 = vmatpush2.bf16.msra.mxu0 %v1303
    %2265 = vmatprep.subr.bf16.mxu0 %v1288
    %2266 = vmatpush2.bf16.msra.mxu0 %v1287
    %2267 = vmatprep.mubr.bf16.mxu0 %v120
    %2268 = vmatmul.mubr.bf16.gmra.mxu0 %v119
    %v2269 = vpop.f32.mrf.mxu0
    %v2270 = vadd.f32 %v1714, %v2269
    %v2271 = vpop.f32.mrf.mxu0
    %v2272 = vadd.f32 %v1718, %v2271
    %v2273 = vpop.f32.mrf.mxu0
    %v2274 = vpop.f32.mrf.mxu0
    %2275 = vdwg.mxu0
    %2276 = vmatprep.subr.bf16.mxu0 %v1528
    %2277 = vmatpush1.bf16.msra.mxu0 %v1527
    %2278 = vmatprep.subr.bf16.mxu0 %v1512
    %2279 = vmatpush1.bf16.msra.mxu0 %v1511
    %2280 = vmatprep.subr.bf16.mxu0 %v1496
    %2281 = vmatpush1.bf16.msra.mxu0 %v1495
    %2282 = vmatprep.subr.bf16.mxu0 %v1480
    %2283 = vmatpush1.bf16.msra.mxu0 %v1479
    %2284 = vmatprep.subr.bf16.mxu0 %v1464
    %2285 = vmatpush1.bf16.msra.mxu0 %v1463
    %2286 = vmatprep.subr.bf16.mxu0 %v1448
    %2287 = vmatpush1.bf16.msra.mxu0 %v1447
    %2288 = vmatprep.subr.bf16.mxu0 %v1432
    %2289 = vmatpush1.bf16.msra.mxu0 %v1431
    %2290 = vmatprep.subr.bf16.mxu0 %v1416
    %2291 = vmatpush1.bf16.msra.mxu0 %v1415
    %2292 = vmatprep.subr.bf16.mxu0 %v1656
    %2293 = vmatpush2.bf16.msra.mxu0 %v1655
    %2294 = vmatprep.subr.bf16.mxu0 %v1640
    %2295 = vmatpush2.bf16.msra.mxu0 %v1639
    %2296 = vmatprep.subr.bf16.mxu0 %v1624
    %2297 = vmatpush2.bf16.msra.mxu0 %v1623
    %2298 = vmatprep.subr.bf16.mxu0 %v1608
    %2299 = vmatpush2.bf16.msra.mxu0 %v1607
    %2300 = vmatprep.subr.bf16.mxu0 %v1592
    %2301 = vmatpush2.bf16.msra.mxu0 %v1591
    %2302 = vmatprep.subr.bf16.mxu0 %v1576
    %2303 = vmatpush2.bf16.msra.mxu0 %v1575
    %2304 = vmatprep.subr.bf16.mxu0 %v1560
    %2305 = vmatpush2.bf16.msra.mxu0 %v1559
    %2306 = vmatprep.subr.bf16.mxu0 %v1544
    %2307 = vmatpush2.bf16.msra.mxu0 %v1543
    %2308 = vmatprep.mubr.bf16.mxu0 %v122
    %2309 = vmatmul.mubr.bf16.gmra.mxu0 %v121
    %v2310 = vpop.f32.mrf.mxu0
    %v2311 = vadd.f32 %v2270, %v2310
    %v2312 = vpop.f32.mrf.mxu0
    %v2313 = vadd.f32 %v2272, %v2312
    %v2314 = vpop.f32.mrf.mxu0
    %v2315 = vpop.f32.mrf.mxu0
    %2316 = vdwg.mxu0
    %2317 = vmatprep.subr.bf16.mxu0 %v1274
    %2318 = vmatpush1.bf16.msra.mxu0 %v1273
    %2319 = vmatprep.subr.bf16.mxu0 %v1258
    %2320 = vmatpush1.bf16.msra.mxu0 %v1257
    %2321 = vmatprep.subr.bf16.mxu0 %v1242
    %2322 = vmatpush1.bf16.msra.mxu0 %v1241
    %2323 = vmatprep.subr.bf16.mxu0 %v1226
    %2324 = vmatpush1.bf16.msra.mxu0 %v1225
    %2325 = vmatprep.subr.bf16.mxu0 %v1210
    %2326 = vmatpush1.bf16.msra.mxu0 %v1209
    %2327 = vmatprep.subr.bf16.mxu0 %v1194
    %2328 = vmatpush1.bf16.msra.mxu0 %v1193
    %2329 = vmatprep.subr.bf16.mxu0 %v1178
    %2330 = vmatpush1.bf16.msra.mxu0 %v1177
    %2331 = vmatprep.subr.bf16.mxu0 %v1162
    %2332 = vmatpush1.bf16.msra.mxu0 %v1161
    %2333 = vmatprep.subr.bf16.mxu0 %v1402
    %2334 = vmatpush2.bf16.msra.mxu0 %v1401
    %2335 = vmatprep.subr.bf16.mxu0 %v1386
    %2336 = vmatpush2.bf16.msra.mxu0 %v1385
    %2337 = vmatprep.subr.bf16.mxu0 %v1370
    %2338 = vmatpush2.bf16.msra.mxu0 %v1369
    %2339 = vmatprep.subr.bf16.mxu0 %v1354
    %2340 = vmatpush2.bf16.msra.mxu0 %v1353
    %2341 = vmatprep.subr.bf16.mxu0 %v1338
    %2342 = vmatpush2.bf16.msra.mxu0 %v1337
    %2343 = vmatprep.subr.bf16.mxu0 %v1322
    %2344 = vmatpush2.bf16.msra.mxu0 %v1321
    %2345 = vmatprep.subr.bf16.mxu0 %v1306
    %2346 = vmatpush2.bf16.msra.mxu0 %v1305
    %2347 = vmatprep.subr.bf16.mxu0 %v1290
    %2348 = vmatpush2.bf16.msra.mxu0 %v1289
    %2349 = vmatprep.mubr.bf16.mxu0 %v120
    %2350 = vmatmul.mubr.bf16.gmra.mxu0 %v119
    %v2351 = vpop.f32.mrf.mxu0
    %v2352 = vadd.f32 %v1722, %v2351
    %v2353 = vpop.f32.mrf.mxu0
    %v2354 = vadd.f32 %v1726, %v2353
    %v2355 = vpop.f32.mrf.mxu0
    %v2356 = vpop.f32.mrf.mxu0
    %2357 = vdwg.mxu0
    %2358 = vmatprep.subr.bf16.mxu0 %v1530
    %2359 = vmatpush1.bf16.msra.mxu0 %v1529
    %2360 = vmatprep.subr.bf16.mxu0 %v1514
    %2361 = vmatpush1.bf16.msra.mxu0 %v1513
    %2362 = vmatprep.subr.bf16.mxu0 %v1498
    %2363 = vmatpush1.bf16.msra.mxu0 %v1497
    %2364 = vmatprep.subr.bf16.mxu0 %v1482
    %2365 = vmatpush1.bf16.msra.mxu0 %v1481
    %2366 = vmatprep.subr.bf16.mxu0 %v1466
    %2367 = vmatpush1.bf16.msra.mxu0 %v1465
    %2368 = vmatprep.subr.bf16.mxu0 %v1450
    %2369 = vmatpush1.bf16.msra.mxu0 %v1449
    %2370 = vmatprep.subr.bf16.mxu0 %v1434
    %2371 = vmatpush1.bf16.msra.mxu0 %v1433
    %2372 = vmatprep.subr.bf16.mxu0 %v1418
    %2373 = vmatpush1.bf16.msra.mxu0 %v1417
    %2374 = vmatprep.subr.bf16.mxu0 %v1658
    %2375 = vmatpush2.bf16.msra.mxu0 %v1657
    %2376 = vmatprep.subr.bf16.mxu0 %v1642
    %2377 = vmatpush2.bf16.msra.mxu0 %v1641
    %2378 = vmatprep.subr.bf16.mxu0 %v1626
    %2379 = vmatpush2.bf16.msra.mxu0 %v1625
    %2380 = vmatprep.subr.bf16.mxu0 %v1610
    %2381 = vmatpush2.bf16.msra.mxu0 %v1609
    %2382 = vmatprep.subr.bf16.mxu0 %v1594
    %2383 = vmatpush2.bf16.msra.mxu0 %v1593
    %2384 = vmatprep.subr.bf16.mxu0 %v1578
    %2385 = vmatpush2.bf16.msra.mxu0 %v1577
    %2386 = vmatprep.subr.bf16.mxu0 %v1562
    %2387 = vmatpush2.bf16.msra.mxu0 %v1561
    %2388 = vmatprep.subr.bf16.mxu0 %v1546
    %2389 = vmatpush2.bf16.msra.mxu0 %v1545
    %2390 = vmatprep.mubr.bf16.mxu0 %v122
    %2391 = vmatmul.mubr.bf16.gmra.mxu0 %v121
    %v2392 = vpop.f32.mrf.mxu0
    %v2393 = vadd.f32 %v2352, %v2392
    %v2394 = vpop.f32.mrf.mxu0
    %v2395 = vadd.f32 %v2354, %v2394
    %v2396 = vpop.f32.mrf.mxu0
    %v2397 = vpop.f32.mrf.mxu0
    %2398 = vdwg.mxu0
    %v2399 = vmax.f32 %v1819, 0.0
    %v2400 = vmax.f32 %v1821, 0.0
    %v2401 = vmax.f32 %v1901, 0.0
    %v2402 = vmax.f32 %v1903, 0.0
    %v2403 = vmax.f32 %v1983, 0.0
    %v2404 = vmax.f32 %v1985, 0.0
    %v2405 = vmax.f32 %v2065, 0.0
    %v2406 = vmax.f32 %v2067, 0.0
    %v2407 = vmax.f32 %v2147, 0.0
    %v2408 = vmax.f32 %v2149, 0.0
    %v2409 = vmax.f32 %v2229, 0.0
    %v2410 = vmax.f32 %v2231, 0.0
    %v2411 = vmax.f32 %v2311, 0.0
    %v2412 = vmax.f32 %v2313, 0.0
    %v2413 = vmax.f32 %v2393, 0.0
    %v2414 = vmax.f32 %v2395, 0.0
    %v2415 = vpack.c.bf16 %v2399, %v2399
    %v2416 = vpack.c.bf16 %v2400, %v2400
    %v2417 = vpack.c.bf16 %v2401, %v2401
    %v2418 = vpack.c.bf16 %v2402, %v2402
    %v2419 = vpack.c.bf16 %v2403, %v2403
    %v2420 = vpack.c.bf16 %v2404, %v2404
    %v2421 = vpack.c.bf16 %v2405, %v2405
    %v2422 = vpack.c.bf16 %v2406, %v2406
    %v2423 = vpack.c.bf16 %v2407, %v2407
    %v2424 = vpack.c.bf16 %v2408, %v2408
    %v2425 = vpack.c.bf16 %v2409, %v2409
    %v2426 = vpack.c.bf16 %v2410, %v2410
    %v2427 = vpack.c.bf16 %v2411, %v2411
    %v2428 = vpack.c.bf16 %v2412, %v2412
    %v2429 = vpack.c.bf16 %v2413, %v2413
    %v2430 = vpack.c.bf16 %v2414, %v2414
    %v2431 = vld [vmem:[#allocation8] sm:$0xff]
    %v2432 = vld [vmem:[#allocation8 + $0x8] sm:$0xff]
    %v2433 = vld [vmem:[#allocation8 + $0x10] sm:$0xff]
    %v2434 = vld [vmem:[#allocation8 + $0x18] sm:$0xff]
    %v2435 = vld [vmem:[#allocation8 + $0x20] sm:$0xff]
    %v2436 = vld [vmem:[#allocation8 + $0x28] sm:$0xff]
    %v2437 = vld [vmem:[#allocation8 + $0x30] sm:$0xff]
    %v2438 = vld [vmem:[#allocation8 + $0x38] sm:$0xff]
    %v2439 = vld [vmem:[#allocation8 + $0x40] sm:$0xff]
    %v2440 = vld [vmem:[#allocation8 + $0x48] sm:$0xff]
    %v2441 = vld [vmem:[#allocation8 + $0x50] sm:$0xff]
    %v2442 = vld [vmem:[#allocation8 + $0x58] sm:$0xff]
    %v2443 = vld [vmem:[#allocation8 + $0x60] sm:$0xff]
    %v2444 = vld [vmem:[#allocation8 + $0x68] sm:$0xff]
    %v2445 = vld [vmem:[#allocation8 + $0x70] sm:$0xff]
    %v2446 = vld [vmem:[#allocation8 + $0x78] sm:$0xff]
    %v2447 = vld [vmem:[#allocation8 + $0x80] sm:$0xff]
    %v2448 = vld [vmem:[#allocation8 + $0x88] sm:$0xff]
    %v2449 = vld [vmem:[#allocation8 + $0x90] sm:$0xff]
    %v2450 = vld [vmem:[#allocation8 + $0x98] sm:$0xff]
    %v2451 = vld [vmem:[#allocation8 + $0xa0] sm:$0xff]
    %v2452 = vld [vmem:[#allocation8 + $0xa8] sm:$0xff]
    %v2453 = vld [vmem:[#allocation8 + $0xb0] sm:$0xff]
    %v2454 = vld [vmem:[#allocation8 + $0xb8] sm:$0xff]
    %v2455 = vld [vmem:[#allocation8 + $0xc0] sm:$0xff]
    %v2456 = vld [vmem:[#allocation8 + $0xc8] sm:$0xff]
    %v2457 = vld [vmem:[#allocation8 + $0xd0] sm:$0xff]
    %v2458 = vld [vmem:[#allocation8 + $0xd8] sm:$0xff]
    %v2459 = vld [vmem:[#allocation8 + $0xe0] sm:$0xff]
    %v2460 = vld [vmem:[#allocation8 + $0xe8] sm:$0xff]
    %v2461 = vld [vmem:[#allocation8 + $0xf0] sm:$0xff]
    %v2462 = vld [vmem:[#allocation8 + $0xf8] sm:$0xff]
    %v2463 = vld [vmem:[#allocation8 + $0x100] sm:$0xff]
    %v2464 = vld [vmem:[#allocation8 + $0x108] sm:$0xff]
    %v2465 = vld [vmem:[#allocation8 + $0x110] sm:$0xff]
    %v2466 = vld [vmem:[#allocation8 + $0x118] sm:$0xff]
    %v2467 = vld [vmem:[#allocation8 + $0x120] sm:$0xff]
    %v2468 = vld [vmem:[#allocation8 + $0x128] sm:$0xff]
    %v2469 = vld [vmem:[#allocation8 + $0x130] sm:$0xff]
    %v2470 = vld [vmem:[#allocation8 + $0x138] sm:$0xff]
    %v2471 = vld [vmem:[#allocation8 + $0x140] sm:$0xff]
    %v2472 = vld [vmem:[#allocation8 + $0x148] sm:$0xff]
    %v2473 = vld [vmem:[#allocation8 + $0x150] sm:$0xff]
    %v2474 = vld [vmem:[#allocation8 + $0x158] sm:$0xff]
    %v2475 = vld [vmem:[#allocation8 + $0x160] sm:$0xff]
    %v2476 = vld [vmem:[#allocation8 + $0x168] sm:$0xff]
    %v2477 = vld [vmem:[#allocation8 + $0x170] sm:$0xff]
    %v2478 = vld [vmem:[#allocation8 + $0x178] sm:$0xff]
    %v2479 = vld [vmem:[#allocation8 + $0x180] sm:$0xff]
    %v2480 = vld [vmem:[#allocation8 + $0x188] sm:$0xff]
    %v2481 = vld [vmem:[#allocation8 + $0x190] sm:$0xff]
    %v2482 = vld [vmem:[#allocation8 + $0x198] sm:$0xff]
    %v2483 = vld [vmem:[#allocation8 + $0x1a0] sm:$0xff]
    %v2484 = vld [vmem:[#allocation8 + $0x1a8] sm:$0xff]
    %v2485 = vld [vmem:[#allocation8 + $0x1b0] sm:$0xff]
    %v2486 = vld [vmem:[#allocation8 + $0x1b8] sm:$0xff]
    %v2487 = vld [vmem:[#allocation8 + $0x1c0] sm:$0xff]
    %v2488 = vld [vmem:[#allocation8 + $0x1c8] sm:$0xff]
    %v2489 = vld [vmem:[#allocation8 + $0x1d0] sm:$0xff]
    %v2490 = vld [vmem:[#allocation8 + $0x1d8] sm:$0xff]
    %v2491 = vld [vmem:[#allocation8 + $0x1e0] sm:$0xff]
    %v2492 = vld [vmem:[#allocation8 + $0x1e8] sm:$0xff]
    %v2493 = vld [vmem:[#allocation8 + $0x1f0] sm:$0xff]
    %v2494 = vld [vmem:[#allocation8 + $0x1f8] sm:$0xff]
    %v2495 = vld [vmem:[#allocation8 + $0x200] sm:$0xff]
    %v2496 = vld [vmem:[#allocation8 + $0x208] sm:$0xff]
    %v2497 = vld [vmem:[#allocation8 + $0x210] sm:$0xff]
    %v2498 = vld [vmem:[#allocation8 + $0x218] sm:$0xff]
    %v2499 = vld [vmem:[#allocation8 + $0x220] sm:$0xff]
    %v2500 = vld [vmem:[#allocation8 + $0x228] sm:$0xff]
    %v2501 = vld [vmem:[#allocation8 + $0x230] sm:$0xff]
    %v2502 = vld [vmem:[#allocation8 + $0x238] sm:$0xff]
    %v2503 = vld [vmem:[#allocation8 + $0x240] sm:$0xff]
    %v2504 = vld [vmem:[#allocation8 + $0x248] sm:$0xff]
    %v2505 = vld [vmem:[#allocation8 + $0x250] sm:$0xff]
    %v2506 = vld [vmem:[#allocation8 + $0x258] sm:$0xff]
    %v2507 = vld [vmem:[#allocation8 + $0x260] sm:$0xff]
    %v2508 = vld [vmem:[#allocation8 + $0x268] sm:$0xff]
    %v2509 = vld [vmem:[#allocation8 + $0x270] sm:$0xff]
    %v2510 = vld [vmem:[#allocation8 + $0x278] sm:$0xff]
    %v2511 = vld [vmem:[#allocation8 + $0x280] sm:$0xff]
    %v2512 = vld [vmem:[#allocation8 + $0x288] sm:$0xff]
    %v2513 = vld [vmem:[#allocation8 + $0x290] sm:$0xff]
    %v2514 = vld [vmem:[#allocation8 + $0x298] sm:$0xff]
    %v2515 = vld [vmem:[#allocation8 + $0x2a0] sm:$0xff]
    %v2516 = vld [vmem:[#allocation8 + $0x2a8] sm:$0xff]
    %v2517 = vld [vmem:[#allocation8 + $0x2b0] sm:$0xff]
    %v2518 = vld [vmem:[#allocation8 + $0x2b8] sm:$0xff]
    %v2519 = vld [vmem:[#allocation8 + $0x2c0] sm:$0xff]
    %v2520 = vld [vmem:[#allocation8 + $0x2c8] sm:$0xff]
    %v2521 = vld [vmem:[#allocation8 + $0x2d0] sm:$0xff]
    %v2522 = vld [vmem:[#allocation8 + $0x2d8] sm:$0xff]
    %v2523 = vld [vmem:[#allocation8 + $0x2e0] sm:$0xff]
    %v2524 = vld [vmem:[#allocation8 + $0x2e8] sm:$0xff]
    %v2525 = vld [vmem:[#allocation8 + $0x2f0] sm:$0xff]
    %v2526 = vld [vmem:[#allocation8 + $0x2f8] sm:$0xff]
    %v2527 = vld [vmem:[#allocation8 + $0x300] sm:$0xff]
    %v2528 = vld [vmem:[#allocation8 + $0x308] sm:$0xff]
    %v2529 = vld [vmem:[#allocation8 + $0x310] sm:$0xff]
    %v2530 = vld [vmem:[#allocation8 + $0x318] sm:$0xff]
    %v2531 = vld [vmem:[#allocation8 + $0x320] sm:$0xff]
    %v2532 = vld [vmem:[#allocation8 + $0x328] sm:$0xff]
    %v2533 = vld [vmem:[#allocation8 + $0x330] sm:$0xff]
    %v2534 = vld [vmem:[#allocation8 + $0x338] sm:$0xff]
    %v2535 = vld [vmem:[#allocation8 + $0x340] sm:$0xff]
    %v2536 = vld [vmem:[#allocation8 + $0x348] sm:$0xff]
    %v2537 = vld [vmem:[#allocation8 + $0x350] sm:$0xff]
    %v2538 = vld [vmem:[#allocation8 + $0x358] sm:$0xff]
    %v2539 = vld [vmem:[#allocation8 + $0x360] sm:$0xff]
    %v2540 = vld [vmem:[#allocation8 + $0x368] sm:$0xff]
    %v2541 = vld [vmem:[#allocation8 + $0x370] sm:$0xff]
    %v2542 = vld [vmem:[#allocation8 + $0x378] sm:$0xff]
    %v2543 = vld [vmem:[#allocation8 + $0x380] sm:$0xff]
    %v2544 = vld [vmem:[#allocation8 + $0x388] sm:$0xff]
    %v2545 = vld [vmem:[#allocation8 + $0x390] sm:$0xff]
    %v2546 = vld [vmem:[#allocation8 + $0x398] sm:$0xff]
    %v2547 = vld [vmem:[#allocation8 + $0x3a0] sm:$0xff]
    %v2548 = vld [vmem:[#allocation8 + $0x3a8] sm:$0xff]
    %v2549 = vld [vmem:[#allocation8 + $0x3b0] sm:$0xff]
    %v2550 = vld [vmem:[#allocation8 + $0x3b8] sm:$0xff]
    %v2551 = vld [vmem:[#allocation8 + $0x3c0] sm:$0xff]
    %v2552 = vld [vmem:[#allocation8 + $0x3c8] sm:$0xff]
    %v2553 = vld [vmem:[#allocation8 + $0x3d0] sm:$0xff]
    %v2554 = vld [vmem:[#allocation8 + $0x3d8] sm:$0xff]
    %v2555 = vld [vmem:[#allocation8 + $0x3e0] sm:$0xff]
    %v2556 = vld [vmem:[#allocation8 + $0x3e8] sm:$0xff]
    %v2557 = vld [vmem:[#allocation8 + $0x3f0] sm:$0xff]
    %v2558 = vld [vmem:[#allocation8 + $0x3f8] sm:$0xff]
    %v2559 = vld [vmem:[#allocation8 + $0x400] sm:$0xff]
    %v2560 = vld [vmem:[#allocation8 + $0x408] sm:$0xff]
    %v2561 = vld [vmem:[#allocation8 + $0x410] sm:$0xff]
    %v2562 = vld [vmem:[#allocation8 + $0x418] sm:$0xff]
    %v2563 = vld [vmem:[#allocation8 + $0x420] sm:$0xff]
    %v2564 = vld [vmem:[#allocation8 + $0x428] sm:$0xff]
    %v2565 = vld [vmem:[#allocation8 + $0x430] sm:$0xff]
    %v2566 = vld [vmem:[#allocation8 + $0x438] sm:$0xff]
    %v2567 = vld [vmem:[#allocation8 + $0x440] sm:$0xff]
    %v2568 = vld [vmem:[#allocation8 + $0x448] sm:$0xff]
    %v2569 = vld [vmem:[#allocation8 + $0x450] sm:$0xff]
    %v2570 = vld [vmem:[#allocation8 + $0x458] sm:$0xff]
    %v2571 = vld [vmem:[#allocation8 + $0x460] sm:$0xff]
    %v2572 = vld [vmem:[#allocation8 + $0x468] sm:$0xff]
    %v2573 = vld [vmem:[#allocation8 + $0x470] sm:$0xff]
    %v2574 = vld [vmem:[#allocation8 + $0x478] sm:$0xff]
    %v2575 = vld [vmem:[#allocation8 + $0x480] sm:$0xff]
    %v2576 = vld [vmem:[#allocation8 + $0x488] sm:$0xff]
    %v2577 = vld [vmem:[#allocation8 + $0x490] sm:$0xff]
    %v2578 = vld [vmem:[#allocation8 + $0x498] sm:$0xff]
    %v2579 = vld [vmem:[#allocation8 + $0x4a0] sm:$0xff]
    %v2580 = vld [vmem:[#allocation8 + $0x4a8] sm:$0xff]
    %v2581 = vld [vmem:[#allocation8 + $0x4b0] sm:$0xff]
    %v2582 = vld [vmem:[#allocation8 + $0x4b8] sm:$0xff]
    %v2583 = vld [vmem:[#allocation8 + $0x4c0] sm:$0xff]
    %v2584 = vld [vmem:[#allocation8 + $0x4c8] sm:$0xff]
    %v2585 = vld [vmem:[#allocation8 + $0x4d0] sm:$0xff]
    %v2586 = vld [vmem:[#allocation8 + $0x4d8] sm:$0xff]
    %v2587 = vld [vmem:[#allocation8 + $0x4e0] sm:$0xff]
    %v2588 = vld [vmem:[#allocation8 + $0x4e8] sm:$0xff]
    %v2589 = vld [vmem:[#allocation8 + $0x4f0] sm:$0xff]
    %v2590 = vld [vmem:[#allocation8 + $0x4f8] sm:$0xff]
    %v2591 = vld [vmem:[#allocation8 + $0x500] sm:$0xff]
    %v2592 = vld [vmem:[#allocation8 + $0x508] sm:$0xff]
    %v2593 = vld [vmem:[#allocation8 + $0x510] sm:$0xff]
    %v2594 = vld [vmem:[#allocation8 + $0x518] sm:$0xff]
    %v2595 = vld [vmem:[#allocation8 + $0x520] sm:$0xff]
    %v2596 = vld [vmem:[#allocation8 + $0x528] sm:$0xff]
    %v2597 = vld [vmem:[#allocation8 + $0x530] sm:$0xff]
    %v2598 = vld [vmem:[#allocation8 + $0x538] sm:$0xff]
    %v2599 = vld [vmem:[#allocation8 + $0x540] sm:$0xff]
    %v2600 = vld [vmem:[#allocation8 + $0x548] sm:$0xff]
    %v2601 = vld [vmem:[#allocation8 + $0x550] sm:$0xff]
    %v2602 = vld [vmem:[#allocation8 + $0x558] sm:$0xff]
    %v2603 = vld [vmem:[#allocation8 + $0x560] sm:$0xff]
    %v2604 = vld [vmem:[#allocation8 + $0x568] sm:$0xff]
    %v2605 = vld [vmem:[#allocation8 + $0x570] sm:$0xff]
    %v2606 = vld [vmem:[#allocation8 + $0x578] sm:$0xff]
    %v2607 = vld [vmem:[#allocation8 + $0x580] sm:$0xff]
    %v2608 = vld [vmem:[#allocation8 + $0x588] sm:$0xff]
    %v2609 = vld [vmem:[#allocation8 + $0x590] sm:$0xff]
    %v2610 = vld [vmem:[#allocation8 + $0x598] sm:$0xff]
    %v2611 = vld [vmem:[#allocation8 + $0x5a0] sm:$0xff]
    %v2612 = vld [vmem:[#allocation8 + $0x5a8] sm:$0xff]
    %v2613 = vld [vmem:[#allocation8 + $0x5b0] sm:$0xff]
    %v2614 = vld [vmem:[#allocation8 + $0x5b8] sm:$0xff]
    %v2615 = vld [vmem:[#allocation8 + $0x5c0] sm:$0xff]
    %v2616 = vld [vmem:[#allocation8 + $0x5c8] sm:$0xff]
    %v2617 = vld [vmem:[#allocation8 + $0x5d0] sm:$0xff]
    %v2618 = vld [vmem:[#allocation8 + $0x5d8] sm:$0xff]
    %v2619 = vld [vmem:[#allocation8 + $0x5e0] sm:$0xff]
    %v2620 = vld [vmem:[#allocation8 + $0x5e8] sm:$0xff]
    %v2621 = vld [vmem:[#allocation8 + $0x5f0] sm:$0xff]
    %v2622 = vld [vmem:[#allocation8 + $0x5f8] sm:$0xff]
    %v2623 = vld [vmem:[#allocation8 + $0x600] sm:$0xff]
    %v2624 = vld [vmem:[#allocation8 + $0x608] sm:$0xff]
    %v2625 = vld [vmem:[#allocation8 + $0x610] sm:$0xff]
    %v2626 = vld [vmem:[#allocation8 + $0x618] sm:$0xff]
    %v2627 = vld [vmem:[#allocation8 + $0x620] sm:$0xff]
    %v2628 = vld [vmem:[#allocation8 + $0x628] sm:$0xff]
    %v2629 = vld [vmem:[#allocation8 + $0x630] sm:$0xff]
    %v2630 = vld [vmem:[#allocation8 + $0x638] sm:$0xff]
    %v2631 = vld [vmem:[#allocation8 + $0x640] sm:$0xff]
    %v2632 = vld [vmem:[#allocation8 + $0x648] sm:$0xff]
    %v2633 = vld [vmem:[#allocation8 + $0x650] sm:$0xff]
    %v2634 = vld [vmem:[#allocation8 + $0x658] sm:$0xff]
    %v2635 = vld [vmem:[#allocation8 + $0x660] sm:$0xff]
    %v2636 = vld [vmem:[#allocation8 + $0x668] sm:$0xff]
    %v2637 = vld [vmem:[#allocation8 + $0x670] sm:$0xff]
    %v2638 = vld [vmem:[#allocation8 + $0x678] sm:$0xff]
    %v2639 = vld [vmem:[#allocation8 + $0x680] sm:$0xff]
    %v2640 = vld [vmem:[#allocation8 + $0x688] sm:$0xff]
    %v2641 = vld [vmem:[#allocation8 + $0x690] sm:$0xff]
    %v2642 = vld [vmem:[#allocation8 + $0x698] sm:$0xff]
    %v2643 = vld [vmem:[#allocation8 + $0x6a0] sm:$0xff]
    %v2644 = vld [vmem:[#allocation8 + $0x6a8] sm:$0xff]
    %v2645 = vld [vmem:[#allocation8 + $0x6b0] sm:$0xff]
    %v2646 = vld [vmem:[#allocation8 + $0x6b8] sm:$0xff]
    %v2647 = vld [vmem:[#allocation8 + $0x6c0] sm:$0xff]
    %v2648 = vld [vmem:[#allocation8 + $0x6c8] sm:$0xff]
    %v2649 = vld [vmem:[#allocation8 + $0x6d0] sm:$0xff]
    %v2650 = vld [vmem:[#allocation8 + $0x6d8] sm:$0xff]
    %v2651 = vld [vmem:[#allocation8 + $0x6e0] sm:$0xff]
    %v2652 = vld [vmem:[#allocation8 + $0x6e8] sm:$0xff]
    %v2653 = vld [vmem:[#allocation8 + $0x6f0] sm:$0xff]
    %v2654 = vld [vmem:[#allocation8 + $0x6f8] sm:$0xff]
    %v2655 = vld [vmem:[#allocation8 + $0x700] sm:$0xff]
    %v2656 = vld [vmem:[#allocation8 + $0x708] sm:$0xff]
    %v2657 = vld [vmem:[#allocation8 + $0x710] sm:$0xff]
    %v2658 = vld [vmem:[#allocation8 + $0x718] sm:$0xff]
    %v2659 = vld [vmem:[#allocation8 + $0x720] sm:$0xff]
    %v2660 = vld [vmem:[#allocation8 + $0x728] sm:$0xff]
    %v2661 = vld [vmem:[#allocation8 + $0x730] sm:$0xff]
    %v2662 = vld [vmem:[#allocation8 + $0x738] sm:$0xff]
    %v2663 = vld [vmem:[#allocation8 + $0x740] sm:$0xff]
    %v2664 = vld [vmem:[#allocation8 + $0x748] sm:$0xff]
    %v2665 = vld [vmem:[#allocation8 + $0x750] sm:$0xff]
    %v2666 = vld [vmem:[#allocation8 + $0x758] sm:$0xff]
    %v2667 = vld [vmem:[#allocation8 + $0x760] sm:$0xff]
    %v2668 = vld [vmem:[#allocation8 + $0x768] sm:$0xff]
    %v2669 = vld [vmem:[#allocation8 + $0x770] sm:$0xff]
    %v2670 = vld [vmem:[#allocation8 + $0x778] sm:$0xff]
    %v2671 = vld [vmem:[#allocation8 + $0x780] sm:$0xff]
    %v2672 = vld [vmem:[#allocation8 + $0x788] sm:$0xff]
    %v2673 = vld [vmem:[#allocation8 + $0x790] sm:$0xff]
    %v2674 = vld [vmem:[#allocation8 + $0x798] sm:$0xff]
    %v2675 = vld [vmem:[#allocation8 + $0x7a0] sm:$0xff]
    %v2676 = vld [vmem:[#allocation8 + $0x7a8] sm:$0xff]
    %v2677 = vld [vmem:[#allocation8 + $0x7b0] sm:$0xff]
    %v2678 = vld [vmem:[#allocation8 + $0x7b8] sm:$0xff]
    %v2679 = vld [vmem:[#allocation8 + $0x7c0] sm:$0xff]
    %v2680 = vld [vmem:[#allocation8 + $0x7c8] sm:$0xff]
    %v2681 = vld [vmem:[#allocation8 + $0x7d0] sm:$0xff]
    %v2682 = vld [vmem:[#allocation8 + $0x7d8] sm:$0xff]
    %v2683 = vld [vmem:[#allocation8 + $0x7e0] sm:$0xff]
    %v2684 = vld [vmem:[#allocation8 + $0x7e8] sm:$0xff]
    %v2685 = vld [vmem:[#allocation8 + $0x7f0] sm:$0xff]
    %v2686 = vld [vmem:[#allocation8 + $0x7f8] sm:$0xff]
    %v2687 = vld [vmem:[#allocation8 + $0x800] sm:$0xff]
    %v2688 = vld [vmem:[#allocation8 + $0x808] sm:$0xff]
    %v2689 = vld [vmem:[#allocation8 + $0x810] sm:$0xff]
    %v2690 = vld [vmem:[#allocation8 + $0x818] sm:$0xff]
    %v2691 = vld [vmem:[#allocation8 + $0x820] sm:$0xff]
    %v2692 = vld [vmem:[#allocation8 + $0x828] sm:$0xff]
    %v2693 = vld [vmem:[#allocation8 + $0x830] sm:$0xff]
    %v2694 = vld [vmem:[#allocation8 + $0x838] sm:$0xff]
    %v2695 = vld [vmem:[#allocation8 + $0x840] sm:$0xff]
    %v2696 = vld [vmem:[#allocation8 + $0x848] sm:$0xff]
    %v2697 = vld [vmem:[#allocation8 + $0x850] sm:$0xff]
    %v2698 = vld [vmem:[#allocation8 + $0x858] sm:$0xff]
    %v2699 = vld [vmem:[#allocation8 + $0x860] sm:$0xff]
    %v2700 = vld [vmem:[#allocation8 + $0x868] sm:$0xff]
    %v2701 = vld [vmem:[#allocation8 + $0x870] sm:$0xff]
    %v2702 = vld [vmem:[#allocation8 + $0x878] sm:$0xff]
    %v2703 = vld [vmem:[#allocation8 + $0x880] sm:$0xff]
    %v2704 = vld [vmem:[#allocation8 + $0x888] sm:$0xff]
    %v2705 = vld [vmem:[#allocation8 + $0x890] sm:$0xff]
    %v2706 = vld [vmem:[#allocation8 + $0x898] sm:$0xff]
    %v2707 = vld [vmem:[#allocation8 + $0x8a0] sm:$0xff]
    %v2708 = vld [vmem:[#allocation8 + $0x8a8] sm:$0xff]
    %v2709 = vld [vmem:[#allocation8 + $0x8b0] sm:$0xff]
    %v2710 = vld [vmem:[#allocation8 + $0x8b8] sm:$0xff]
    %v2711 = vld [vmem:[#allocation8 + $0x8c0] sm:$0xff]
    %v2712 = vld [vmem:[#allocation8 + $0x8c8] sm:$0xff]
    %v2713 = vld [vmem:[#allocation8 + $0x8d0] sm:$0xff]
    %v2714 = vld [vmem:[#allocation8 + $0x8d8] sm:$0xff]
    %v2715 = vld [vmem:[#allocation8 + $0x8e0] sm:$0xff]
    %v2716 = vld [vmem:[#allocation8 + $0x8e8] sm:$0xff]
    %v2717 = vld [vmem:[#allocation8 + $0x8f0] sm:$0xff]
    %v2718 = vld [vmem:[#allocation8 + $0x8f8] sm:$0xff]
    %v2719 = vld [vmem:[#allocation8 + $0x900] sm:$0xff]
    %v2720 = vld [vmem:[#allocation8 + $0x908] sm:$0xff]
    %v2721 = vld [vmem:[#allocation8 + $0x910] sm:$0xff]
    %v2722 = vld [vmem:[#allocation8 + $0x918] sm:$0xff]
    %v2723 = vld [vmem:[#allocation8 + $0x920] sm:$0xff]
    %v2724 = vld [vmem:[#allocation8 + $0x928] sm:$0xff]
    %v2725 = vld [vmem:[#allocation8 + $0x930] sm:$0xff]
    %v2726 = vld [vmem:[#allocation8 + $0x938] sm:$0xff]
    %v2727 = vld [vmem:[#allocation8 + $0x940] sm:$0xff]
    %v2728 = vld [vmem:[#allocation8 + $0x948] sm:$0xff]
    %v2729 = vld [vmem:[#allocation8 + $0x950] sm:$0xff]
    %v2730 = vld [vmem:[#allocation8 + $0x958] sm:$0xff]
    %v2731 = vld [vmem:[#allocation8 + $0x960] sm:$0xff]
    %v2732 = vld [vmem:[#allocation8 + $0x968] sm:$0xff]
    %v2733 = vld [vmem:[#allocation8 + $0x970] sm:$0xff]
    %v2734 = vld [vmem:[#allocation8 + $0x978] sm:$0xff]
    %v2735 = vld [vmem:[#allocation8 + $0x980] sm:$0xff]
    %v2736 = vld [vmem:[#allocation8 + $0x988] sm:$0xff]
    %v2737 = vld [vmem:[#allocation8 + $0x990] sm:$0xff]
    %v2738 = vld [vmem:[#allocation8 + $0x998] sm:$0xff]
    %v2739 = vld [vmem:[#allocation8 + $0x9a0] sm:$0xff]
    %v2740 = vld [vmem:[#allocation8 + $0x9a8] sm:$0xff]
    %v2741 = vld [vmem:[#allocation8 + $0x9b0] sm:$0xff]
    %v2742 = vld [vmem:[#allocation8 + $0x9b8] sm:$0xff]
    %v2743 = vld [vmem:[#allocation8 + $0x9c0] sm:$0xff]
    %v2744 = vld [vmem:[#allocation8 + $0x9c8] sm:$0xff]
    %v2745 = vld [vmem:[#allocation8 + $0x9d0] sm:$0xff]
    %v2746 = vld [vmem:[#allocation8 + $0x9d8] sm:$0xff]
    %v2747 = vld [vmem:[#allocation8 + $0x9e0] sm:$0xff]
    %v2748 = vld [vmem:[#allocation8 + $0x9e8] sm:$0xff]
    %v2749 = vld [vmem:[#allocation8 + $0x9f0] sm:$0xff]
    %v2750 = vld [vmem:[#allocation8 + $0x9f8] sm:$0xff]
    %v2751 = vld [vmem:[#allocation8 + $0xa00] sm:$0xff]
    %v2752 = vld [vmem:[#allocation8 + $0xa08] sm:$0xff]
    %v2753 = vld [vmem:[#allocation8 + $0xa10] sm:$0xff]
    %v2754 = vld [vmem:[#allocation8 + $0xa18] sm:$0xff]
    %v2755 = vld [vmem:[#allocation8 + $0xa20] sm:$0xff]
    %v2756 = vld [vmem:[#allocation8 + $0xa28] sm:$0xff]
    %v2757 = vld [vmem:[#allocation8 + $0xa30] sm:$0xff]
    %v2758 = vld [vmem:[#allocation8 + $0xa38] sm:$0xff]
    %v2759 = vld [vmem:[#allocation8 + $0xa40] sm:$0xff]
    %v2760 = vld [vmem:[#allocation8 + $0xa48] sm:$0xff]
    %v2761 = vld [vmem:[#allocation8 + $0xa50] sm:$0xff]
    %v2762 = vld [vmem:[#allocation8 + $0xa58] sm:$0xff]
    %v2763 = vld [vmem:[#allocation8 + $0xa60] sm:$0xff]
    %v2764 = vld [vmem:[#allocation8 + $0xa68] sm:$0xff]
    %v2765 = vld [vmem:[#allocation8 + $0xa70] sm:$0xff]
    %v2766 = vld [vmem:[#allocation8 + $0xa78] sm:$0xff]
    %v2767 = vld [vmem:[#allocation8 + $0xa80] sm:$0xff]
    %v2768 = vld [vmem:[#allocation8 + $0xa88] sm:$0xff]
    %v2769 = vld [vmem:[#allocation8 + $0xa90] sm:$0xff]
    %v2770 = vld [vmem:[#allocation8 + $0xa98] sm:$0xff]
    %v2771 = vld [vmem:[#allocation8 + $0xaa0] sm:$0xff]
    %v2772 = vld [vmem:[#allocation8 + $0xaa8] sm:$0xff]
    %v2773 = vld [vmem:[#allocation8 + $0xab0] sm:$0xff]
    %v2774 = vld [vmem:[#allocation8 + $0xab8] sm:$0xff]
    %v2775 = vld [vmem:[#allocation8 + $0xac0] sm:$0xff]
    %v2776 = vld [vmem:[#allocation8 + $0xac8] sm:$0xff]
    %v2777 = vld [vmem:[#allocation8 + $0xad0] sm:$0xff]
    %v2778 = vld [vmem:[#allocation8 + $0xad8] sm:$0xff]
    %v2779 = vld [vmem:[#allocation8 + $0xae0] sm:$0xff]
    %v2780 = vld [vmem:[#allocation8 + $0xae8] sm:$0xff]
    %v2781 = vld [vmem:[#allocation8 + $0xaf0] sm:$0xff]
    %v2782 = vld [vmem:[#allocation8 + $0xaf8] sm:$0xff]
    %v2783 = vld [vmem:[#allocation8 + $0xb00] sm:$0xff]
    %v2784 = vld [vmem:[#allocation8 + $0xb08] sm:$0xff]
    %v2785 = vld [vmem:[#allocation8 + $0xb10] sm:$0xff]
    %v2786 = vld [vmem:[#allocation8 + $0xb18] sm:$0xff]
    %v2787 = vld [vmem:[#allocation8 + $0xb20] sm:$0xff]
    %v2788 = vld [vmem:[#allocation8 + $0xb28] sm:$0xff]
    %v2789 = vld [vmem:[#allocation8 + $0xb30] sm:$0xff]
    %v2790 = vld [vmem:[#allocation8 + $0xb38] sm:$0xff]
    %v2791 = vld [vmem:[#allocation8 + $0xb40] sm:$0xff]
    %v2792 = vld [vmem:[#allocation8 + $0xb48] sm:$0xff]
    %v2793 = vld [vmem:[#allocation8 + $0xb50] sm:$0xff]
    %v2794 = vld [vmem:[#allocation8 + $0xb58] sm:$0xff]
    %v2795 = vld [vmem:[#allocation8 + $0xb60] sm:$0xff]
    %v2796 = vld [vmem:[#allocation8 + $0xb68] sm:$0xff]
    %v2797 = vld [vmem:[#allocation8 + $0xb70] sm:$0xff]
    %v2798 = vld [vmem:[#allocation8 + $0xb78] sm:$0xff]
    %v2799 = vld [vmem:[#allocation8 + $0xb80] sm:$0xff]
    %v2800 = vld [vmem:[#allocation8 + $0xb88] sm:$0xff]
    %v2801 = vld [vmem:[#allocation8 + $0xb90] sm:$0xff]
    %v2802 = vld [vmem:[#allocation8 + $0xb98] sm:$0xff]
    %v2803 = vld [vmem:[#allocation8 + $0xba0] sm:$0xff]
    %v2804 = vld [vmem:[#allocation8 + $0xba8] sm:$0xff]
    %v2805 = vld [vmem:[#allocation8 + $0xbb0] sm:$0xff]
    %v2806 = vld [vmem:[#allocation8 + $0xbb8] sm:$0xff]
    %v2807 = vld [vmem:[#allocation8 + $0xbc0] sm:$0xff]
    %v2808 = vld [vmem:[#allocation8 + $0xbc8] sm:$0xff]
    %v2809 = vld [vmem:[#allocation8 + $0xbd0] sm:$0xff]
    %v2810 = vld [vmem:[#allocation8 + $0xbd8] sm:$0xff]
    %v2811 = vld [vmem:[#allocation8 + $0xbe0] sm:$0xff]
    %v2812 = vld [vmem:[#allocation8 + $0xbe8] sm:$0xff]
    %v2813 = vld [vmem:[#allocation8 + $0xbf0] sm:$0xff]
    %v2814 = vld [vmem:[#allocation8 + $0xbf8] sm:$0xff]
    %v2815 = vld [vmem:[#allocation8 + $0xc00] sm:$0xff]
    %v2816 = vld [vmem:[#allocation8 + $0xc08] sm:$0xff]
    %v2817 = vld [vmem:[#allocation8 + $0xc10] sm:$0xff]
    %v2818 = vld [vmem:[#allocation8 + $0xc18] sm:$0xff]
    %v2819 = vld [vmem:[#allocation8 + $0xc20] sm:$0xff]
    %v2820 = vld [vmem:[#allocation8 + $0xc28] sm:$0xff]
    %v2821 = vld [vmem:[#allocation8 + $0xc30] sm:$0xff]
    %v2822 = vld [vmem:[#allocation8 + $0xc38] sm:$0xff]
    %v2823 = vld [vmem:[#allocation8 + $0xc40] sm:$0xff]
    %v2824 = vld [vmem:[#allocation8 + $0xc48] sm:$0xff]
    %v2825 = vld [vmem:[#allocation8 + $0xc50] sm:$0xff]
    %v2826 = vld [vmem:[#allocation8 + $0xc58] sm:$0xff]
    %v2827 = vld [vmem:[#allocation8 + $0xc60] sm:$0xff]
    %v2828 = vld [vmem:[#allocation8 + $0xc68] sm:$0xff]
    %v2829 = vld [vmem:[#allocation8 + $0xc70] sm:$0xff]
    %v2830 = vld [vmem:[#allocation8 + $0xc78] sm:$0xff]
    %v2831 = vld [vmem:[#allocation8 + $0xc80] sm:$0xff]
    %v2832 = vld [vmem:[#allocation8 + $0xc88] sm:$0xff]
    %v2833 = vld [vmem:[#allocation8 + $0xc90] sm:$0xff]
    %v2834 = vld [vmem:[#allocation8 + $0xc98] sm:$0xff]
    %v2835 = vld [vmem:[#allocation8 + $0xca0] sm:$0xff]
    %v2836 = vld [vmem:[#allocation8 + $0xca8] sm:$0xff]
    %v2837 = vld [vmem:[#allocation8 + $0xcb0] sm:$0xff]
    %v2838 = vld [vmem:[#allocation8 + $0xcb8] sm:$0xff]
    %v2839 = vld [vmem:[#allocation8 + $0xcc0] sm:$0xff]
    %v2840 = vld [vmem:[#allocation8 + $0xcc8] sm:$0xff]
    %v2841 = vld [vmem:[#allocation8 + $0xcd0] sm:$0xff]
    %v2842 = vld [vmem:[#allocation8 + $0xcd8] sm:$0xff]
    %v2843 = vld [vmem:[#allocation8 + $0xce0] sm:$0xff]
    %v2844 = vld [vmem:[#allocation8 + $0xce8] sm:$0xff]
    %v2845 = vld [vmem:[#allocation8 + $0xcf0] sm:$0xff]
    %v2846 = vld [vmem:[#allocation8 + $0xcf8] sm:$0xff]
    %v2847 = vld [vmem:[#allocation8 + $0xd00] sm:$0xff]
    %v2848 = vld [vmem:[#allocation8 + $0xd08] sm:$0xff]
    %v2849 = vld [vmem:[#allocation8 + $0xd10] sm:$0xff]
    %v2850 = vld [vmem:[#allocation8 + $0xd18] sm:$0xff]
    %v2851 = vld [vmem:[#allocation8 + $0xd20] sm:$0xff]
    %v2852 = vld [vmem:[#allocation8 + $0xd28] sm:$0xff]
    %v2853 = vld [vmem:[#allocation8 + $0xd30] sm:$0xff]
    %v2854 = vld [vmem:[#allocation8 + $0xd38] sm:$0xff]
    %v2855 = vld [vmem:[#allocation8 + $0xd40] sm:$0xff]
    %v2856 = vld [vmem:[#allocation8 + $0xd48] sm:$0xff]
    %v2857 = vld [vmem:[#allocation8 + $0xd50] sm:$0xff]
    %v2858 = vld [vmem:[#allocation8 + $0xd58] sm:$0xff]
    %v2859 = vld [vmem:[#allocation8 + $0xd60] sm:$0xff]
    %v2860 = vld [vmem:[#allocation8 + $0xd68] sm:$0xff]
    %v2861 = vld [vmem:[#allocation8 + $0xd70] sm:$0xff]
    %v2862 = vld [vmem:[#allocation8 + $0xd78] sm:$0xff]
    %v2863 = vld [vmem:[#allocation8 + $0xd80] sm:$0xff]
    %v2864 = vld [vmem:[#allocation8 + $0xd88] sm:$0xff]
    %v2865 = vld [vmem:[#allocation8 + $0xd90] sm:$0xff]
    %v2866 = vld [vmem:[#allocation8 + $0xd98] sm:$0xff]
    %v2867 = vld [vmem:[#allocation8 + $0xda0] sm:$0xff]
    %v2868 = vld [vmem:[#allocation8 + $0xda8] sm:$0xff]
    %v2869 = vld [vmem:[#allocation8 + $0xdb0] sm:$0xff]
    %v2870 = vld [vmem:[#allocation8 + $0xdb8] sm:$0xff]
    %v2871 = vld [vmem:[#allocation8 + $0xdc0] sm:$0xff]
    %v2872 = vld [vmem:[#allocation8 + $0xdc8] sm:$0xff]
    %v2873 = vld [vmem:[#allocation8 + $0xdd0] sm:$0xff]
    %v2874 = vld [vmem:[#allocation8 + $0xdd8] sm:$0xff]
    %v2875 = vld [vmem:[#allocation8 + $0xde0] sm:$0xff]
    %v2876 = vld [vmem:[#allocation8 + $0xde8] sm:$0xff]
    %v2877 = vld [vmem:[#allocation8 + $0xdf0] sm:$0xff]
    %v2878 = vld [vmem:[#allocation8 + $0xdf8] sm:$0xff]
    %v2879 = vld [vmem:[#allocation8 + $0xe00] sm:$0xff]
    %v2880 = vld [vmem:[#allocation8 + $0xe08] sm:$0xff]
    %v2881 = vld [vmem:[#allocation8 + $0xe10] sm:$0xff]
    %v2882 = vld [vmem:[#allocation8 + $0xe18] sm:$0xff]
    %v2883 = vld [vmem:[#allocation8 + $0xe20] sm:$0xff]
    %v2884 = vld [vmem:[#allocation8 + $0xe28] sm:$0xff]
    %v2885 = vld [vmem:[#allocation8 + $0xe30] sm:$0xff]
    %v2886 = vld [vmem:[#allocation8 + $0xe38] sm:$0xff]
    %v2887 = vld [vmem:[#allocation8 + $0xe40] sm:$0xff]
    %v2888 = vld [vmem:[#allocation8 + $0xe48] sm:$0xff]
    %v2889 = vld [vmem:[#allocation8 + $0xe50] sm:$0xff]
    %v2890 = vld [vmem:[#allocation8 + $0xe58] sm:$0xff]
    %v2891 = vld [vmem:[#allocation8 + $0xe60] sm:$0xff]
    %v2892 = vld [vmem:[#allocation8 + $0xe68] sm:$0xff]
    %v2893 = vld [vmem:[#allocation8 + $0xe70] sm:$0xff]
    %v2894 = vld [vmem:[#allocation8 + $0xe78] sm:$0xff]
    %v2895 = vld [vmem:[#allocation8 + $0xe80] sm:$0xff]
    %v2896 = vld [vmem:[#allocation8 + $0xe88] sm:$0xff]
    %v2897 = vld [vmem:[#allocation8 + $0xe90] sm:$0xff]
    %v2898 = vld [vmem:[#allocation8 + $0xe98] sm:$0xff]
    %v2899 = vld [vmem:[#allocation8 + $0xea0] sm:$0xff]
    %v2900 = vld [vmem:[#allocation8 + $0xea8] sm:$0xff]
    %v2901 = vld [vmem:[#allocation8 + $0xeb0] sm:$0xff]
    %v2902 = vld [vmem:[#allocation8 + $0xeb8] sm:$0xff]
    %v2903 = vld [vmem:[#allocation8 + $0xec0] sm:$0xff]
    %v2904 = vld [vmem:[#allocation8 + $0xec8] sm:$0xff]
    %v2905 = vld [vmem:[#allocation8 + $0xed0] sm:$0xff]
    %v2906 = vld [vmem:[#allocation8 + $0xed8] sm:$0xff]
    %v2907 = vld [vmem:[#allocation8 + $0xee0] sm:$0xff]
    %v2908 = vld [vmem:[#allocation8 + $0xee8] sm:$0xff]
    %v2909 = vld [vmem:[#allocation8 + $0xef0] sm:$0xff]
    %v2910 = vld [vmem:[#allocation8 + $0xef8] sm:$0xff]
    %v2911 = vld [vmem:[#allocation8 + $0xf00] sm:$0xff]
    %v2912 = vld [vmem:[#allocation8 + $0xf08] sm:$0xff]
    %v2913 = vld [vmem:[#allocation8 + $0xf10] sm:$0xff]
    %v2914 = vld [vmem:[#allocation8 + $0xf18] sm:$0xff]
    %v2915 = vld [vmem:[#allocation8 + $0xf20] sm:$0xff]
    %v2916 = vld [vmem:[#allocation8 + $0xf28] sm:$0xff]
    %v2917 = vld [vmem:[#allocation8 + $0xf30] sm:$0xff]
    %v2918 = vld [vmem:[#allocation8 + $0xf38] sm:$0xff]
    %v2919 = vld [vmem:[#allocation8 + $0xf40] sm:$0xff]
    %v2920 = vld [vmem:[#allocation8 + $0xf48] sm:$0xff]
    %v2921 = vld [vmem:[#allocation8 + $0xf50] sm:$0xff]
    %v2922 = vld [vmem:[#allocation8 + $0xf58] sm:$0xff]
    %v2923 = vld [vmem:[#allocation8 + $0xf60] sm:$0xff]
    %v2924 = vld [vmem:[#allocation8 + $0xf68] sm:$0xff]
    %v2925 = vld [vmem:[#allocation8 + $0xf70] sm:$0xff]
    %v2926 = vld [vmem:[#allocation8 + $0xf78] sm:$0xff]
    %v2927 = vld [vmem:[#allocation8 + $0xf80] sm:$0xff]
    %v2928 = vld [vmem:[#allocation8 + $0xf88] sm:$0xff]
    %v2929 = vld [vmem:[#allocation8 + $0xf90] sm:$0xff]
    %v2930 = vld [vmem:[#allocation8 + $0xf98] sm:$0xff]
    %v2931 = vld [vmem:[#allocation8 + $0xfa0] sm:$0xff]
    %v2932 = vld [vmem:[#allocation8 + $0xfa8] sm:$0xff]
    %v2933 = vld [vmem:[#allocation8 + $0xfb0] sm:$0xff]
    %v2934 = vld [vmem:[#allocation8 + $0xfb8] sm:$0xff]
    %v2935 = vld [vmem:[#allocation8 + $0xfc0] sm:$0xff]
    %v2936 = vld [vmem:[#allocation8 + $0xfc8] sm:$0xff]
    %v2937 = vld [vmem:[#allocation8 + $0xfd0] sm:$0xff]
    %v2938 = vld [vmem:[#allocation8 + $0xfd8] sm:$0xff]
    %v2939 = vld [vmem:[#allocation8 + $0xfe0] sm:$0xff]
    %v2940 = vld [vmem:[#allocation8 + $0xfe8] sm:$0xff]
    %v2941 = vld [vmem:[#allocation8 + $0xff0] sm:$0xff]
    %v2942 = vld [vmem:[#allocation8 + $0xff8] sm:$0xff]
    %v2943 = vld [vmem:[#allocation8 + $0x1000] sm:$0xff]
    %v2944 = vld [vmem:[#allocation8 + $0x1008] sm:$0xff]
    %v2945 = vld [vmem:[#allocation8 + $0x1010] sm:$0xff]
    %v2946 = vld [vmem:[#allocation8 + $0x1018] sm:$0xff]
    %v2947 = vld [vmem:[#allocation8 + $0x1020] sm:$0xff]
    %v2948 = vld [vmem:[#allocation8 + $0x1028] sm:$0xff]
    %v2949 = vld [vmem:[#allocation8 + $0x1030] sm:$0xff]
    %v2950 = vld [vmem:[#allocation8 + $0x1038] sm:$0xff]
    %v2951 = vld [vmem:[#allocation8 + $0x1040] sm:$0xff]
    %v2952 = vld [vmem:[#allocation8 + $0x1048] sm:$0xff]
    %v2953 = vld [vmem:[#allocation8 + $0x1050] sm:$0xff]
    %v2954 = vld [vmem:[#allocation8 + $0x1058] sm:$0xff]
    %v2955 = vld [vmem:[#allocation8 + $0x1060] sm:$0xff]
    %v2956 = vld [vmem:[#allocation8 + $0x1068] sm:$0xff]
    %v2957 = vld [vmem:[#allocation8 + $0x1070] sm:$0xff]
    %v2958 = vld [vmem:[#allocation8 + $0x1078] sm:$0xff]
    %v2959 = vld [vmem:[#allocation8 + $0x1080] sm:$0xff]
    %v2960 = vld [vmem:[#allocation8 + $0x1088] sm:$0xff]
    %v2961 = vld [vmem:[#allocation8 + $0x1090] sm:$0xff]
    %v2962 = vld [vmem:[#allocation8 + $0x1098] sm:$0xff]
    %v2963 = vld [vmem:[#allocation8 + $0x10a0] sm:$0xff]
    %v2964 = vld [vmem:[#allocation8 + $0x10a8] sm:$0xff]
    %v2965 = vld [vmem:[#allocation8 + $0x10b0] sm:$0xff]
    %v2966 = vld [vmem:[#allocation8 + $0x10b8] sm:$0xff]
    %v2967 = vld [vmem:[#allocation8 + $0x10c0] sm:$0xff]
    %v2968 = vld [vmem:[#allocation8 + $0x10c8] sm:$0xff]
    %v2969 = vld [vmem:[#allocation8 + $0x10d0] sm:$0xff]
    %v2970 = vld [vmem:[#allocation8 + $0x10d8] sm:$0xff]
    %v2971 = vld [vmem:[#allocation8 + $0x10e0] sm:$0xff]
    %v2972 = vld [vmem:[#allocation8 + $0x10e8] sm:$0xff]
    %v2973 = vld [vmem:[#allocation8 + $0x10f0] sm:$0xff]
    %v2974 = vld [vmem:[#allocation8 + $0x10f8] sm:$0xff]
    %v2975 = vld [vmem:[#allocation8 + $0x1100] sm:$0xff]
    %v2976 = vld [vmem:[#allocation8 + $0x1108] sm:$0xff]
    %v2977 = vld [vmem:[#allocation8 + $0x1110] sm:$0xff]
    %v2978 = vld [vmem:[#allocation8 + $0x1118] sm:$0xff]
    %v2979 = vld [vmem:[#allocation8 + $0x1120] sm:$0xff]
    %v2980 = vld [vmem:[#allocation8 + $0x1128] sm:$0xff]
    %v2981 = vld [vmem:[#allocation8 + $0x1130] sm:$0xff]
    %v2982 = vld [vmem:[#allocation8 + $0x1138] sm:$0xff]
    %v2983 = vld [vmem:[#allocation8 + $0x1140] sm:$0xff]
    %v2984 = vld [vmem:[#allocation8 + $0x1148] sm:$0xff]
    %v2985 = vld [vmem:[#allocation8 + $0x1150] sm:$0xff]
    %v2986 = vld [vmem:[#allocation8 + $0x1158] sm:$0xff]
    %v2987 = vld [vmem:[#allocation8 + $0x1160] sm:$0xff]
    %v2988 = vld [vmem:[#allocation8 + $0x1168] sm:$0xff]
    %v2989 = vld [vmem:[#allocation8 + $0x1170] sm:$0xff]
    %v2990 = vld [vmem:[#allocation8 + $0x1178] sm:$0xff]
    %v2991 = vld [vmem:[#allocation8 + $0x1180] sm:$0xff]
    %v2992 = vld [vmem:[#allocation8 + $0x1188] sm:$0xff]
    %v2993 = vld [vmem:[#allocation8 + $0x1190] sm:$0xff]
    %v2994 = vld [vmem:[#allocation8 + $0x1198] sm:$0xff]
    %v2995 = vld [vmem:[#allocation8 + $0x11a0] sm:$0xff]
    %v2996 = vld [vmem:[#allocation8 + $0x11a8] sm:$0xff]
    %v2997 = vld [vmem:[#allocation8 + $0x11b0] sm:$0xff]
    %v2998 = vld [vmem:[#allocation8 + $0x11b8] sm:$0xff]
    %v2999 = vld [vmem:[#allocation8 + $0x11c0] sm:$0xff]
    %v3000 = vld [vmem:[#allocation8 + $0x11c8] sm:$0xff]
    %v3001 = vld [vmem:[#allocation8 + $0x11d0] sm:$0xff]
    %v3002 = vld [vmem:[#allocation8 + $0x11d8] sm:$0xff]
    %v3003 = vld [vmem:[#allocation8 + $0x11e0] sm:$0xff]
    %v3004 = vld [vmem:[#allocation8 + $0x11e8] sm:$0xff]
    %v3005 = vld [vmem:[#allocation8 + $0x11f0] sm:$0xff]
    %v3006 = vld [vmem:[#allocation8 + $0x11f8] sm:$0xff]
    %v3007 = vld [vmem:[#allocation8 + $0x1200] sm:$0xff]
    %v3008 = vld [vmem:[#allocation8 + $0x1208] sm:$0xff]
    %v3009 = vld [vmem:[#allocation8 + $0x1210] sm:$0xff]
    %v3010 = vld [vmem:[#allocation8 + $0x1218] sm:$0xff]
    %v3011 = vld [vmem:[#allocation8 + $0x1220] sm:$0xff]
    %v3012 = vld [vmem:[#allocation8 + $0x1228] sm:$0xff]
    %v3013 = vld [vmem:[#allocation8 + $0x1230] sm:$0xff]
    %v3014 = vld [vmem:[#allocation8 + $0x1238] sm:$0xff]
    %v3015 = vld [vmem:[#allocation8 + $0x1240] sm:$0xff]
    %v3016 = vld [vmem:[#allocation8 + $0x1248] sm:$0xff]
    %v3017 = vld [vmem:[#allocation8 + $0x1250] sm:$0xff]
    %v3018 = vld [vmem:[#allocation8 + $0x1258] sm:$0xff]
    %v3019 = vld [vmem:[#allocation8 + $0x1260] sm:$0xff]
    %v3020 = vld [vmem:[#allocation8 + $0x1268] sm:$0xff]
    %v3021 = vld [vmem:[#allocation8 + $0x1270] sm:$0xff]
    %v3022 = vld [vmem:[#allocation8 + $0x1278] sm:$0xff]
    %v3023 = vld [vmem:[#allocation8 + $0x1280] sm:$0xff]
    %v3024 = vld [vmem:[#allocation8 + $0x1288] sm:$0xff]
    %v3025 = vld [vmem:[#allocation8 + $0x1290] sm:$0xff]
    %v3026 = vld [vmem:[#allocation8 + $0x1298] sm:$0xff]
    %v3027 = vld [vmem:[#allocation8 + $0x12a0] sm:$0xff]
    %v3028 = vld [vmem:[#allocation8 + $0x12a8] sm:$0xff]
    %v3029 = vld [vmem:[#allocation8 + $0x12b0] sm:$0xff]
    %v3030 = vld [vmem:[#allocation8 + $0x12b8] sm:$0xff]
    %v3031 = vld [vmem:[#allocation8 + $0x12c0] sm:$0xff]
    %v3032 = vld [vmem:[#allocation8 + $0x12c8] sm:$0xff]
    %v3033 = vld [vmem:[#allocation8 + $0x12d0] sm:$0xff]
    %v3034 = vld [vmem:[#allocation8 + $0x12d8] sm:$0xff]
    %v3035 = vld [vmem:[#allocation8 + $0x12e0] sm:$0xff]
    %v3036 = vld [vmem:[#allocation8 + $0x12e8] sm:$0xff]
    %v3037 = vld [vmem:[#allocation8 + $0x12f0] sm:$0xff]
    %v3038 = vld [vmem:[#allocation8 + $0x12f8] sm:$0xff]
    %v3039 = vld [vmem:[#allocation8 + $0x1300] sm:$0xff]
    %v3040 = vld [vmem:[#allocation8 + $0x1308] sm:$0xff]
    %v3041 = vld [vmem:[#allocation8 + $0x1310] sm:$0xff]
    %v3042 = vld [vmem:[#allocation8 + $0x1318] sm:$0xff]
    %v3043 = vld [vmem:[#allocation8 + $0x1320] sm:$0xff]
    %v3044 = vld [vmem:[#allocation8 + $0x1328] sm:$0xff]
    %v3045 = vld [vmem:[#allocation8 + $0x1330] sm:$0xff]
    %v3046 = vld [vmem:[#allocation8 + $0x1338] sm:$0xff]
    %v3047 = vld [vmem:[#allocation8 + $0x1340] sm:$0xff]
    %v3048 = vld [vmem:[#allocation8 + $0x1348] sm:$0xff]
    %v3049 = vld [vmem:[#allocation8 + $0x1350] sm:$0xff]
    %v3050 = vld [vmem:[#allocation8 + $0x1358] sm:$0xff]
    %v3051 = vld [vmem:[#allocation8 + $0x1360] sm:$0xff]
    %v3052 = vld [vmem:[#allocation8 + $0x1368] sm:$0xff]
    %v3053 = vld [vmem:[#allocation8 + $0x1370] sm:$0xff]
    %v3054 = vld [vmem:[#allocation8 + $0x1378] sm:$0xff]
    %v3055 = vld [vmem:[#allocation8 + $0x1380] sm:$0xff]
    %v3056 = vld [vmem:[#allocation8 + $0x1388] sm:$0xff]
    %v3057 = vld [vmem:[#allocation8 + $0x1390] sm:$0xff]
    %v3058 = vld [vmem:[#allocation8 + $0x1398] sm:$0xff]
    %v3059 = vld [vmem:[#allocation8 + $0x13a0] sm:$0xff]
    %v3060 = vld [vmem:[#allocation8 + $0x13a8] sm:$0xff]
    %v3061 = vld [vmem:[#allocation8 + $0x13b0] sm:$0xff]
    %v3062 = vld [vmem:[#allocation8 + $0x13b8] sm:$0xff]
    %v3063 = vld [vmem:[#allocation8 + $0x13c0] sm:$0xff]
    %v3064 = vld [vmem:[#allocation8 + $0x13c8] sm:$0xff]
    %v3065 = vld [vmem:[#allocation8 + $0x13d0] sm:$0xff]
    %v3066 = vld [vmem:[#allocation8 + $0x13d8] sm:$0xff]
    %v3067 = vld [vmem:[#allocation8 + $0x13e0] sm:$0xff]
    %v3068 = vld [vmem:[#allocation8 + $0x13e8] sm:$0xff]
    %v3069 = vld [vmem:[#allocation8 + $0x13f0] sm:$0xff]
    %v3070 = vld [vmem:[#allocation8 + $0x13f8] sm:$0xff]
    %v3071 = vld [vmem:[#allocation8 + $0x1400] sm:$0xff]
    %v3072 = vld [vmem:[#allocation8 + $0x1408] sm:$0xff]
    %v3073 = vld [vmem:[#allocation8 + $0x1410] sm:$0xff]
    %v3074 = vld [vmem:[#allocation8 + $0x1418] sm:$0xff]
    %v3075 = vld [vmem:[#allocation8 + $0x1420] sm:$0xff]
    %v3076 = vld [vmem:[#allocation8 + $0x1428] sm:$0xff]
    %v3077 = vld [vmem:[#allocation8 + $0x1430] sm:$0xff]
    %v3078 = vld [vmem:[#allocation8 + $0x1438] sm:$0xff]
    %v3079 = vld [vmem:[#allocation8 + $0x1440] sm:$0xff]
    %v3080 = vld [vmem:[#allocation8 + $0x1448] sm:$0xff]
    %v3081 = vld [vmem:[#allocation8 + $0x1450] sm:$0xff]
    %v3082 = vld [vmem:[#allocation8 + $0x1458] sm:$0xff]
    %v3083 = vld [vmem:[#allocation8 + $0x1460] sm:$0xff]
    %v3084 = vld [vmem:[#allocation8 + $0x1468] sm:$0xff]
    %v3085 = vld [vmem:[#allocation8 + $0x1470] sm:$0xff]
    %v3086 = vld [vmem:[#allocation8 + $0x1478] sm:$0xff]
    %v3087 = vld [vmem:[#allocation8 + $0x1480] sm:$0xff]
    %v3088 = vld [vmem:[#allocation8 + $0x1488] sm:$0xff]
    %v3089 = vld [vmem:[#allocation8 + $0x1490] sm:$0xff]
    %v3090 = vld [vmem:[#allocation8 + $0x1498] sm:$0xff]
    %v3091 = vld [vmem:[#allocation8 + $0x14a0] sm:$0xff]
    %v3092 = vld [vmem:[#allocation8 + $0x14a8] sm:$0xff]
    %v3093 = vld [vmem:[#allocation8 + $0x14b0] sm:$0xff]
    %v3094 = vld [vmem:[#allocation8 + $0x14b8] sm:$0xff]
    %v3095 = vld [vmem:[#allocation8 + $0x14c0] sm:$0xff]
    %v3096 = vld [vmem:[#allocation8 + $0x14c8] sm:$0xff]
    %v3097 = vld [vmem:[#allocation8 + $0x14d0] sm:$0xff]
    %v3098 = vld [vmem:[#allocation8 + $0x14d8] sm:$0xff]
    %v3099 = vld [vmem:[#allocation8 + $0x14e0] sm:$0xff]
    %v3100 = vld [vmem:[#allocation8 + $0x14e8] sm:$0xff]
    %v3101 = vld [vmem:[#allocation8 + $0x14f0] sm:$0xff]
    %v3102 = vld [vmem:[#allocation8 + $0x14f8] sm:$0xff]
    %v3103 = vld [vmem:[#allocation8 + $0x1500] sm:$0xff]
    %v3104 = vld [vmem:[#allocation8 + $0x1508] sm:$0xff]
    %v3105 = vld [vmem:[#allocation8 + $0x1510] sm:$0xff]
    %v3106 = vld [vmem:[#allocation8 + $0x1518] sm:$0xff]
    %v3107 = vld [vmem:[#allocation8 + $0x1520] sm:$0xff]
    %v3108 = vld [vmem:[#allocation8 + $0x1528] sm:$0xff]
    %v3109 = vld [vmem:[#allocation8 + $0x1530] sm:$0xff]
    %v3110 = vld [vmem:[#allocation8 + $0x1538] sm:$0xff]
    %v3111 = vld [vmem:[#allocation8 + $0x1540] sm:$0xff]
    %v3112 = vld [vmem:[#allocation8 + $0x1548] sm:$0xff]
    %v3113 = vld [vmem:[#allocation8 + $0x1550] sm:$0xff]
    %v3114 = vld [vmem:[#allocation8 + $0x1558] sm:$0xff]
    %v3115 = vld [vmem:[#allocation8 + $0x1560] sm:$0xff]
    %v3116 = vld [vmem:[#allocation8 + $0x1568] sm:$0xff]
    %v3117 = vld [vmem:[#allocation8 + $0x1570] sm:$0xff]
    %v3118 = vld [vmem:[#allocation8 + $0x1578] sm:$0xff]
    %v3119 = vld [vmem:[#allocation8 + $0x1580] sm:$0xff]
    %v3120 = vld [vmem:[#allocation8 + $0x1588] sm:$0xff]
    %v3121 = vld [vmem:[#allocation8 + $0x1590] sm:$0xff]
    %v3122 = vld [vmem:[#allocation8 + $0x1598] sm:$0xff]
    %v3123 = vld [vmem:[#allocation8 + $0x15a0] sm:$0xff]
    %v3124 = vld [vmem:[#allocation8 + $0x15a8] sm:$0xff]
    %v3125 = vld [vmem:[#allocation8 + $0x15b0] sm:$0xff]
    %v3126 = vld [vmem:[#allocation8 + $0x15b8] sm:$0xff]
    %v3127 = vld [vmem:[#allocation8 + $0x15c0] sm:$0xff]
    %v3128 = vld [vmem:[#allocation8 + $0x15c8] sm:$0xff]
    %v3129 = vld [vmem:[#allocation8 + $0x15d0] sm:$0xff]
    %v3130 = vld [vmem:[#allocation8 + $0x15d8] sm:$0xff]
    %v3131 = vld [vmem:[#allocation8 + $0x15e0] sm:$0xff]
    %v3132 = vld [vmem:[#allocation8 + $0x15e8] sm:$0xff]
    %v3133 = vld [vmem:[#allocation8 + $0x15f0] sm:$0xff]
    %v3134 = vld [vmem:[#allocation8 + $0x15f8] sm:$0xff]
    %v3135 = vld [vmem:[#allocation8 + $0x1600] sm:$0xff]
    %v3136 = vld [vmem:[#allocation8 + $0x1608] sm:$0xff]
    %v3137 = vld [vmem:[#allocation8 + $0x1610] sm:$0xff]
    %v3138 = vld [vmem:[#allocation8 + $0x1618] sm:$0xff]
    %v3139 = vld [vmem:[#allocation8 + $0x1620] sm:$0xff]
    %v3140 = vld [vmem:[#allocation8 + $0x1628] sm:$0xff]
    %v3141 = vld [vmem:[#allocation8 + $0x1630] sm:$0xff]
    %v3142 = vld [vmem:[#allocation8 + $0x1638] sm:$0xff]
    %v3143 = vld [vmem:[#allocation8 + $0x1640] sm:$0xff]
    %v3144 = vld [vmem:[#allocation8 + $0x1648] sm:$0xff]
    %v3145 = vld [vmem:[#allocation8 + $0x1650] sm:$0xff]
    %v3146 = vld [vmem:[#allocation8 + $0x1658] sm:$0xff]
    %v3147 = vld [vmem:[#allocation8 + $0x1660] sm:$0xff]
    %v3148 = vld [vmem:[#allocation8 + $0x1668] sm:$0xff]
    %v3149 = vld [vmem:[#allocation8 + $0x1670] sm:$0xff]
    %v3150 = vld [vmem:[#allocation8 + $0x1678] sm:$0xff]
    %v3151 = vld [vmem:[#allocation8 + $0x1680] sm:$0xff]
    %v3152 = vld [vmem:[#allocation8 + $0x1688] sm:$0xff]
    %v3153 = vld [vmem:[#allocation8 + $0x1690] sm:$0xff]
    %v3154 = vld [vmem:[#allocation8 + $0x1698] sm:$0xff]
    %v3155 = vld [vmem:[#allocation8 + $0x16a0] sm:$0xff]
    %v3156 = vld [vmem:[#allocation8 + $0x16a8] sm:$0xff]
    %v3157 = vld [vmem:[#allocation8 + $0x16b0] sm:$0xff]
    %v3158 = vld [vmem:[#allocation8 + $0x16b8] sm:$0xff]
    %v3159 = vld [vmem:[#allocation8 + $0x16c0] sm:$0xff]
    %v3160 = vld [vmem:[#allocation8 + $0x16c8] sm:$0xff]
    %v3161 = vld [vmem:[#allocation8 + $0x16d0] sm:$0xff]
    %v3162 = vld [vmem:[#allocation8 + $0x16d8] sm:$0xff]
    %v3163 = vld [vmem:[#allocation8 + $0x16e0] sm:$0xff]
    %v3164 = vld [vmem:[#allocation8 + $0x16e8] sm:$0xff]
    %v3165 = vld [vmem:[#allocation8 + $0x16f0] sm:$0xff]
    %v3166 = vld [vmem:[#allocation8 + $0x16f8] sm:$0xff]
    %v3167 = vld [vmem:[#allocation8 + $0x1700] sm:$0xff]
    %v3168 = vld [vmem:[#allocation8 + $0x1708] sm:$0xff]
    %v3169 = vld [vmem:[#allocation8 + $0x1710] sm:$0xff]
    %v3170 = vld [vmem:[#allocation8 + $0x1718] sm:$0xff]
    %v3171 = vld [vmem:[#allocation8 + $0x1720] sm:$0xff]
    %v3172 = vld [vmem:[#allocation8 + $0x1728] sm:$0xff]
    %v3173 = vld [vmem:[#allocation8 + $0x1730] sm:$0xff]
    %v3174 = vld [vmem:[#allocation8 + $0x1738] sm:$0xff]
    %v3175 = vld [vmem:[#allocation8 + $0x1740] sm:$0xff]
    %v3176 = vld [vmem:[#allocation8 + $0x1748] sm:$0xff]
    %v3177 = vld [vmem:[#allocation8 + $0x1750] sm:$0xff]
    %v3178 = vld [vmem:[#allocation8 + $0x1758] sm:$0xff]
    %v3179 = vld [vmem:[#allocation8 + $0x1760] sm:$0xff]
    %v3180 = vld [vmem:[#allocation8 + $0x1768] sm:$0xff]
    %v3181 = vld [vmem:[#allocation8 + $0x1770] sm:$0xff]
    %v3182 = vld [vmem:[#allocation8 + $0x1778] sm:$0xff]
    %v3183 = vld [vmem:[#allocation8 + $0x1780] sm:$0xff]
    %v3184 = vld [vmem:[#allocation8 + $0x1788] sm:$0xff]
    %v3185 = vld [vmem:[#allocation8 + $0x1790] sm:$0xff]
    %v3186 = vld [vmem:[#allocation8 + $0x1798] sm:$0xff]
    %v3187 = vld [vmem:[#allocation8 + $0x17a0] sm:$0xff]
    %v3188 = vld [vmem:[#allocation8 + $0x17a8] sm:$0xff]
    %v3189 = vld [vmem:[#allocation8 + $0x17b0] sm:$0xff]
    %v3190 = vld [vmem:[#allocation8 + $0x17b8] sm:$0xff]
    %v3191 = vld [vmem:[#allocation8 + $0x17c0] sm:$0xff]
    %v3192 = vld [vmem:[#allocation8 + $0x17c8] sm:$0xff]
    %v3193 = vld [vmem:[#allocation8 + $0x17d0] sm:$0xff]
    %v3194 = vld [vmem:[#allocation8 + $0x17d8] sm:$0xff]
    %v3195 = vld [vmem:[#allocation8 + $0x17e0] sm:$0xff]
    %v3196 = vld [vmem:[#allocation8 + $0x17e8] sm:$0xff]
    %v3197 = vld [vmem:[#allocation8 + $0x17f0] sm:$0xff]
    %v3198 = vld [vmem:[#allocation8 + $0x17f8] sm:$0xff]
    %v3199 = vld [vmem:[#allocation8 + $0x1800] sm:$0xff]
    %v3200 = vld [vmem:[#allocation8 + $0x1808] sm:$0xff]
    %v3201 = vld [vmem:[#allocation8 + $0x1810] sm:$0xff]
    %v3202 = vld [vmem:[#allocation8 + $0x1818] sm:$0xff]
    %v3203 = vld [vmem:[#allocation8 + $0x1820] sm:$0xff]
    %v3204 = vld [vmem:[#allocation8 + $0x1828] sm:$0xff]
    %v3205 = vld [vmem:[#allocation8 + $0x1830] sm:$0xff]
    %v3206 = vld [vmem:[#allocation8 + $0x1838] sm:$0xff]
    %v3207 = vld [vmem:[#allocation8 + $0x1840] sm:$0xff]
    %v3208 = vld [vmem:[#allocation8 + $0x1848] sm:$0xff]
    %v3209 = vld [vmem:[#allocation8 + $0x1850] sm:$0xff]
    %v3210 = vld [vmem:[#allocation8 + $0x1858] sm:$0xff]
    %v3211 = vld [vmem:[#allocation8 + $0x1860] sm:$0xff]
    %v3212 = vld [vmem:[#allocation8 + $0x1868] sm:$0xff]
    %v3213 = vld [vmem:[#allocation8 + $0x1870] sm:$0xff]
    %v3214 = vld [vmem:[#allocation8 + $0x1878] sm:$0xff]
    %v3215 = vld [vmem:[#allocation8 + $0x1880] sm:$0xff]
    %v3216 = vld [vmem:[#allocation8 + $0x1888] sm:$0xff]
    %v3217 = vld [vmem:[#allocation8 + $0x1890] sm:$0xff]
    %v3218 = vld [vmem:[#allocation8 + $0x1898] sm:$0xff]
    %v3219 = vld [vmem:[#allocation8 + $0x18a0] sm:$0xff]
    %v3220 = vld [vmem:[#allocation8 + $0x18a8] sm:$0xff]
    %v3221 = vld [vmem:[#allocation8 + $0x18b0] sm:$0xff]
    %v3222 = vld [vmem:[#allocation8 + $0x18b8] sm:$0xff]
    %v3223 = vld [vmem:[#allocation8 + $0x18c0] sm:$0xff]
    %v3224 = vld [vmem:[#allocation8 + $0x18c8] sm:$0xff]
    %v3225 = vld [vmem:[#allocation8 + $0x18d0] sm:$0xff]
    %v3226 = vld [vmem:[#allocation8 + $0x18d8] sm:$0xff]
    %v3227 = vld [vmem:[#allocation8 + $0x18e0] sm:$0xff]
    %v3228 = vld [vmem:[#allocation8 + $0x18e8] sm:$0xff]
    %v3229 = vld [vmem:[#allocation8 + $0x18f0] sm:$0xff]
    %v3230 = vld [vmem:[#allocation8 + $0x18f8] sm:$0xff]
    %v3231 = vld [vmem:[#allocation8 + $0x1900] sm:$0xff]
    %v3232 = vld [vmem:[#allocation8 + $0x1908] sm:$0xff]
    %v3233 = vld [vmem:[#allocation8 + $0x1910] sm:$0xff]
    %v3234 = vld [vmem:[#allocation8 + $0x1918] sm:$0xff]
    %v3235 = vld [vmem:[#allocation8 + $0x1920] sm:$0xff]
    %v3236 = vld [vmem:[#allocation8 + $0x1928] sm:$0xff]
    %v3237 = vld [vmem:[#allocation8 + $0x1930] sm:$0xff]
    %v3238 = vld [vmem:[#allocation8 + $0x1938] sm:$0xff]
    %v3239 = vld [vmem:[#allocation8 + $0x1940] sm:$0xff]
    %v3240 = vld [vmem:[#allocation8 + $0x1948] sm:$0xff]
    %v3241 = vld [vmem:[#allocation8 + $0x1950] sm:$0xff]
    %v3242 = vld [vmem:[#allocation8 + $0x1958] sm:$0xff]
    %v3243 = vld [vmem:[#allocation8 + $0x1960] sm:$0xff]
    %v3244 = vld [vmem:[#allocation8 + $0x1968] sm:$0xff]
    %v3245 = vld [vmem:[#allocation8 + $0x1970] sm:$0xff]
    %v3246 = vld [vmem:[#allocation8 + $0x1978] sm:$0xff]
    %v3247 = vld [vmem:[#allocation8 + $0x1980] sm:$0xff]
    %v3248 = vld [vmem:[#allocation8 + $0x1988] sm:$0xff]
    %v3249 = vld [vmem:[#allocation8 + $0x1990] sm:$0xff]
    %v3250 = vld [vmem:[#allocation8 + $0x1998] sm:$0xff]
    %v3251 = vld [vmem:[#allocation8 + $0x19a0] sm:$0xff]
    %v3252 = vld [vmem:[#allocation8 + $0x19a8] sm:$0xff]
    %v3253 = vld [vmem:[#allocation8 + $0x19b0] sm:$0xff]
    %v3254 = vld [vmem:[#allocation8 + $0x19b8] sm:$0xff]
    %v3255 = vld [vmem:[#allocation8 + $0x19c0] sm:$0xff]
    %v3256 = vld [vmem:[#allocation8 + $0x19c8] sm:$0xff]
    %v3257 = vld [vmem:[#allocation8 + $0x19d0] sm:$0xff]
    %v3258 = vld [vmem:[#allocation8 + $0x19d8] sm:$0xff]
    %v3259 = vld [vmem:[#allocation8 + $0x19e0] sm:$0xff]
    %v3260 = vld [vmem:[#allocation8 + $0x19e8] sm:$0xff]
    %v3261 = vld [vmem:[#allocation8 + $0x19f0] sm:$0xff]
    %v3262 = vld [vmem:[#allocation8 + $0x19f8] sm:$0xff]
    %v3263 = vld [vmem:[#allocation8 + $0x1a00] sm:$0xff]
    %v3264 = vld [vmem:[#allocation8 + $0x1a08] sm:$0xff]
    %v3265 = vld [vmem:[#allocation8 + $0x1a10] sm:$0xff]
    %v3266 = vld [vmem:[#allocation8 + $0x1a18] sm:$0xff]
    %v3267 = vld [vmem:[#allocation8 + $0x1a20] sm:$0xff]
    %v3268 = vld [vmem:[#allocation8 + $0x1a28] sm:$0xff]
    %v3269 = vld [vmem:[#allocation8 + $0x1a30] sm:$0xff]
    %v3270 = vld [vmem:[#allocation8 + $0x1a38] sm:$0xff]
    %v3271 = vld [vmem:[#allocation8 + $0x1a40] sm:$0xff]
    %v3272 = vld [vmem:[#allocation8 + $0x1a48] sm:$0xff]
    %v3273 = vld [vmem:[#allocation8 + $0x1a50] sm:$0xff]
    %v3274 = vld [vmem:[#allocation8 + $0x1a58] sm:$0xff]
    %v3275 = vld [vmem:[#allocation8 + $0x1a60] sm:$0xff]
    %v3276 = vld [vmem:[#allocation8 + $0x1a68] sm:$0xff]
    %v3277 = vld [vmem:[#allocation8 + $0x1a70] sm:$0xff]
    %v3278 = vld [vmem:[#allocation8 + $0x1a78] sm:$0xff]
    %v3279 = vld [vmem:[#allocation8 + $0x1a80] sm:$0xff]
    %v3280 = vld [vmem:[#allocation8 + $0x1a88] sm:$0xff]
    %v3281 = vld [vmem:[#allocation8 + $0x1a90] sm:$0xff]
    %v3282 = vld [vmem:[#allocation8 + $0x1a98] sm:$0xff]
    %v3283 = vld [vmem:[#allocation8 + $0x1aa0] sm:$0xff]
    %v3284 = vld [vmem:[#allocation8 + $0x1aa8] sm:$0xff]
    %v3285 = vld [vmem:[#allocation8 + $0x1ab0] sm:$0xff]
    %v3286 = vld [vmem:[#allocation8 + $0x1ab8] sm:$0xff]
    %v3287 = vld [vmem:[#allocation8 + $0x1ac0] sm:$0xff]
    %v3288 = vld [vmem:[#allocation8 + $0x1ac8] sm:$0xff]
    %v3289 = vld [vmem:[#allocation8 + $0x1ad0] sm:$0xff]
    %v3290 = vld [vmem:[#allocation8 + $0x1ad8] sm:$0xff]
    %v3291 = vld [vmem:[#allocation8 + $0x1ae0] sm:$0xff]
    %v3292 = vld [vmem:[#allocation8 + $0x1ae8] sm:$0xff]
    %v3293 = vld [vmem:[#allocation8 + $0x1af0] sm:$0xff]
    %v3294 = vld [vmem:[#allocation8 + $0x1af8] sm:$0xff]
    %v3295 = vld [vmem:[#allocation8 + $0x1b00] sm:$0xff]
    %v3296 = vld [vmem:[#allocation8 + $0x1b08] sm:$0xff]
    %v3297 = vld [vmem:[#allocation8 + $0x1b10] sm:$0xff]
    %v3298 = vld [vmem:[#allocation8 + $0x1b18] sm:$0xff]
    %v3299 = vld [vmem:[#allocation8 + $0x1b20] sm:$0xff]
    %v3300 = vld [vmem:[#allocation8 + $0x1b28] sm:$0xff]
    %v3301 = vld [vmem:[#allocation8 + $0x1b30] sm:$0xff]
    %v3302 = vld [vmem:[#allocation8 + $0x1b38] sm:$0xff]
    %v3303 = vld [vmem:[#allocation8 + $0x1b40] sm:$0xff]
    %v3304 = vld [vmem:[#allocation8 + $0x1b48] sm:$0xff]
    %v3305 = vld [vmem:[#allocation8 + $0x1b50] sm:$0xff]
    %v3306 = vld [vmem:[#allocation8 + $0x1b58] sm:$0xff]
    %v3307 = vld [vmem:[#allocation8 + $0x1b60] sm:$0xff]
    %v3308 = vld [vmem:[#allocation8 + $0x1b68] sm:$0xff]
    %v3309 = vld [vmem:[#allocation8 + $0x1b70] sm:$0xff]
    %v3310 = vld [vmem:[#allocation8 + $0x1b78] sm:$0xff]
    %v3311 = vld [vmem:[#allocation8 + $0x1b80] sm:$0xff]
    %v3312 = vld [vmem:[#allocation8 + $0x1b88] sm:$0xff]
    %v3313 = vld [vmem:[#allocation8 + $0x1b90] sm:$0xff]
    %v3314 = vld [vmem:[#allocation8 + $0x1b98] sm:$0xff]
    %v3315 = vld [vmem:[#allocation8 + $0x1ba0] sm:$0xff]
    %v3316 = vld [vmem:[#allocation8 + $0x1ba8] sm:$0xff]
    %v3317 = vld [vmem:[#allocation8 + $0x1bb0] sm:$0xff]
    %v3318 = vld [vmem:[#allocation8 + $0x1bb8] sm:$0xff]
    %v3319 = vld [vmem:[#allocation8 + $0x1bc0] sm:$0xff]
    %v3320 = vld [vmem:[#allocation8 + $0x1bc8] sm:$0xff]
    %v3321 = vld [vmem:[#allocation8 + $0x1bd0] sm:$0xff]
    %v3322 = vld [vmem:[#allocation8 + $0x1bd8] sm:$0xff]
    %v3323 = vld [vmem:[#allocation8 + $0x1be0] sm:$0xff]
    %v3324 = vld [vmem:[#allocation8 + $0x1be8] sm:$0xff]
    %v3325 = vld [vmem:[#allocation8 + $0x1bf0] sm:$0xff]
    %v3326 = vld [vmem:[#allocation8 + $0x1bf8] sm:$0xff]
    %v3327 = vld [vmem:[#allocation8 + $0x1c00] sm:$0xff]
    %v3328 = vld [vmem:[#allocation8 + $0x1c08] sm:$0xff]
    %v3329 = vld [vmem:[#allocation8 + $0x1c10] sm:$0xff]
    %v3330 = vld [vmem:[#allocation8 + $0x1c18] sm:$0xff]
    %v3331 = vld [vmem:[#allocation8 + $0x1c20] sm:$0xff]
    %v3332 = vld [vmem:[#allocation8 + $0x1c28] sm:$0xff]
    %v3333 = vld [vmem:[#allocation8 + $0x1c30] sm:$0xff]
    %v3334 = vld [vmem:[#allocation8 + $0x1c38] sm:$0xff]
    %v3335 = vld [vmem:[#allocation8 + $0x1c40] sm:$0xff]
    %v3336 = vld [vmem:[#allocation8 + $0x1c48] sm:$0xff]
    %v3337 = vld [vmem:[#allocation8 + $0x1c50] sm:$0xff]
    %v3338 = vld [vmem:[#allocation8 + $0x1c58] sm:$0xff]
    %v3339 = vld [vmem:[#allocation8 + $0x1c60] sm:$0xff]
    %v3340 = vld [vmem:[#allocation8 + $0x1c68] sm:$0xff]
    %v3341 = vld [vmem:[#allocation8 + $0x1c70] sm:$0xff]
    %v3342 = vld [vmem:[#allocation8 + $0x1c78] sm:$0xff]
    %v3343 = vld [vmem:[#allocation8 + $0x1c80] sm:$0xff]
    %v3344 = vld [vmem:[#allocation8 + $0x1c88] sm:$0xff]
    %v3345 = vld [vmem:[#allocation8 + $0x1c90] sm:$0xff]
    %v3346 = vld [vmem:[#allocation8 + $0x1c98] sm:$0xff]
    %v3347 = vld [vmem:[#allocation8 + $0x1ca0] sm:$0xff]
    %v3348 = vld [vmem:[#allocation8 + $0x1ca8] sm:$0xff]
    %v3349 = vld [vmem:[#allocation8 + $0x1cb0] sm:$0xff]
    %v3350 = vld [vmem:[#allocation8 + $0x1cb8] sm:$0xff]
    %v3351 = vld [vmem:[#allocation8 + $0x1cc0] sm:$0xff]
    %v3352 = vld [vmem:[#allocation8 + $0x1cc8] sm:$0xff]
    %v3353 = vld [vmem:[#allocation8 + $0x1cd0] sm:$0xff]
    %v3354 = vld [vmem:[#allocation8 + $0x1cd8] sm:$0xff]
    %v3355 = vld [vmem:[#allocation8 + $0x1ce0] sm:$0xff]
    %v3356 = vld [vmem:[#allocation8 + $0x1ce8] sm:$0xff]
    %v3357 = vld [vmem:[#allocation8 + $0x1cf0] sm:$0xff]
    %v3358 = vld [vmem:[#allocation8 + $0x1cf8] sm:$0xff]
    %v3359 = vld [vmem:[#allocation8 + $0x1d00] sm:$0xff]
    %v3360 = vld [vmem:[#allocation8 + $0x1d08] sm:$0xff]
    %v3361 = vld [vmem:[#allocation8 + $0x1d10] sm:$0xff]
    %v3362 = vld [vmem:[#allocation8 + $0x1d18] sm:$0xff]
    %v3363 = vld [vmem:[#allocation8 + $0x1d20] sm:$0xff]
    %v3364 = vld [vmem:[#allocation8 + $0x1d28] sm:$0xff]
    %v3365 = vld [vmem:[#allocation8 + $0x1d30] sm:$0xff]
    %v3366 = vld [vmem:[#allocation8 + $0x1d38] sm:$0xff]
    %v3367 = vld [vmem:[#allocation8 + $0x1d40] sm:$0xff]
    %v3368 = vld [vmem:[#allocation8 + $0x1d48] sm:$0xff]
    %v3369 = vld [vmem:[#allocation8 + $0x1d50] sm:$0xff]
    %v3370 = vld [vmem:[#allocation8 + $0x1d58] sm:$0xff]
    %v3371 = vld [vmem:[#allocation8 + $0x1d60] sm:$0xff]
    %v3372 = vld [vmem:[#allocation8 + $0x1d68] sm:$0xff]
    %v3373 = vld [vmem:[#allocation8 + $0x1d70] sm:$0xff]
    %v3374 = vld [vmem:[#allocation8 + $0x1d78] sm:$0xff]
    %v3375 = vld [vmem:[#allocation8 + $0x1d80] sm:$0xff]
    %v3376 = vld [vmem:[#allocation8 + $0x1d88] sm:$0xff]
    %v3377 = vld [vmem:[#allocation8 + $0x1d90] sm:$0xff]
    %v3378 = vld [vmem:[#allocation8 + $0x1d98] sm:$0xff]
    %v3379 = vld [vmem:[#allocation8 + $0x1da0] sm:$0xff]
    %v3380 = vld [vmem:[#allocation8 + $0x1da8] sm:$0xff]
    %v3381 = vld [vmem:[#allocation8 + $0x1db0] sm:$0xff]
    %v3382 = vld [vmem:[#allocation8 + $0x1db8] sm:$0xff]
    %v3383 = vld [vmem:[#allocation8 + $0x1dc0] sm:$0xff]
    %v3384 = vld [vmem:[#allocation8 + $0x1dc8] sm:$0xff]
    %v3385 = vld [vmem:[#allocation8 + $0x1dd0] sm:$0xff]
    %v3386 = vld [vmem:[#allocation8 + $0x1dd8] sm:$0xff]
    %v3387 = vld [vmem:[#allocation8 + $0x1de0] sm:$0xff]
    %v3388 = vld [vmem:[#allocation8 + $0x1de8] sm:$0xff]
    %v3389 = vld [vmem:[#allocation8 + $0x1df0] sm:$0xff]
    %v3390 = vld [vmem:[#allocation8 + $0x1df8] sm:$0xff]
    %v3391 = vld [vmem:[#allocation8 + $0x1e00] sm:$0xff]
    %v3392 = vld [vmem:[#allocation8 + $0x1e08] sm:$0xff]
    %v3393 = vld [vmem:[#allocation8 + $0x1e10] sm:$0xff]
    %v3394 = vld [vmem:[#allocation8 + $0x1e18] sm:$0xff]
    %v3395 = vld [vmem:[#allocation8 + $0x1e20] sm:$0xff]
    %v3396 = vld [vmem:[#allocation8 + $0x1e28] sm:$0xff]
    %v3397 = vld [vmem:[#allocation8 + $0x1e30] sm:$0xff]
    %v3398 = vld [vmem:[#allocation8 + $0x1e38] sm:$0xff]
    %v3399 = vld [vmem:[#allocation8 + $0x1e40] sm:$0xff]
    %v3400 = vld [vmem:[#allocation8 + $0x1e48] sm:$0xff]
    %v3401 = vld [vmem:[#allocation8 + $0x1e50] sm:$0xff]
    %v3402 = vld [vmem:[#allocation8 + $0x1e58] sm:$0xff]
    %v3403 = vld [vmem:[#allocation8 + $0x1e60] sm:$0xff]
    %v3404 = vld [vmem:[#allocation8 + $0x1e68] sm:$0xff]
    %v3405 = vld [vmem:[#allocation8 + $0x1e70] sm:$0xff]
    %v3406 = vld [vmem:[#allocation8 + $0x1e78] sm:$0xff]
    %v3407 = vld [vmem:[#allocation8 + $0x1e80] sm:$0xff]
    %v3408 = vld [vmem:[#allocation8 + $0x1e88] sm:$0xff]
    %v3409 = vld [vmem:[#allocation8 + $0x1e90] sm:$0xff]
    %v3410 = vld [vmem:[#allocation8 + $0x1e98] sm:$0xff]
    %v3411 = vld [vmem:[#allocation8 + $0x1ea0] sm:$0xff]
    %v3412 = vld [vmem:[#allocation8 + $0x1ea8] sm:$0xff]
    %v3413 = vld [vmem:[#allocation8 + $0x1eb0] sm:$0xff]
    %v3414 = vld [vmem:[#allocation8 + $0x1eb8] sm:$0xff]
    %v3415 = vld [vmem:[#allocation8 + $0x1ec0] sm:$0xff]
    %v3416 = vld [vmem:[#allocation8 + $0x1ec8] sm:$0xff]
    %v3417 = vld [vmem:[#allocation8 + $0x1ed0] sm:$0xff]
    %v3418 = vld [vmem:[#allocation8 + $0x1ed8] sm:$0xff]
    %v3419 = vld [vmem:[#allocation8 + $0x1ee0] sm:$0xff]
    %v3420 = vld [vmem:[#allocation8 + $0x1ee8] sm:$0xff]
    %v3421 = vld [vmem:[#allocation8 + $0x1ef0] sm:$0xff]
    %v3422 = vld [vmem:[#allocation8 + $0x1ef8] sm:$0xff]
    %v3423 = vld [vmem:[#allocation8 + $0x1f00] sm:$0xff]
    %v3424 = vld [vmem:[#allocation8 + $0x1f08] sm:$0xff]
    %v3425 = vld [vmem:[#allocation8 + $0x1f10] sm:$0xff]
    %v3426 = vld [vmem:[#allocation8 + $0x1f18] sm:$0xff]
    %v3427 = vld [vmem:[#allocation8 + $0x1f20] sm:$0xff]
    %v3428 = vld [vmem:[#allocation8 + $0x1f28] sm:$0xff]
    %v3429 = vld [vmem:[#allocation8 + $0x1f30] sm:$0xff]
    %v3430 = vld [vmem:[#allocation8 + $0x1f38] sm:$0xff]
    %v3431 = vld [vmem:[#allocation8 + $0x1f40] sm:$0xff]
    %v3432 = vld [vmem:[#allocation8 + $0x1f48] sm:$0xff]
    %v3433 = vld [vmem:[#allocation8 + $0x1f50] sm:$0xff]
    %v3434 = vld [vmem:[#allocation8 + $0x1f58] sm:$0xff]
    %v3435 = vld [vmem:[#allocation8 + $0x1f60] sm:$0xff]
    %v3436 = vld [vmem:[#allocation8 + $0x1f68] sm:$0xff]
    %v3437 = vld [vmem:[#allocation8 + $0x1f70] sm:$0xff]
    %v3438 = vld [vmem:[#allocation8 + $0x1f78] sm:$0xff]
    %v3439 = vld [vmem:[#allocation8 + $0x1f80] sm:$0xff]
    %v3440 = vld [vmem:[#allocation8 + $0x1f88] sm:$0xff]
    %v3441 = vld [vmem:[#allocation8 + $0x1f90] sm:$0xff]
    %v3442 = vld [vmem:[#allocation8 + $0x1f98] sm:$0xff]
    %v3443 = vld [vmem:[#allocation8 + $0x1fa0] sm:$0xff]
    %v3444 = vld [vmem:[#allocation8 + $0x1fa8] sm:$0xff]
    %v3445 = vld [vmem:[#allocation8 + $0x1fb0] sm:$0xff]
    %v3446 = vld [vmem:[#allocation8 + $0x1fb8] sm:$0xff]
    %v3447 = vld [vmem:[#allocation8 + $0x1fc0] sm:$0xff]
    %v3448 = vld [vmem:[#allocation8 + $0x1fc8] sm:$0xff]
    %v3449 = vld [vmem:[#allocation8 + $0x1fd0] sm:$0xff]
    %v3450 = vld [vmem:[#allocation8 + $0x1fd8] sm:$0xff]
    %v3451 = vld [vmem:[#allocation8 + $0x1fe0] sm:$0xff]
    %v3452 = vld [vmem:[#allocation8 + $0x1fe8] sm:$0xff]
    %v3453 = vld [vmem:[#allocation8 + $0x1ff0] sm:$0xff]
    %v3454 = vld [vmem:[#allocation8 + $0x1ff8] sm:$0xff]
    %v3455 = vpack.c.bf16 %v2435, %v2431
    %v3456 = vpack.c.bf16 %v2436, %v2432
    %v3457 = vpack.c.bf16 %v2437, %v2433
    %v3458 = vpack.c.bf16 %v2438, %v2434
    %v3459 = vpack.c.bf16 %v2443, %v2439
    %v3460 = vpack.c.bf16 %v2444, %v2440
    %v3461 = vpack.c.bf16 %v2445, %v2441
    %v3462 = vpack.c.bf16 %v2446, %v2442
    %v3463 = vpack.c.bf16 %v2451, %v2447
    %v3464 = vpack.c.bf16 %v2452, %v2448
    %v3465 = vpack.c.bf16 %v2453, %v2449
    %v3466 = vpack.c.bf16 %v2454, %v2450
    %v3467 = vpack.c.bf16 %v2459, %v2455
    %v3468 = vpack.c.bf16 %v2460, %v2456
    %v3469 = vpack.c.bf16 %v2461, %v2457
    %v3470 = vpack.c.bf16 %v2462, %v2458
    %v3471 = vpack.c.bf16 %v2467, %v2463
    %v3472 = vpack.c.bf16 %v2468, %v2464
    %v3473 = vpack.c.bf16 %v2469, %v2465
    %v3474 = vpack.c.bf16 %v2470, %v2466
    %v3475 = vpack.c.bf16 %v2475, %v2471
    %v3476 = vpack.c.bf16 %v2476, %v2472
    %v3477 = vpack.c.bf16 %v2477, %v2473
    %v3478 = vpack.c.bf16 %v2478, %v2474
    %v3479 = vpack.c.bf16 %v2483, %v2479
    %v3480 = vpack.c.bf16 %v2484, %v2480
    %v3481 = vpack.c.bf16 %v2485, %v2481
    %v3482 = vpack.c.bf16 %v2486, %v2482
    %v3483 = vpack.c.bf16 %v2491, %v2487
    %v3484 = vpack.c.bf16 %v2492, %v2488
    %v3485 = vpack.c.bf16 %v2493, %v2489
    %v3486 = vpack.c.bf16 %v2494, %v2490
    %v3487 = vpack.c.bf16 %v2499, %v2495
    %v3488 = vpack.c.bf16 %v2500, %v2496
    %v3489 = vpack.c.bf16 %v2501, %v2497
    %v3490 = vpack.c.bf16 %v2502, %v2498
    %v3491 = vpack.c.bf16 %v2507, %v2503
    %v3492 = vpack.c.bf16 %v2508, %v2504
    %v3493 = vpack.c.bf16 %v2509, %v2505
    %v3494 = vpack.c.bf16 %v2510, %v2506
    %v3495 = vpack.c.bf16 %v2515, %v2511
    %v3496 = vpack.c.bf16 %v2516, %v2512
    %v3497 = vpack.c.bf16 %v2517, %v2513
    %v3498 = vpack.c.bf16 %v2518, %v2514
    %v3499 = vpack.c.bf16 %v2523, %v2519
    %v3500 = vpack.c.bf16 %v2524, %v2520
    %v3501 = vpack.c.bf16 %v2525, %v2521
    %v3502 = vpack.c.bf16 %v2526, %v2522
    %v3503 = vpack.c.bf16 %v2531, %v2527
    %v3504 = vpack.c.bf16 %v2532, %v2528
    %v3505 = vpack.c.bf16 %v2533, %v2529
    %v3506 = vpack.c.bf16 %v2534, %v2530
    %v3507 = vpack.c.bf16 %v2539, %v2535
    %v3508 = vpack.c.bf16 %v2540, %v2536
    %v3509 = vpack.c.bf16 %v2541, %v2537
    %v3510 = vpack.c.bf16 %v2542, %v2538
    %v3511 = vpack.c.bf16 %v2547, %v2543
    %v3512 = vpack.c.bf16 %v2548, %v2544
    %v3513 = vpack.c.bf16 %v2549, %v2545
    %v3514 = vpack.c.bf16 %v2550, %v2546
    %v3515 = vpack.c.bf16 %v2555, %v2551
    %v3516 = vpack.c.bf16 %v2556, %v2552
    %v3517 = vpack.c.bf16 %v2557, %v2553
    %v3518 = vpack.c.bf16 %v2558, %v2554
    %v3519 = vpack.c.bf16 %v2563, %v2559
    %v3520 = vpack.c.bf16 %v2564, %v2560
    %v3521 = vpack.c.bf16 %v2565, %v2561
    %v3522 = vpack.c.bf16 %v2566, %v2562
    %v3523 = vpack.c.bf16 %v2571, %v2567
    %v3524 = vpack.c.bf16 %v2572, %v2568
    %v3525 = vpack.c.bf16 %v2573, %v2569
    %v3526 = vpack.c.bf16 %v2574, %v2570
    %v3527 = vpack.c.bf16 %v2579, %v2575
    %v3528 = vpack.c.bf16 %v2580, %v2576
    %v3529 = vpack.c.bf16 %v2581, %v2577
    %v3530 = vpack.c.bf16 %v2582, %v2578
    %v3531 = vpack.c.bf16 %v2587, %v2583
    %v3532 = vpack.c.bf16 %v2588, %v2584
    %v3533 = vpack.c.bf16 %v2589, %v2585
    %v3534 = vpack.c.bf16 %v2590, %v2586
    %v3535 = vpack.c.bf16 %v2595, %v2591
    %v3536 = vpack.c.bf16 %v2596, %v2592
    %v3537 = vpack.c.bf16 %v2597, %v2593
    %v3538 = vpack.c.bf16 %v2598, %v2594
    %v3539 = vpack.c.bf16 %v2603, %v2599
    %v3540 = vpack.c.bf16 %v2604, %v2600
    %v3541 = vpack.c.bf16 %v2605, %v2601
    %v3542 = vpack.c.bf16 %v2606, %v2602
    %v3543 = vpack.c.bf16 %v2611, %v2607
    %v3544 = vpack.c.bf16 %v2612, %v2608
    %v3545 = vpack.c.bf16 %v2613, %v2609
    %v3546 = vpack.c.bf16 %v2614, %v2610
    %v3547 = vpack.c.bf16 %v2619, %v2615
    %v3548 = vpack.c.bf16 %v2620, %v2616
    %v3549 = vpack.c.bf16 %v2621, %v2617
    %v3550 = vpack.c.bf16 %v2622, %v2618
    %v3551 = vpack.c.bf16 %v2627, %v2623
    %v3552 = vpack.c.bf16 %v2628, %v2624
    %v3553 = vpack.c.bf16 %v2629, %v2625
    %v3554 = vpack.c.bf16 %v2630, %v2626
    %v3555 = vpack.c.bf16 %v2635, %v2631
    %v3556 = vpack.c.bf16 %v2636, %v2632
    %v3557 = vpack.c.bf16 %v2637, %v2633
    %v3558 = vpack.c.bf16 %v2638, %v2634
    %v3559 = vpack.c.bf16 %v2643, %v2639
    %v3560 = vpack.c.bf16 %v2644, %v2640
    %v3561 = vpack.c.bf16 %v2645, %v2641
    %v3562 = vpack.c.bf16 %v2646, %v2642
    %v3563 = vpack.c.bf16 %v2651, %v2647
    %v3564 = vpack.c.bf16 %v2652, %v2648
    %v3565 = vpack.c.bf16 %v2653, %v2649
    %v3566 = vpack.c.bf16 %v2654, %v2650
    %v3567 = vpack.c.bf16 %v2659, %v2655
    %v3568 = vpack.c.bf16 %v2660, %v2656
    %v3569 = vpack.c.bf16 %v2661, %v2657
    %v3570 = vpack.c.bf16 %v2662, %v2658
    %v3571 = vpack.c.bf16 %v2667, %v2663
    %v3572 = vpack.c.bf16 %v2668, %v2664
    %v3573 = vpack.c.bf16 %v2669, %v2665
    %v3574 = vpack.c.bf16 %v2670, %v2666
    %v3575 = vpack.c.bf16 %v2675, %v2671
    %v3576 = vpack.c.bf16 %v2676, %v2672
    %v3577 = vpack.c.bf16 %v2677, %v2673
    %v3578 = vpack.c.bf16 %v2678, %v2674
    %v3579 = vpack.c.bf16 %v2683, %v2679
    %v3580 = vpack.c.bf16 %v2684, %v2680
    %v3581 = vpack.c.bf16 %v2685, %v2681
    %v3582 = vpack.c.bf16 %v2686, %v2682
    %v3583 = vpack.c.bf16 %v2691, %v2687
    %v3584 = vpack.c.bf16 %v2692, %v2688
    %v3585 = vpack.c.bf16 %v2693, %v2689
    %v3586 = vpack.c.bf16 %v2694, %v2690
    %v3587 = vpack.c.bf16 %v2699, %v2695
    %v3588 = vpack.c.bf16 %v2700, %v2696
    %v3589 = vpack.c.bf16 %v2701, %v2697
    %v3590 = vpack.c.bf16 %v2702, %v2698
    %v3591 = vpack.c.bf16 %v2707, %v2703
    %v3592 = vpack.c.bf16 %v2708, %v2704
    %v3593 = vpack.c.bf16 %v2709, %v2705
    %v3594 = vpack.c.bf16 %v2710, %v2706
    %v3595 = vpack.c.bf16 %v2715, %v2711
    %v3596 = vpack.c.bf16 %v2716, %v2712
    %v3597 = vpack.c.bf16 %v2717, %v2713
    %v3598 = vpack.c.bf16 %v2718, %v2714
    %v3599 = vpack.c.bf16 %v2723, %v2719
    %v3600 = vpack.c.bf16 %v2724, %v2720
    %v3601 = vpack.c.bf16 %v2725, %v2721
    %v3602 = vpack.c.bf16 %v2726, %v2722
    %v3603 = vpack.c.bf16 %v2731, %v2727
    %v3604 = vpack.c.bf16 %v2732, %v2728
    %v3605 = vpack.c.bf16 %v2733, %v2729
    %v3606 = vpack.c.bf16 %v2734, %v2730
    %v3607 = vpack.c.bf16 %v2739, %v2735
    %v3608 = vpack.c.bf16 %v2740, %v2736
    %v3609 = vpack.c.bf16 %v2741, %v2737
    %v3610 = vpack.c.bf16 %v2742, %v2738
    %v3611 = vpack.c.bf16 %v2747, %v2743
    %v3612 = vpack.c.bf16 %v2748, %v2744
    %v3613 = vpack.c.bf16 %v2749, %v2745
    %v3614 = vpack.c.bf16 %v2750, %v2746
    %v3615 = vpack.c.bf16 %v2755, %v2751
    %v3616 = vpack.c.bf16 %v2756, %v2752
    %v3617 = vpack.c.bf16 %v2757, %v2753
    %v3618 = vpack.c.bf16 %v2758, %v2754
    %v3619 = vpack.c.bf16 %v2763, %v2759
    %v3620 = vpack.c.bf16 %v2764, %v2760
    %v3621 = vpack.c.bf16 %v2765, %v2761
    %v3622 = vpack.c.bf16 %v2766, %v2762
    %v3623 = vpack.c.bf16 %v2771, %v2767
    %v3624 = vpack.c.bf16 %v2772, %v2768
    %v3625 = vpack.c.bf16 %v2773, %v2769
    %v3626 = vpack.c.bf16 %v2774, %v2770
    %v3627 = vpack.c.bf16 %v2779, %v2775
    %v3628 = vpack.c.bf16 %v2780, %v2776
    %v3629 = vpack.c.bf16 %v2781, %v2777
    %v3630 = vpack.c.bf16 %v2782, %v2778
    %v3631 = vpack.c.bf16 %v2787, %v2783
    %v3632 = vpack.c.bf16 %v2788, %v2784
    %v3633 = vpack.c.bf16 %v2789, %v2785
    %v3634 = vpack.c.bf16 %v2790, %v2786
    %v3635 = vpack.c.bf16 %v2795, %v2791
    %v3636 = vpack.c.bf16 %v2796, %v2792
    %v3637 = vpack.c.bf16 %v2797, %v2793
    %v3638 = vpack.c.bf16 %v2798, %v2794
    %v3639 = vpack.c.bf16 %v2803, %v2799
    %v3640 = vpack.c.bf16 %v2804, %v2800
    %v3641 = vpack.c.bf16 %v2805, %v2801
    %v3642 = vpack.c.bf16 %v2806, %v2802
    %v3643 = vpack.c.bf16 %v2811, %v2807
    %v3644 = vpack.c.bf16 %v2812, %v2808
    %v3645 = vpack.c.bf16 %v2813, %v2809
    %v3646 = vpack.c.bf16 %v2814, %v2810
    %v3647 = vpack.c.bf16 %v2819, %v2815
    %v3648 = vpack.c.bf16 %v2820, %v2816
    %v3649 = vpack.c.bf16 %v2821, %v2817
    %v3650 = vpack.c.bf16 %v2822, %v2818
    %v3651 = vpack.c.bf16 %v2827, %v2823
    %v3652 = vpack.c.bf16 %v2828, %v2824
    %v3653 = vpack.c.bf16 %v2829, %v2825
    %v3654 = vpack.c.bf16 %v2830, %v2826
    %v3655 = vpack.c.bf16 %v2835, %v2831
    %v3656 = vpack.c.bf16 %v2836, %v2832
    %v3657 = vpack.c.bf16 %v2837, %v2833
    %v3658 = vpack.c.bf16 %v2838, %v2834
    %v3659 = vpack.c.bf16 %v2843, %v2839
    %v3660 = vpack.c.bf16 %v2844, %v2840
    %v3661 = vpack.c.bf16 %v2845, %v2841
    %v3662 = vpack.c.bf16 %v2846, %v2842
    %v3663 = vpack.c.bf16 %v2851, %v2847
    %v3664 = vpack.c.bf16 %v2852, %v2848
    %v3665 = vpack.c.bf16 %v2853, %v2849
    %v3666 = vpack.c.bf16 %v2854, %v2850
    %v3667 = vpack.c.bf16 %v2859, %v2855
    %v3668 = vpack.c.bf16 %v2860, %v2856
    %v3669 = vpack.c.bf16 %v2861, %v2857
    %v3670 = vpack.c.bf16 %v2862, %v2858
    %v3671 = vpack.c.bf16 %v2867, %v2863
    %v3672 = vpack.c.bf16 %v2868, %v2864
    %v3673 = vpack.c.bf16 %v2869, %v2865
    %v3674 = vpack.c.bf16 %v2870, %v2866
    %v3675 = vpack.c.bf16 %v2875, %v2871
    %v3676 = vpack.c.bf16 %v2876, %v2872
    %v3677 = vpack.c.bf16 %v2877, %v2873
    %v3678 = vpack.c.bf16 %v2878, %v2874
    %v3679 = vpack.c.bf16 %v2883, %v2879
    %v3680 = vpack.c.bf16 %v2884, %v2880
    %v3681 = vpack.c.bf16 %v2885, %v2881
    %v3682 = vpack.c.bf16 %v2886, %v2882
    %v3683 = vpack.c.bf16 %v2891, %v2887
    %v3684 = vpack.c.bf16 %v2892, %v2888
    %v3685 = vpack.c.bf16 %v2893, %v2889
    %v3686 = vpack.c.bf16 %v2894, %v2890
    %v3687 = vpack.c.bf16 %v2899, %v2895
    %v3688 = vpack.c.bf16 %v2900, %v2896
    %v3689 = vpack.c.bf16 %v2901, %v2897
    %v3690 = vpack.c.bf16 %v2902, %v2898
    %v3691 = vpack.c.bf16 %v2907, %v2903
    %v3692 = vpack.c.bf16 %v2908, %v2904
    %v3693 = vpack.c.bf16 %v2909, %v2905
    %v3694 = vpack.c.bf16 %v2910, %v2906
    %v3695 = vpack.c.bf16 %v2915, %v2911
    %v3696 = vpack.c.bf16 %v2916, %v2912
    %v3697 = vpack.c.bf16 %v2917, %v2913
    %v3698 = vpack.c.bf16 %v2918, %v2914
    %v3699 = vpack.c.bf16 %v2923, %v2919
    %v3700 = vpack.c.bf16 %v2924, %v2920
    %v3701 = vpack.c.bf16 %v2925, %v2921
    %v3702 = vpack.c.bf16 %v2926, %v2922
    %v3703 = vpack.c.bf16 %v2931, %v2927
    %v3704 = vpack.c.bf16 %v2932, %v2928
    %v3705 = vpack.c.bf16 %v2933, %v2929
    %v3706 = vpack.c.bf16 %v2934, %v2930
    %v3707 = vpack.c.bf16 %v2939, %v2935
    %v3708 = vpack.c.bf16 %v2940, %v2936
    %v3709 = vpack.c.bf16 %v2941, %v2937
    %v3710 = vpack.c.bf16 %v2942, %v2938
    %v3711 = vpack.c.bf16 %v2947, %v2943
    %v3712 = vpack.c.bf16 %v2948, %v2944
    %v3713 = vpack.c.bf16 %v2949, %v2945
    %v3714 = vpack.c.bf16 %v2950, %v2946
    %v3715 = vpack.c.bf16 %v2955, %v2951
    %v3716 = vpack.c.bf16 %v2956, %v2952
    %v3717 = vpack.c.bf16 %v2957, %v2953
    %v3718 = vpack.c.bf16 %v2958, %v2954
    %v3719 = vpack.c.bf16 %v2963, %v2959
    %v3720 = vpack.c.bf16 %v2964, %v2960
    %v3721 = vpack.c.bf16 %v2965, %v2961
    %v3722 = vpack.c.bf16 %v2966, %v2962
    %v3723 = vpack.c.bf16 %v2971, %v2967
    %v3724 = vpack.c.bf16 %v2972, %v2968
    %v3725 = vpack.c.bf16 %v2973, %v2969
    %v3726 = vpack.c.bf16 %v2974, %v2970
    %v3727 = vpack.c.bf16 %v2979, %v2975
    %v3728 = vpack.c.bf16 %v2980, %v2976
    %v3729 = vpack.c.bf16 %v2981, %v2977
    %v3730 = vpack.c.bf16 %v2982, %v2978
    %v3731 = vpack.c.bf16 %v2987, %v2983
    %v3732 = vpack.c.bf16 %v2988, %v2984
    %v3733 = vpack.c.bf16 %v2989, %v2985
    %v3734 = vpack.c.bf16 %v2990, %v2986
    %v3735 = vpack.c.bf16 %v2995, %v2991
    %v3736 = vpack.c.bf16 %v2996, %v2992
    %v3737 = vpack.c.bf16 %v2997, %v2993
    %v3738 = vpack.c.bf16 %v2998, %v2994
    %v3739 = vpack.c.bf16 %v3003, %v2999
    %v3740 = vpack.c.bf16 %v3004, %v3000
    %v3741 = vpack.c.bf16 %v3005, %v3001
    %v3742 = vpack.c.bf16 %v3006, %v3002
    %v3743 = vpack.c.bf16 %v3011, %v3007
    %v3744 = vpack.c.bf16 %v3012, %v3008
    %v3745 = vpack.c.bf16 %v3013, %v3009
    %v3746 = vpack.c.bf16 %v3014, %v3010
    %v3747 = vpack.c.bf16 %v3019, %v3015
    %v3748 = vpack.c.bf16 %v3020, %v3016
    %v3749 = vpack.c.bf16 %v3021, %v3017
    %v3750 = vpack.c.bf16 %v3022, %v3018
    %v3751 = vpack.c.bf16 %v3027, %v3023
    %v3752 = vpack.c.bf16 %v3028, %v3024
    %v3753 = vpack.c.bf16 %v3029, %v3025
    %v3754 = vpack.c.bf16 %v3030, %v3026
    %v3755 = vpack.c.bf16 %v3035, %v3031
    %v3756 = vpack.c.bf16 %v3036, %v3032
    %v3757 = vpack.c.bf16 %v3037, %v3033
    %v3758 = vpack.c.bf16 %v3038, %v3034
    %v3759 = vpack.c.bf16 %v3043, %v3039
    %v3760 = vpack.c.bf16 %v3044, %v3040
    %v3761 = vpack.c.bf16 %v3045, %v3041
    %v3762 = vpack.c.bf16 %v3046, %v3042
    %v3763 = vpack.c.bf16 %v3051, %v3047
    %v3764 = vpack.c.bf16 %v3052, %v3048
    %v3765 = vpack.c.bf16 %v3053, %v3049
    %v3766 = vpack.c.bf16 %v3054, %v3050
    %v3767 = vpack.c.bf16 %v3059, %v3055
    %v3768 = vpack.c.bf16 %v3060, %v3056
    %v3769 = vpack.c.bf16 %v3061, %v3057
    %v3770 = vpack.c.bf16 %v3062, %v3058
    %v3771 = vpack.c.bf16 %v3067, %v3063
    %v3772 = vpack.c.bf16 %v3068, %v3064
    %v3773 = vpack.c.bf16 %v3069, %v3065
    %v3774 = vpack.c.bf16 %v3070, %v3066
    %v3775 = vpack.c.bf16 %v3075, %v3071
    %v3776 = vpack.c.bf16 %v3076, %v3072
    %v3777 = vpack.c.bf16 %v3077, %v3073
    %v3778 = vpack.c.bf16 %v3078, %v3074
    %v3779 = vpack.c.bf16 %v3083, %v3079
    %v3780 = vpack.c.bf16 %v3084, %v3080
    %v3781 = vpack.c.bf16 %v3085, %v3081
    %v3782 = vpack.c.bf16 %v3086, %v3082
    %v3783 = vpack.c.bf16 %v3091, %v3087
    %v3784 = vpack.c.bf16 %v3092, %v3088
    %v3785 = vpack.c.bf16 %v3093, %v3089
    %v3786 = vpack.c.bf16 %v3094, %v3090
    %v3787 = vpack.c.bf16 %v3099, %v3095
    %v3788 = vpack.c.bf16 %v3100, %v3096
    %v3789 = vpack.c.bf16 %v3101, %v3097
    %v3790 = vpack.c.bf16 %v3102, %v3098
    %v3791 = vpack.c.bf16 %v3107, %v3103
    %v3792 = vpack.c.bf16 %v3108, %v3104
    %v3793 = vpack.c.bf16 %v3109, %v3105
    %v3794 = vpack.c.bf16 %v3110, %v3106
    %v3795 = vpack.c.bf16 %v3115, %v3111
    %v3796 = vpack.c.bf16 %v3116, %v3112
    %v3797 = vpack.c.bf16 %v3117, %v3113
    %v3798 = vpack.c.bf16 %v3118, %v3114
    %v3799 = vpack.c.bf16 %v3123, %v3119
    %v3800 = vpack.c.bf16 %v3124, %v3120
    %v3801 = vpack.c.bf16 %v3125, %v3121
    %v3802 = vpack.c.bf16 %v3126, %v3122
    %v3803 = vpack.c.bf16 %v3131, %v3127
    %v3804 = vpack.c.bf16 %v3132, %v3128
    %v3805 = vpack.c.bf16 %v3133, %v3129
    %v3806 = vpack.c.bf16 %v3134, %v3130
    %v3807 = vpack.c.bf16 %v3139, %v3135
    %v3808 = vpack.c.bf16 %v3140, %v3136
    %v3809 = vpack.c.bf16 %v3141, %v3137
    %v3810 = vpack.c.bf16 %v3142, %v3138
    %v3811 = vpack.c.bf16 %v3147, %v3143
    %v3812 = vpack.c.bf16 %v3148, %v3144
    %v3813 = vpack.c.bf16 %v3149, %v3145
    %v3814 = vpack.c.bf16 %v3150, %v3146
    %v3815 = vpack.c.bf16 %v3155, %v3151
    %v3816 = vpack.c.bf16 %v3156, %v3152
    %v3817 = vpack.c.bf16 %v3157, %v3153
    %v3818 = vpack.c.bf16 %v3158, %v3154
    %v3819 = vpack.c.bf16 %v3163, %v3159
    %v3820 = vpack.c.bf16 %v3164, %v3160
    %v3821 = vpack.c.bf16 %v3165, %v3161
    %v3822 = vpack.c.bf16 %v3166, %v3162
    %v3823 = vpack.c.bf16 %v3171, %v3167
    %v3824 = vpack.c.bf16 %v3172, %v3168
    %v3825 = vpack.c.bf16 %v3173, %v3169
    %v3826 = vpack.c.bf16 %v3174, %v3170
    %v3827 = vpack.c.bf16 %v3179, %v3175
    %v3828 = vpack.c.bf16 %v3180, %v3176
    %v3829 = vpack.c.bf16 %v3181, %v3177
    %v3830 = vpack.c.bf16 %v3182, %v3178
    %v3831 = vpack.c.bf16 %v3187, %v3183
    %v3832 = vpack.c.bf16 %v3188, %v3184
    %v3833 = vpack.c.bf16 %v3189, %v3185
    %v3834 = vpack.c.bf16 %v3190, %v3186
    %v3835 = vpack.c.bf16 %v3195, %v3191
    %v3836 = vpack.c.bf16 %v3196, %v3192
    %v3837 = vpack.c.bf16 %v3197, %v3193
    %v3838 = vpack.c.bf16 %v3198, %v3194
    %v3839 = vpack.c.bf16 %v3203, %v3199
    %v3840 = vpack.c.bf16 %v3204, %v3200
    %v3841 = vpack.c.bf16 %v3205, %v3201
    %v3842 = vpack.c.bf16 %v3206, %v3202
    %v3843 = vpack.c.bf16 %v3211, %v3207
    %v3844 = vpack.c.bf16 %v3212, %v3208
    %v3845 = vpack.c.bf16 %v3213, %v3209
    %v3846 = vpack.c.bf16 %v3214, %v3210
    %v3847 = vpack.c.bf16 %v3219, %v3215
    %v3848 = vpack.c.bf16 %v3220, %v3216
    %v3849 = vpack.c.bf16 %v3221, %v3217
    %v3850 = vpack.c.bf16 %v3222, %v3218
    %v3851 = vpack.c.bf16 %v3227, %v3223
    %v3852 = vpack.c.bf16 %v3228, %v3224
    %v3853 = vpack.c.bf16 %v3229, %v3225
    %v3854 = vpack.c.bf16 %v3230, %v3226
    %v3855 = vpack.c.bf16 %v3235, %v3231
    %v3856 = vpack.c.bf16 %v3236, %v3232
    %v3857 = vpack.c.bf16 %v3237, %v3233
    %v3858 = vpack.c.bf16 %v3238, %v3234
    %v3859 = vpack.c.bf16 %v3243, %v3239
    %v3860 = vpack.c.bf16 %v3244, %v3240
    %v3861 = vpack.c.bf16 %v3245, %v3241
    %v3862 = vpack.c.bf16 %v3246, %v3242
    %v3863 = vpack.c.bf16 %v3251, %v3247
    %v3864 = vpack.c.bf16 %v3252, %v3248
    %v3865 = vpack.c.bf16 %v3253, %v3249
    %v3866 = vpack.c.bf16 %v3254, %v3250
    %v3867 = vpack.c.bf16 %v3259, %v3255
    %v3868 = vpack.c.bf16 %v3260, %v3256
    %v3869 = vpack.c.bf16 %v3261, %v3257
    %v3870 = vpack.c.bf16 %v3262, %v3258
    %v3871 = vpack.c.bf16 %v3267, %v3263
    %v3872 = vpack.c.bf16 %v3268, %v3264
    %v3873 = vpack.c.bf16 %v3269, %v3265
    %v3874 = vpack.c.bf16 %v3270, %v3266
    %v3875 = vpack.c.bf16 %v3275, %v3271
    %v3876 = vpack.c.bf16 %v3276, %v3272
    %v3877 = vpack.c.bf16 %v3277, %v3273
    %v3878 = vpack.c.bf16 %v3278, %v3274
    %v3879 = vpack.c.bf16 %v3283, %v3279
    %v3880 = vpack.c.bf16 %v3284, %v3280
    %v3881 = vpack.c.bf16 %v3285, %v3281
    %v3882 = vpack.c.bf16 %v3286, %v3282
    %v3883 = vpack.c.bf16 %v3291, %v3287
    %v3884 = vpack.c.bf16 %v3292, %v3288
    %v3885 = vpack.c.bf16 %v3293, %v3289
    %v3886 = vpack.c.bf16 %v3294, %v3290
    %v3887 = vpack.c.bf16 %v3299, %v3295
    %v3888 = vpack.c.bf16 %v3300, %v3296
    %v3889 = vpack.c.bf16 %v3301, %v3297
    %v3890 = vpack.c.bf16 %v3302, %v3298
    %v3891 = vpack.c.bf16 %v3307, %v3303
    %v3892 = vpack.c.bf16 %v3308, %v3304
    %v3893 = vpack.c.bf16 %v3309, %v3305
    %v3894 = vpack.c.bf16 %v3310, %v3306
    %v3895 = vpack.c.bf16 %v3315, %v3311
    %v3896 = vpack.c.bf16 %v3316, %v3312
    %v3897 = vpack.c.bf16 %v3317, %v3313
    %v3898 = vpack.c.bf16 %v3318, %v3314
    %v3899 = vpack.c.bf16 %v3323, %v3319
    %v3900 = vpack.c.bf16 %v3324, %v3320
    %v3901 = vpack.c.bf16 %v3325, %v3321
    %v3902 = vpack.c.bf16 %v3326, %v3322
    %v3903 = vpack.c.bf16 %v3331, %v3327
    %v3904 = vpack.c.bf16 %v3332, %v3328
    %v3905 = vpack.c.bf16 %v3333, %v3329
    %v3906 = vpack.c.bf16 %v3334, %v3330
    %v3907 = vpack.c.bf16 %v3339, %v3335
    %v3908 = vpack.c.bf16 %v3340, %v3336
    %v3909 = vpack.c.bf16 %v3341, %v3337
    %v3910 = vpack.c.bf16 %v3342, %v3338
    %v3911 = vpack.c.bf16 %v3347, %v3343
    %v3912 = vpack.c.bf16 %v3348, %v3344
    %v3913 = vpack.c.bf16 %v3349, %v3345
    %v3914 = vpack.c.bf16 %v3350, %v3346
    %v3915 = vpack.c.bf16 %v3355, %v3351
    %v3916 = vpack.c.bf16 %v3356, %v3352
    %v3917 = vpack.c.bf16 %v3357, %v3353
    %v3918 = vpack.c.bf16 %v3358, %v3354
    %v3919 = vpack.c.bf16 %v3363, %v3359
    %v3920 = vpack.c.bf16 %v3364, %v3360
    %v3921 = vpack.c.bf16 %v3365, %v3361
    %v3922 = vpack.c.bf16 %v3366, %v3362
    %v3923 = vpack.c.bf16 %v3371, %v3367
    %v3924 = vpack.c.bf16 %v3372, %v3368
    %v3925 = vpack.c.bf16 %v3373, %v3369
    %v3926 = vpack.c.bf16 %v3374, %v3370
    %v3927 = vpack.c.bf16 %v3379, %v3375
    %v3928 = vpack.c.bf16 %v3380, %v3376
    %v3929 = vpack.c.bf16 %v3381, %v3377
    %v3930 = vpack.c.bf16 %v3382, %v3378
    %v3931 = vpack.c.bf16 %v3387, %v3383
    %v3932 = vpack.c.bf16 %v3388, %v3384
    %v3933 = vpack.c.bf16 %v3389, %v3385
    %v3934 = vpack.c.bf16 %v3390, %v3386
    %v3935 = vpack.c.bf16 %v3395, %v3391
    %v3936 = vpack.c.bf16 %v3396, %v3392
    %v3937 = vpack.c.bf16 %v3397, %v3393
    %v3938 = vpack.c.bf16 %v3398, %v3394
    %v3939 = vpack.c.bf16 %v3403, %v3399
    %v3940 = vpack.c.bf16 %v3404, %v3400
    %v3941 = vpack.c.bf16 %v3405, %v3401
    %v3942 = vpack.c.bf16 %v3406, %v3402
    %v3943 = vpack.c.bf16 %v3411, %v3407
    %v3944 = vpack.c.bf16 %v3412, %v3408
    %v3945 = vpack.c.bf16 %v3413, %v3409
    %v3946 = vpack.c.bf16 %v3414, %v3410
    %v3947 = vpack.c.bf16 %v3419, %v3415
    %v3948 = vpack.c.bf16 %v3420, %v3416
    %v3949 = vpack.c.bf16 %v3421, %v3417
    %v3950 = vpack.c.bf16 %v3422, %v3418
    %v3951 = vpack.c.bf16 %v3427, %v3423
    %v3952 = vpack.c.bf16 %v3428, %v3424
    %v3953 = vpack.c.bf16 %v3429, %v3425
    %v3954 = vpack.c.bf16 %v3430, %v3426
    %v3955 = vpack.c.bf16 %v3435, %v3431
    %v3956 = vpack.c.bf16 %v3436, %v3432
    %v3957 = vpack.c.bf16 %v3437, %v3433
    %v3958 = vpack.c.bf16 %v3438, %v3434
    %v3959 = vpack.c.bf16 %v3443, %v3439
    %v3960 = vpack.c.bf16 %v3444, %v3440
    %v3961 = vpack.c.bf16 %v3445, %v3441
    %v3962 = vpack.c.bf16 %v3446, %v3442
    %v3963 = vpack.c.bf16 %v3451, %v3447
    %v3964 = vpack.c.bf16 %v3452, %v3448
    %v3965 = vpack.c.bf16 %v3453, %v3449
    %v3966 = vpack.c.bf16 %v3454, %v3450
    %v3967 = vld [vmem:[#allocation10] sm:$0xf]
    %v3969 = vlaneseq
    %v3970 = vshrl.u32 %v3969, 7
    %v3971 = vsub.s32 0, %v3970
    %v3972 = vrot.slane %v3967, %v3971
    %v3973 = vlaneseq
    %v3974 = vshrl.u32 %v3973, 7
    %v3975 = vsub.s32 1, %v3974
    %v3976 = vrot.slane %v3967, %v3975
    %v3977 = vlaneseq
    %v3978 = vshrl.u32 %v3977, 7
    %v3979 = vsub.s32 2, %v3978
    %v3980 = vrot.slane %v3967, %v3979
    %v3981 = vlaneseq
    %v3982 = vshrl.u32 %v3981, 7
    %v3983 = vsub.s32 3, %v3982
    %v3984 = vrot.slane %v3967, %v3983
    %3989 = vmatprep.subr.bf16.mxu0 %v3484
    %3990 = vmatpush1.bf16.msra.mxu0 %v3483
    %3991 = vmatprep.subr.bf16.mxu0 %v3480
    %3992 = vmatpush1.bf16.msra.mxu0 %v3479
    %3993 = vmatprep.subr.bf16.mxu0 %v3476
    %3994 = vmatpush1.bf16.msra.mxu0 %v3475
    %3995 = vmatprep.subr.bf16.mxu0 %v3472
    %3996 = vmatpush1.bf16.msra.mxu0 %v3471
    %3997 = vmatprep.subr.bf16.mxu0 %v3468
    %3998 = vmatpush1.bf16.msra.mxu0 %v3467
    %3999 = vmatprep.subr.bf16.mxu0 %v3464
    %4000 = vmatpush1.bf16.msra.mxu0 %v3463
    %4001 = vmatprep.subr.bf16.mxu0 %v3460
    %4002 = vmatpush1.bf16.msra.mxu0 %v3459
    %4003 = vmatprep.subr.bf16.mxu0 %v3456
    %4004 = vmatpush1.bf16.msra.mxu0 %v3455
    %4005 = vmatprep.subr.bf16.mxu0 %v3516
    %4006 = vmatpush2.bf16.msra.mxu0 %v3515
    %4007 = vmatprep.subr.bf16.mxu0 %v3512
    %4008 = vmatpush2.bf16.msra.mxu0 %v3511
    %4009 = vmatprep.subr.bf16.mxu0 %v3508
    %4010 = vmatpush2.bf16.msra.mxu0 %v3507
    %4011 = vmatprep.subr.bf16.mxu0 %v3504
    %4012 = vmatpush2.bf16.msra.mxu0 %v3503
    %4013 = vmatprep.subr.bf16.mxu0 %v3500
    %4014 = vmatpush2.bf16.msra.mxu0 %v3499
    %4015 = vmatprep.subr.bf16.mxu0 %v3496
    %4016 = vmatpush2.bf16.msra.mxu0 %v3495
    %4017 = vmatprep.subr.bf16.mxu0 %v3492
    %4018 = vmatpush2.bf16.msra.mxu0 %v3491
    %4019 = vmatprep.subr.bf16.mxu0 %v3488
    %4020 = vmatpush2.bf16.msra.mxu0 %v3487
    %4021 = vmatprep.mubr.bf16.mxu0 %v2416
    %4022 = vmatmul.mubr.bf16.gmra.mxu0 %v2415
    %v4023 = vpop.f32.mrf.mxu0
    %v4024 = vadd.f32 %v3972, %v4023
    %v4025 = vpop.f32.mrf.mxu0
    %v4026 = vadd.f32 %v3976, %v4025
    %v4027 = vpop.f32.mrf.mxu0
    %v4028 = vpop.f32.mrf.mxu0
    %4029 = vdwg.mxu0
    %4030 = vmatprep.subr.bf16.mxu0 %v3548
    %4031 = vmatpush1.bf16.msra.mxu0 %v3547
    %4032 = vmatprep.subr.bf16.mxu0 %v3544
    %4033 = vmatpush1.bf16.msra.mxu0 %v3543
    %4034 = vmatprep.subr.bf16.mxu0 %v3540
    %4035 = vmatpush1.bf16.msra.mxu0 %v3539
    %4036 = vmatprep.subr.bf16.mxu0 %v3536
    %4037 = vmatpush1.bf16.msra.mxu0 %v3535
    %4038 = vmatprep.subr.bf16.mxu0 %v3532
    %4039 = vmatpush1.bf16.msra.mxu0 %v3531
    %4040 = vmatprep.subr.bf16.mxu0 %v3528
    %4041 = vmatpush1.bf16.msra.mxu0 %v3527
    %4042 = vmatprep.subr.bf16.mxu0 %v3524
    %4043 = vmatpush1.bf16.msra.mxu0 %v3523
    %4044 = vmatprep.subr.bf16.mxu0 %v3520
    %4045 = vmatpush1.bf16.msra.mxu0 %v3519
    %4046 = vmatprep.subr.bf16.mxu0 %v3580
    %4047 = vmatpush2.bf16.msra.mxu0 %v3579
    %4048 = vmatprep.subr.bf16.mxu0 %v3576
    %4049 = vmatpush2.bf16.msra.mxu0 %v3575
    %4050 = vmatprep.subr.bf16.mxu0 %v3572
    %4051 = vmatpush2.bf16.msra.mxu0 %v3571
    %4052 = vmatprep.subr.bf16.mxu0 %v3568
    %4053 = vmatpush2.bf16.msra.mxu0 %v3567
    %4054 = vmatprep.subr.bf16.mxu0 %v3564
    %4055 = vmatpush2.bf16.msra.mxu0 %v3563
    %4056 = vmatprep.subr.bf16.mxu0 %v3560
    %4057 = vmatpush2.bf16.msra.mxu0 %v3559
    %4058 = vmatprep.subr.bf16.mxu0 %v3556
    %4059 = vmatpush2.bf16.msra.mxu0 %v3555
    %4060 = vmatprep.subr.bf16.mxu0 %v3552
    %4061 = vmatpush2.bf16.msra.mxu0 %v3551
    %4062 = vmatprep.mubr.bf16.mxu0 %v2418
    %4063 = vmatmul.mubr.bf16.gmra.mxu0 %v2417
    %v4064 = vpop.f32.mrf.mxu0
    %v4065 = vadd.f32 %v4024, %v4064
    %v4066 = vpop.f32.mrf.mxu0
    %v4067 = vadd.f32 %v4026, %v4066
    %v4068 = vpop.f32.mrf.mxu0
    %v4069 = vpop.f32.mrf.mxu0
    %4070 = vdwg.mxu0
    %4071 = vmatprep.subr.bf16.mxu0 %v3612
    %4072 = vmatpush1.bf16.msra.mxu0 %v3611
    %4073 = vmatprep.subr.bf16.mxu0 %v3608
    %4074 = vmatpush1.bf16.msra.mxu0 %v3607
    %4075 = vmatprep.subr.bf16.mxu0 %v3604
    %4076 = vmatpush1.bf16.msra.mxu0 %v3603
    %4077 = vmatprep.subr.bf16.mxu0 %v3600
    %4078 = vmatpush1.bf16.msra.mxu0 %v3599
    %4079 = vmatprep.subr.bf16.mxu0 %v3596
    %4080 = vmatpush1.bf16.msra.mxu0 %v3595
    %4081 = vmatprep.subr.bf16.mxu0 %v3592
    %4082 = vmatpush1.bf16.msra.mxu0 %v3591
    %4083 = vmatprep.subr.bf16.mxu0 %v3588
    %4084 = vmatpush1.bf16.msra.mxu0 %v3587
    %4085 = vmatprep.subr.bf16.mxu0 %v3584
    %4086 = vmatpush1.bf16.msra.mxu0 %v3583
    %4087 = vmatprep.subr.bf16.mxu0 %v3644
    %4088 = vmatpush2.bf16.msra.mxu0 %v3643
    %4089 = vmatprep.subr.bf16.mxu0 %v3640
    %4090 = vmatpush2.bf16.msra.mxu0 %v3639
    %4091 = vmatprep.subr.bf16.mxu0 %v3636
    %4092 = vmatpush2.bf16.msra.mxu0 %v3635
    %4093 = vmatprep.subr.bf16.mxu0 %v3632
    %4094 = vmatpush2.bf16.msra.mxu0 %v3631
    %4095 = vmatprep.subr.bf16.mxu0 %v3628
    %4096 = vmatpush2.bf16.msra.mxu0 %v3627
    %4097 = vmatprep.subr.bf16.mxu0 %v3624
    %4098 = vmatpush2.bf16.msra.mxu0 %v3623
    %4099 = vmatprep.subr.bf16.mxu0 %v3620
    %4100 = vmatpush2.bf16.msra.mxu0 %v3619
    %4101 = vmatprep.subr.bf16.mxu0 %v3616
    %4102 = vmatpush2.bf16.msra.mxu0 %v3615
    %4103 = vmatprep.mubr.bf16.mxu0 %v2420
    %4104 = vmatmul.mubr.bf16.gmra.mxu0 %v2419
    %v4105 = vpop.f32.mrf.mxu0
    %v4106 = vadd.f32 %v4065, %v4105
    %v4107 = vpop.f32.mrf.mxu0
    %v4108 = vadd.f32 %v4067, %v4107
    %v4109 = vpop.f32.mrf.mxu0
    %v4110 = vpop.f32.mrf.mxu0
    %4111 = vdwg.mxu0
    %4112 = vmatprep.subr.bf16.mxu0 %v3676
    %4113 = vmatpush1.bf16.msra.mxu0 %v3675
    %4114 = vmatprep.subr.bf16.mxu0 %v3672
    %4115 = vmatpush1.bf16.msra.mxu0 %v3671
    %4116 = vmatprep.subr.bf16.mxu0 %v3668
    %4117 = vmatpush1.bf16.msra.mxu0 %v3667
    %4118 = vmatprep.subr.bf16.mxu0 %v3664
    %4119 = vmatpush1.bf16.msra.mxu0 %v3663
    %4120 = vmatprep.subr.bf16.mxu0 %v3660
    %4121 = vmatpush1.bf16.msra.mxu0 %v3659
    %4122 = vmatprep.subr.bf16.mxu0 %v3656
    %4123 = vmatpush1.bf16.msra.mxu0 %v3655
    %4124 = vmatprep.subr.bf16.mxu0 %v3652
    %4125 = vmatpush1.bf16.msra.mxu0 %v3651
    %4126 = vmatprep.subr.bf16.mxu0 %v3648
    %4127 = vmatpush1.bf16.msra.mxu0 %v3647
    %4128 = vmatprep.subr.bf16.mxu0 %v3708
    %4129 = vmatpush2.bf16.msra.mxu0 %v3707
    %4130 = vmatprep.subr.bf16.mxu0 %v3704
    %4131 = vmatpush2.bf16.msra.mxu0 %v3703
    %4132 = vmatprep.subr.bf16.mxu0 %v3700
    %4133 = vmatpush2.bf16.msra.mxu0 %v3699
    %4134 = vmatprep.subr.bf16.mxu0 %v3696
    %4135 = vmatpush2.bf16.msra.mxu0 %v3695
    %4136 = vmatprep.subr.bf16.mxu0 %v3692
    %4137 = vmatpush2.bf16.msra.mxu0 %v3691
    %4138 = vmatprep.subr.bf16.mxu0 %v3688
    %4139 = vmatpush2.bf16.msra.mxu0 %v3687
    %4140 = vmatprep.subr.bf16.mxu0 %v3684
    %4141 = vmatpush2.bf16.msra.mxu0 %v3683
    %4142 = vmatprep.subr.bf16.mxu0 %v3680
    %4143 = vmatpush2.bf16.msra.mxu0 %v3679
    %4144 = vmatprep.mubr.bf16.mxu0 %v2422
    %4145 = vmatmul.mubr.bf16.gmra.mxu0 %v2421
    %v4146 = vpop.f32.mrf.mxu0
    %v4147 = vadd.f32 %v4106, %v4146
    %v4148 = vpop.f32.mrf.mxu0
    %v4149 = vadd.f32 %v4108, %v4148
    %v4150 = vpop.f32.mrf.mxu0
    %v4151 = vpop.f32.mrf.mxu0
    %4152 = vdwg.mxu0
    %4153 = vmatprep.subr.bf16.mxu0 %v3740
    %4154 = vmatpush1.bf16.msra.mxu0 %v3739
    %4155 = vmatprep.subr.bf16.mxu0 %v3736
    %4156 = vmatpush1.bf16.msra.mxu0 %v3735
    %4157 = vmatprep.subr.bf16.mxu0 %v3732
    %4158 = vmatpush1.bf16.msra.mxu0 %v3731
    %4159 = vmatprep.subr.bf16.mxu0 %v3728
    %4160 = vmatpush1.bf16.msra.mxu0 %v3727
    %4161 = vmatprep.subr.bf16.mxu0 %v3724
    %4162 = vmatpush1.bf16.msra.mxu0 %v3723
    %4163 = vmatprep.subr.bf16.mxu0 %v3720
    %4164 = vmatpush1.bf16.msra.mxu0 %v3719
    %4165 = vmatprep.subr.bf16.mxu0 %v3716
    %4166 = vmatpush1.bf16.msra.mxu0 %v3715
    %4167 = vmatprep.subr.bf16.mxu0 %v3712
    %4168 = vmatpush1.bf16.msra.mxu0 %v3711
    %4169 = vmatprep.subr.bf16.mxu0 %v3772
    %4170 = vmatpush2.bf16.msra.mxu0 %v3771
    %4171 = vmatprep.subr.bf16.mxu0 %v3768
    %4172 = vmatpush2.bf16.msra.mxu0 %v3767
    %4173 = vmatprep.subr.bf16.mxu0 %v3764
    %4174 = vmatpush2.bf16.msra.mxu0 %v3763
    %4175 = vmatprep.subr.bf16.mxu0 %v3760
    %4176 = vmatpush2.bf16.msra.mxu0 %v3759
    %4177 = vmatprep.subr.bf16.mxu0 %v3756
    %4178 = vmatpush2.bf16.msra.mxu0 %v3755
    %4179 = vmatprep.subr.bf16.mxu0 %v3752
    %4180 = vmatpush2.bf16.msra.mxu0 %v3751
    %4181 = vmatprep.subr.bf16.mxu0 %v3748
    %4182 = vmatpush2.bf16.msra.mxu0 %v3747
    %4183 = vmatprep.subr.bf16.mxu0 %v3744
    %4184 = vmatpush2.bf16.msra.mxu0 %v3743
    %4185 = vmatprep.mubr.bf16.mxu0 %v2424
    %4186 = vmatmul.mubr.bf16.gmra.mxu0 %v2423
    %v4187 = vpop.f32.mrf.mxu0
    %v4188 = vadd.f32 %v4147, %v4187
    %v4189 = vpop.f32.mrf.mxu0
    %v4190 = vadd.f32 %v4149, %v4189
    %v4191 = vpop.f32.mrf.mxu0
    %v4192 = vpop.f32.mrf.mxu0
    %4193 = vdwg.mxu0
    %4194 = vmatprep.subr.bf16.mxu0 %v3804
    %4195 = vmatpush1.bf16.msra.mxu0 %v3803
    %4196 = vmatprep.subr.bf16.mxu0 %v3800
    %4197 = vmatpush1.bf16.msra.mxu0 %v3799
    %4198 = vmatprep.subr.bf16.mxu0 %v3796
    %4199 = vmatpush1.bf16.msra.mxu0 %v3795
    %4200 = vmatprep.subr.bf16.mxu0 %v3792
    %4201 = vmatpush1.bf16.msra.mxu0 %v3791
    %4202 = vmatprep.subr.bf16.mxu0 %v3788
    %4203 = vmatpush1.bf16.msra.mxu0 %v3787
    %4204 = vmatprep.subr.bf16.mxu0 %v3784
    %4205 = vmatpush1.bf16.msra.mxu0 %v3783
    %4206 = vmatprep.subr.bf16.mxu0 %v3780
    %4207 = vmatpush1.bf16.msra.mxu0 %v3779
    %4208 = vmatprep.subr.bf16.mxu0 %v3776
    %4209 = vmatpush1.bf16.msra.mxu0 %v3775
    %4210 = vmatprep.subr.bf16.mxu0 %v3836
    %4211 = vmatpush2.bf16.msra.mxu0 %v3835
    %4212 = vmatprep.subr.bf16.mxu0 %v3832
    %4213 = vmatpush2.bf16.msra.mxu0 %v3831
    %4214 = vmatprep.subr.bf16.mxu0 %v3828
    %4215 = vmatpush2.bf16.msra.mxu0 %v3827
    %4216 = vmatprep.subr.bf16.mxu0 %v3824
    %4217 = vmatpush2.bf16.msra.mxu0 %v3823
    %4218 = vmatprep.subr.bf16.mxu0 %v3820
    %4219 = vmatpush2.bf16.msra.mxu0 %v3819
    %4220 = vmatprep.subr.bf16.mxu0 %v3816
    %4221 = vmatpush2.bf16.msra.mxu0 %v3815
    %4222 = vmatprep.subr.bf16.mxu0 %v3812
    %4223 = vmatpush2.bf16.msra.mxu0 %v3811
    %4224 = vmatprep.subr.bf16.mxu0 %v3808
    %4225 = vmatpush2.bf16.msra.mxu0 %v3807
    %4226 = vmatprep.mubr.bf16.mxu0 %v2426
    %4227 = vmatmul.mubr.bf16.gmra.mxu0 %v2425
    %v4228 = vpop.f32.mrf.mxu0
    %v4229 = vadd.f32 %v4188, %v4228
    %v4230 = vpop.f32.mrf.mxu0
    %v4231 = vadd.f32 %v4190, %v4230
    %v4232 = vpop.f32.mrf.mxu0
    %v4233 = vpop.f32.mrf.mxu0
    %4234 = vdwg.mxu0
    %4235 = vmatprep.subr.bf16.mxu0 %v3868
    %4236 = vmatpush1.bf16.msra.mxu0 %v3867
    %4237 = vmatprep.subr.bf16.mxu0 %v3864
    %4238 = vmatpush1.bf16.msra.mxu0 %v3863
    %4239 = vmatprep.subr.bf16.mxu0 %v3860
    %4240 = vmatpush1.bf16.msra.mxu0 %v3859
    %4241 = vmatprep.subr.bf16.mxu0 %v3856
    %4242 = vmatpush1.bf16.msra.mxu0 %v3855
    %4243 = vmatprep.subr.bf16.mxu0 %v3852
    %4244 = vmatpush1.bf16.msra.mxu0 %v3851
    %4245 = vmatprep.subr.bf16.mxu0 %v3848
    %4246 = vmatpush1.bf16.msra.mxu0 %v3847
    %4247 = vmatprep.subr.bf16.mxu0 %v3844
    %4248 = vmatpush1.bf16.msra.mxu0 %v3843
    %4249 = vmatprep.subr.bf16.mxu0 %v3840
    %4250 = vmatpush1.bf16.msra.mxu0 %v3839
    %4251 = vmatprep.subr.bf16.mxu0 %v3900
    %4252 = vmatpush2.bf16.msra.mxu0 %v3899
    %4253 = vmatprep.subr.bf16.mxu0 %v3896
    %4254 = vmatpush2.bf16.msra.mxu0 %v3895
    %4255 = vmatprep.subr.bf16.mxu0 %v3892
    %4256 = vmatpush2.bf16.msra.mxu0 %v3891
    %4257 = vmatprep.subr.bf16.mxu0 %v3888
    %4258 = vmatpush2.bf16.msra.mxu0 %v3887
    %4259 = vmatprep.subr.bf16.mxu0 %v3884
    %4260 = vmatpush2.bf16.msra.mxu0 %v3883
    %4261 = vmatprep.subr.bf16.mxu0 %v3880
    %4262 = vmatpush2.bf16.msra.mxu0 %v3879
    %4263 = vmatprep.subr.bf16.mxu0 %v3876
    %4264 = vmatpush2.bf16.msra.mxu0 %v3875
    %4265 = vmatprep.subr.bf16.mxu0 %v3872
    %4266 = vmatpush2.bf16.msra.mxu0 %v3871
    %4267 = vmatprep.mubr.bf16.mxu0 %v2428
    %4268 = vmatmul.mubr.bf16.gmra.mxu0 %v2427
    %v4269 = vpop.f32.mrf.mxu0
    %v4270 = vadd.f32 %v4229, %v4269
    %v4271 = vpop.f32.mrf.mxu0
    %v4272 = vadd.f32 %v4231, %v4271
    %v4273 = vpop.f32.mrf.mxu0
    %v4274 = vpop.f32.mrf.mxu0
    %4275 = vdwg.mxu0
    %4276 = vmatprep.subr.bf16.mxu0 %v3932
    %4277 = vmatpush1.bf16.msra.mxu0 %v3931
    %4278 = vmatprep.subr.bf16.mxu0 %v3928
    %4279 = vmatpush1.bf16.msra.mxu0 %v3927
    %4280 = vmatprep.subr.bf16.mxu0 %v3924
    %4281 = vmatpush1.bf16.msra.mxu0 %v3923
    %4282 = vmatprep.subr.bf16.mxu0 %v3920
    %4283 = vmatpush1.bf16.msra.mxu0 %v3919
    %4284 = vmatprep.subr.bf16.mxu0 %v3916
    %4285 = vmatpush1.bf16.msra.mxu0 %v3915
    %4286 = vmatprep.subr.bf16.mxu0 %v3912
    %4287 = vmatpush1.bf16.msra.mxu0 %v3911
    %4288 = vmatprep.subr.bf16.mxu0 %v3908
    %4289 = vmatpush1.bf16.msra.mxu0 %v3907
    %4290 = vmatprep.subr.bf16.mxu0 %v3904
    %4291 = vmatpush1.bf16.msra.mxu0 %v3903
    %4292 = vmatprep.subr.bf16.mxu0 %v3964
    %4293 = vmatpush2.bf16.msra.mxu0 %v3963
    %4294 = vmatprep.subr.bf16.mxu0 %v3960
    %4295 = vmatpush2.bf16.msra.mxu0 %v3959
    %4296 = vmatprep.subr.bf16.mxu0 %v3956
    %4297 = vmatpush2.bf16.msra.mxu0 %v3955
    %4298 = vmatprep.subr.bf16.mxu0 %v3952
    %4299 = vmatpush2.bf16.msra.mxu0 %v3951
    %4300 = vmatprep.subr.bf16.mxu0 %v3948
    %4301 = vmatpush2.bf16.msra.mxu0 %v3947
    %4302 = vmatprep.subr.bf16.mxu0 %v3944
    %4303 = vmatpush2.bf16.msra.mxu0 %v3943
    %4304 = vmatprep.subr.bf16.mxu0 %v3940
    %4305 = vmatpush2.bf16.msra.mxu0 %v3939
    %4306 = vmatprep.subr.bf16.mxu0 %v3936
    %4307 = vmatpush2.bf16.msra.mxu0 %v3935
    %4308 = vmatprep.mubr.bf16.mxu0 %v2430
    %4309 = vmatmul.mubr.bf16.gmra.mxu0 %v2429
    %v4310 = vpop.f32.mrf.mxu0
    %v4311 = vadd.f32 %v4270, %v4310
    %v4312 = vpop.f32.mrf.mxu0
    %v4313 = vadd.f32 %v4272, %v4312
    %v4314 = vpop.f32.mrf.mxu0
    %v4315 = vpop.f32.mrf.mxu0
    %4316 = vdwg.mxu0
    %4317 = vmatprep.subr.bf16.mxu0 %v3486
    %4318 = vmatpush1.bf16.msra.mxu0 %v3485
    %4319 = vmatprep.subr.bf16.mxu0 %v3482
    %4320 = vmatpush1.bf16.msra.mxu0 %v3481
    %4321 = vmatprep.subr.bf16.mxu0 %v3478
    %4322 = vmatpush1.bf16.msra.mxu0 %v3477
    %4323 = vmatprep.subr.bf16.mxu0 %v3474
    %4324 = vmatpush1.bf16.msra.mxu0 %v3473
    %4325 = vmatprep.subr.bf16.mxu0 %v3470
    %4326 = vmatpush1.bf16.msra.mxu0 %v3469
    %4327 = vmatprep.subr.bf16.mxu0 %v3466
    %4328 = vmatpush1.bf16.msra.mxu0 %v3465
    %4329 = vmatprep.subr.bf16.mxu0 %v3462
    %4330 = vmatpush1.bf16.msra.mxu0 %v3461
    %4331 = vmatprep.subr.bf16.mxu0 %v3458
    %4332 = vmatpush1.bf16.msra.mxu0 %v3457
    %4333 = vmatprep.subr.bf16.mxu0 %v3518
    %4334 = vmatpush2.bf16.msra.mxu0 %v3517
    %4335 = vmatprep.subr.bf16.mxu0 %v3514
    %4336 = vmatpush2.bf16.msra.mxu0 %v3513
    %4337 = vmatprep.subr.bf16.mxu0 %v3510
    %4338 = vmatpush2.bf16.msra.mxu0 %v3509
    %4339 = vmatprep.subr.bf16.mxu0 %v3506
    %4340 = vmatpush2.bf16.msra.mxu0 %v3505
    %4341 = vmatprep.subr.bf16.mxu0 %v3502
    %4342 = vmatpush2.bf16.msra.mxu0 %v3501
    %4343 = vmatprep.subr.bf16.mxu0 %v3498
    %4344 = vmatpush2.bf16.msra.mxu0 %v3497
    %4345 = vmatprep.subr.bf16.mxu0 %v3494
    %4346 = vmatpush2.bf16.msra.mxu0 %v3493
    %4347 = vmatprep.subr.bf16.mxu0 %v3490
    %4348 = vmatpush2.bf16.msra.mxu0 %v3489
    %4349 = vmatprep.mubr.bf16.mxu0 %v2416
    %4350 = vmatmul.mubr.bf16.gmra.mxu0 %v2415
    %v4351 = vpop.f32.mrf.mxu0
    %v4352 = vadd.f32 %v3980, %v4351
    %v4353 = vpop.f32.mrf.mxu0
    %v4354 = vadd.f32 %v3984, %v4353
    %v4355 = vpop.f32.mrf.mxu0
    %v4356 = vpop.f32.mrf.mxu0
    %4357 = vdwg.mxu0
    %4358 = vmatprep.subr.bf16.mxu0 %v3550
    %4359 = vmatpush1.bf16.msra.mxu0 %v3549
    %4360 = vmatprep.subr.bf16.mxu0 %v3546
    %4361 = vmatpush1.bf16.msra.mxu0 %v3545
    %4362 = vmatprep.subr.bf16.mxu0 %v3542
    %4363 = vmatpush1.bf16.msra.mxu0 %v3541
    %4364 = vmatprep.subr.bf16.mxu0 %v3538
    %4365 = vmatpush1.bf16.msra.mxu0 %v3537
    %4366 = vmatprep.subr.bf16.mxu0 %v3534
    %4367 = vmatpush1.bf16.msra.mxu0 %v3533
    %4368 = vmatprep.subr.bf16.mxu0 %v3530
    %4369 = vmatpush1.bf16.msra.mxu0 %v3529
    %4370 = vmatprep.subr.bf16.mxu0 %v3526
    %4371 = vmatpush1.bf16.msra.mxu0 %v3525
    %4372 = vmatprep.subr.bf16.mxu0 %v3522
    %4373 = vmatpush1.bf16.msra.mxu0 %v3521
    %4374 = vmatprep.subr.bf16.mxu0 %v3582
    %4375 = vmatpush2.bf16.msra.mxu0 %v3581
    %4376 = vmatprep.subr.bf16.mxu0 %v3578
    %4377 = vmatpush2.bf16.msra.mxu0 %v3577
    %4378 = vmatprep.subr.bf16.mxu0 %v3574
    %4379 = vmatpush2.bf16.msra.mxu0 %v3573
    %4380 = vmatprep.subr.bf16.mxu0 %v3570
    %4381 = vmatpush2.bf16.msra.mxu0 %v3569
    %4382 = vmatprep.subr.bf16.mxu0 %v3566
    %4383 = vmatpush2.bf16.msra.mxu0 %v3565
    %4384 = vmatprep.subr.bf16.mxu0 %v3562
    %4385 = vmatpush2.bf16.msra.mxu0 %v3561
    %4386 = vmatprep.subr.bf16.mxu0 %v3558
    %4387 = vmatpush2.bf16.msra.mxu0 %v3557
    %4388 = vmatprep.subr.bf16.mxu0 %v3554
    %4389 = vmatpush2.bf16.msra.mxu0 %v3553
    %4390 = vmatprep.mubr.bf16.mxu0 %v2418
    %4391 = vmatmul.mubr.bf16.gmra.mxu0 %v2417
    %v4392 = vpop.f32.mrf.mxu0
    %v4393 = vadd.f32 %v4352, %v4392
    %v4394 = vpop.f32.mrf.mxu0
    %v4395 = vadd.f32 %v4354, %v4394
    %v4396 = vpop.f32.mrf.mxu0
    %v4397 = vpop.f32.mrf.mxu0
    %4398 = vdwg.mxu0
    %4399 = vmatprep.subr.bf16.mxu0 %v3614
    %4400 = vmatpush1.bf16.msra.mxu0 %v3613
    %4401 = vmatprep.subr.bf16.mxu0 %v3610
    %4402 = vmatpush1.bf16.msra.mxu0 %v3609
    %4403 = vmatprep.subr.bf16.mxu0 %v3606
    %4404 = vmatpush1.bf16.msra.mxu0 %v3605
    %4405 = vmatprep.subr.bf16.mxu0 %v3602
    %4406 = vmatpush1.bf16.msra.mxu0 %v3601
    %4407 = vmatprep.subr.bf16.mxu0 %v3598
    %4408 = vmatpush1.bf16.msra.mxu0 %v3597
    %4409 = vmatprep.subr.bf16.mxu0 %v3594
    %4410 = vmatpush1.bf16.msra.mxu0 %v3593
    %4411 = vmatprep.subr.bf16.mxu0 %v3590
    %4412 = vmatpush1.bf16.msra.mxu0 %v3589
    %4413 = vmatprep.subr.bf16.mxu0 %v3586
    %4414 = vmatpush1.bf16.msra.mxu0 %v3585
    %4415 = vmatprep.subr.bf16.mxu0 %v3646
    %4416 = vmatpush2.bf16.msra.mxu0 %v3645
    %4417 = vmatprep.subr.bf16.mxu0 %v3642
    %4418 = vmatpush2.bf16.msra.mxu0 %v3641
    %4419 = vmatprep.subr.bf16.mxu0 %v3638
    %4420 = vmatpush2.bf16.msra.mxu0 %v3637
    %4421 = vmatprep.subr.bf16.mxu0 %v3634
    %4422 = vmatpush2.bf16.msra.mxu0 %v3633
    %4423 = vmatprep.subr.bf16.mxu0 %v3630
    %4424 = vmatpush2.bf16.msra.mxu0 %v3629
    %4425 = vmatprep.subr.bf16.mxu0 %v3626
    %4426 = vmatpush2.bf16.msra.mxu0 %v3625
    %4427 = vmatprep.subr.bf16.mxu0 %v3622
    %4428 = vmatpush2.bf16.msra.mxu0 %v3621
    %4429 = vmatprep.subr.bf16.mxu0 %v3618
    %4430 = vmatpush2.bf16.msra.mxu0 %v3617
    %4431 = vmatprep.mubr.bf16.mxu0 %v2420
    %4432 = vmatmul.mubr.bf16.gmra.mxu0 %v2419
    %v4433 = vpop.f32.mrf.mxu0
    %v4434 = vadd.f32 %v4393, %v4433
    %v4435 = vpop.f32.mrf.mxu0
    %v4436 = vadd.f32 %v4395, %v4435
    %v4437 = vpop.f32.mrf.mxu0
    %v4438 = vpop.f32.mrf.mxu0
    %4439 = vdwg.mxu0
    %4440 = vmatprep.subr.bf16.mxu0 %v3678
    %4441 = vmatpush1.bf16.msra.mxu0 %v3677
    %4442 = vmatprep.subr.bf16.mxu0 %v3674
    %4443 = vmatpush1.bf16.msra.mxu0 %v3673
    %4444 = vmatprep.subr.bf16.mxu0 %v3670
    %4445 = vmatpush1.bf16.msra.mxu0 %v3669
    %4446 = vmatprep.subr.bf16.mxu0 %v3666
    %4447 = vmatpush1.bf16.msra.mxu0 %v3665
    %4448 = vmatprep.subr.bf16.mxu0 %v3662
    %4449 = vmatpush1.bf16.msra.mxu0 %v3661
    %4450 = vmatprep.subr.bf16.mxu0 %v3658
    %4451 = vmatpush1.bf16.msra.mxu0 %v3657
    %4452 = vmatprep.subr.bf16.mxu0 %v3654
    %4453 = vmatpush1.bf16.msra.mxu0 %v3653
    %4454 = vmatprep.subr.bf16.mxu0 %v3650
    %4455 = vmatpush1.bf16.msra.mxu0 %v3649
    %4456 = vmatprep.subr.bf16.mxu0 %v3710
    %4457 = vmatpush2.bf16.msra.mxu0 %v3709
    %4458 = vmatprep.subr.bf16.mxu0 %v3706
    %4459 = vmatpush2.bf16.msra.mxu0 %v3705
    %4460 = vmatprep.subr.bf16.mxu0 %v3702
    %4461 = vmatpush2.bf16.msra.mxu0 %v3701
    %4462 = vmatprep.subr.bf16.mxu0 %v3698
    %4463 = vmatpush2.bf16.msra.mxu0 %v3697
    %4464 = vmatprep.subr.bf16.mxu0 %v3694
    %4465 = vmatpush2.bf16.msra.mxu0 %v3693
    %4466 = vmatprep.subr.bf16.mxu0 %v3690
    %4467 = vmatpush2.bf16.msra.mxu0 %v3689
    %4468 = vmatprep.subr.bf16.mxu0 %v3686
    %4469 = vmatpush2.bf16.msra.mxu0 %v3685
    %4470 = vmatprep.subr.bf16.mxu0 %v3682
    %4471 = vmatpush2.bf16.msra.mxu0 %v3681
    %4472 = vmatprep.mubr.bf16.mxu0 %v2422
    %4473 = vmatmul.mubr.bf16.gmra.mxu0 %v2421
    %v4474 = vpop.f32.mrf.mxu0
    %v4475 = vadd.f32 %v4434, %v4474
    %v4476 = vpop.f32.mrf.mxu0
    %v4477 = vadd.f32 %v4436, %v4476
    %v4478 = vpop.f32.mrf.mxu0
    %v4479 = vpop.f32.mrf.mxu0
    %4480 = vdwg.mxu0
    %4481 = vmatprep.subr.bf16.mxu0 %v3742
    %4482 = vmatpush1.bf16.msra.mxu0 %v3741
    %4483 = vmatprep.subr.bf16.mxu0 %v3738
    %4484 = vmatpush1.bf16.msra.mxu0 %v3737
    %4485 = vmatprep.subr.bf16.mxu0 %v3734
    %4486 = vmatpush1.bf16.msra.mxu0 %v3733
    %4487 = vmatprep.subr.bf16.mxu0 %v3730
    %4488 = vmatpush1.bf16.msra.mxu0 %v3729
    %4489 = vmatprep.subr.bf16.mxu0 %v3726
    %4490 = vmatpush1.bf16.msra.mxu0 %v3725
    %4491 = vmatprep.subr.bf16.mxu0 %v3722
    %4492 = vmatpush1.bf16.msra.mxu0 %v3721
    %4493 = vmatprep.subr.bf16.mxu0 %v3718
    %4494 = vmatpush1.bf16.msra.mxu0 %v3717
    %4495 = vmatprep.subr.bf16.mxu0 %v3714
    %4496 = vmatpush1.bf16.msra.mxu0 %v3713
    %4497 = vmatprep.subr.bf16.mxu0 %v3774
    %4498 = vmatpush2.bf16.msra.mxu0 %v3773
    %4499 = vmatprep.subr.bf16.mxu0 %v3770
    %4500 = vmatpush2.bf16.msra.mxu0 %v3769
    %4501 = vmatprep.subr.bf16.mxu0 %v3766
    %4502 = vmatpush2.bf16.msra.mxu0 %v3765
    %4503 = vmatprep.subr.bf16.mxu0 %v3762
    %4504 = vmatpush2.bf16.msra.mxu0 %v3761
    %4505 = vmatprep.subr.bf16.mxu0 %v3758
    %4506 = vmatpush2.bf16.msra.mxu0 %v3757
    %4507 = vmatprep.subr.bf16.mxu0 %v3754
    %4508 = vmatpush2.bf16.msra.mxu0 %v3753
    %4509 = vmatprep.subr.bf16.mxu0 %v3750
    %4510 = vmatpush2.bf16.msra.mxu0 %v3749
    %4511 = vmatprep.subr.bf16.mxu0 %v3746
    %4512 = vmatpush2.bf16.msra.mxu0 %v3745
    %4513 = vmatprep.mubr.bf16.mxu0 %v2424
    %4514 = vmatmul.mubr.bf16.gmra.mxu0 %v2423
    %v4515 = vpop.f32.mrf.mxu0
    %v4516 = vadd.f32 %v4475, %v4515
    %v4517 = vpop.f32.mrf.mxu0
    %v4518 = vadd.f32 %v4477, %v4517
    %v4519 = vpop.f32.mrf.mxu0
    %v4520 = vpop.f32.mrf.mxu0
    %4521 = vdwg.mxu0
    %4522 = vmatprep.subr.bf16.mxu0 %v3806
    %4523 = vmatpush1.bf16.msra.mxu0 %v3805
    %4524 = vmatprep.subr.bf16.mxu0 %v3802
    %4525 = vmatpush1.bf16.msra.mxu0 %v3801
    %4526 = vmatprep.subr.bf16.mxu0 %v3798
    %4527 = vmatpush1.bf16.msra.mxu0 %v3797
    %4528 = vmatprep.subr.bf16.mxu0 %v3794
    %4529 = vmatpush1.bf16.msra.mxu0 %v3793
    %4530 = vmatprep.subr.bf16.mxu0 %v3790
    %4531 = vmatpush1.bf16.msra.mxu0 %v3789
    %4532 = vmatprep.subr.bf16.mxu0 %v3786
    %4533 = vmatpush1.bf16.msra.mxu0 %v3785
    %4534 = vmatprep.subr.bf16.mxu0 %v3782
    %4535 = vmatpush1.bf16.msra.mxu0 %v3781
    %4536 = vmatprep.subr.bf16.mxu0 %v3778
    %4537 = vmatpush1.bf16.msra.mxu0 %v3777
    %4538 = vmatprep.subr.bf16.mxu0 %v3838
    %4539 = vmatpush2.bf16.msra.mxu0 %v3837
    %4540 = vmatprep.subr.bf16.mxu0 %v3834
    %4541 = vmatpush2.bf16.msra.mxu0 %v3833
    %4542 = vmatprep.subr.bf16.mxu0 %v3830
    %4543 = vmatpush2.bf16.msra.mxu0 %v3829
    %4544 = vmatprep.subr.bf16.mxu0 %v3826
    %4545 = vmatpush2.bf16.msra.mxu0 %v3825
    %4546 = vmatprep.subr.bf16.mxu0 %v3822
    %4547 = vmatpush2.bf16.msra.mxu0 %v3821
    %4548 = vmatprep.subr.bf16.mxu0 %v3818
    %4549 = vmatpush2.bf16.msra.mxu0 %v3817
    %4550 = vmatprep.subr.bf16.mxu0 %v3814
    %4551 = vmatpush2.bf16.msra.mxu0 %v3813
    %4552 = vmatprep.subr.bf16.mxu0 %v3810
    %4553 = vmatpush2.bf16.msra.mxu0 %v3809
    %4554 = vmatprep.mubr.bf16.mxu0 %v2426
    %4555 = vmatmul.mubr.bf16.gmra.mxu0 %v2425
    %v4556 = vpop.f32.mrf.mxu0
    %v4557 = vadd.f32 %v4516, %v4556
    %v4558 = vpop.f32.mrf.mxu0
    %v4559 = vadd.f32 %v4518, %v4558
    %v4560 = vpop.f32.mrf.mxu0
    %v4561 = vpop.f32.mrf.mxu0
    %4562 = vdwg.mxu0
    %4563 = vmatprep.subr.bf16.mxu0 %v3870
    %4564 = vmatpush1.bf16.msra.mxu0 %v3869
    %4565 = vmatprep.subr.bf16.mxu0 %v3866
    %4566 = vmatpush1.bf16.msra.mxu0 %v3865
    %4567 = vmatprep.subr.bf16.mxu0 %v3862
    %4568 = vmatpush1.bf16.msra.mxu0 %v3861
    %4569 = vmatprep.subr.bf16.mxu0 %v3858
    %4570 = vmatpush1.bf16.msra.mxu0 %v3857
    %4571 = vmatprep.subr.bf16.mxu0 %v3854
    %4572 = vmatpush1.bf16.msra.mxu0 %v3853
    %4573 = vmatprep.subr.bf16.mxu0 %v3850
    %4574 = vmatpush1.bf16.msra.mxu0 %v3849
    %4575 = vmatprep.subr.bf16.mxu0 %v3846
    %4576 = vmatpush1.bf16.msra.mxu0 %v3845
    %4577 = vmatprep.subr.bf16.mxu0 %v3842
    %4578 = vmatpush1.bf16.msra.mxu0 %v3841
    %4579 = vmatprep.subr.bf16.mxu0 %v3902
    %4580 = vmatpush2.bf16.msra.mxu0 %v3901
    %4581 = vmatprep.subr.bf16.mxu0 %v3898
    %4582 = vmatpush2.bf16.msra.mxu0 %v3897
    %4583 = vmatprep.subr.bf16.mxu0 %v3894
    %4584 = vmatpush2.bf16.msra.mxu0 %v3893
    %4585 = vmatprep.subr.bf16.mxu0 %v3890
    %4586 = vmatpush2.bf16.msra.mxu0 %v3889
    %4587 = vmatprep.subr.bf16.mxu0 %v3886
    %4588 = vmatpush2.bf16.msra.mxu0 %v3885
    %4589 = vmatprep.subr.bf16.mxu0 %v3882
    %4590 = vmatpush2.bf16.msra.mxu0 %v3881
    %4591 = vmatprep.subr.bf16.mxu0 %v3878
    %4592 = vmatpush2.bf16.msra.mxu0 %v3877
    %4593 = vmatprep.subr.bf16.mxu0 %v3874
    %4594 = vmatpush2.bf16.msra.mxu0 %v3873
    %4595 = vmatprep.mubr.bf16.mxu0 %v2428
    %4596 = vmatmul.mubr.bf16.gmra.mxu0 %v2427
    %v4597 = vpop.f32.mrf.mxu0
    %v4598 = vadd.f32 %v4557, %v4597
    %v4599 = vpop.f32.mrf.mxu0
    %v4600 = vadd.f32 %v4559, %v4599
    %v4601 = vpop.f32.mrf.mxu0
    %v4602 = vpop.f32.mrf.mxu0
    %4603 = vdwg.mxu0
    %4604 = vmatprep.subr.bf16.mxu0 %v3934
    %4605 = vmatpush1.bf16.msra.mxu0 %v3933
    %4606 = vmatprep.subr.bf16.mxu0 %v3930
    %4607 = vmatpush1.bf16.msra.mxu0 %v3929
    %4608 = vmatprep.subr.bf16.mxu0 %v3926
    %4609 = vmatpush1.bf16.msra.mxu0 %v3925
    %4610 = vmatprep.subr.bf16.mxu0 %v3922
    %4611 = vmatpush1.bf16.msra.mxu0 %v3921
    %4612 = vmatprep.subr.bf16.mxu0 %v3918
    %4613 = vmatpush1.bf16.msra.mxu0 %v3917
    %4614 = vmatprep.subr.bf16.mxu0 %v3914
    %4615 = vmatpush1.bf16.msra.mxu0 %v3913
    %4616 = vmatprep.subr.bf16.mxu0 %v3910
    %4617 = vmatpush1.bf16.msra.mxu0 %v3909
    %4618 = vmatprep.subr.bf16.mxu0 %v3906
    %4619 = vmatpush1.bf16.msra.mxu0 %v3905
    %4620 = vmatprep.subr.bf16.mxu0 %v3966
    %4621 = vmatpush2.bf16.msra.mxu0 %v3965
    %4622 = vmatprep.subr.bf16.mxu0 %v3962
    %4623 = vmatpush2.bf16.msra.mxu0 %v3961
    %4624 = vmatprep.subr.bf16.mxu0 %v3958
    %4625 = vmatpush2.bf16.msra.mxu0 %v3957
    %4626 = vmatprep.subr.bf16.mxu0 %v3954
    %4627 = vmatpush2.bf16.msra.mxu0 %v3953
    %4628 = vmatprep.subr.bf16.mxu0 %v3950
    %4629 = vmatpush2.bf16.msra.mxu0 %v3949
    %4630 = vmatprep.subr.bf16.mxu0 %v3946
    %4631 = vmatpush2.bf16.msra.mxu0 %v3945
    %4632 = vmatprep.subr.bf16.mxu0 %v3942
    %4633 = vmatpush2.bf16.msra.mxu0 %v3941
    %4634 = vmatprep.subr.bf16.mxu0 %v3938
    %4635 = vmatpush2.bf16.msra.mxu0 %v3937
    %4636 = vmatprep.mubr.bf16.mxu0 %v2430
    %4637 = vmatmul.mubr.bf16.gmra.mxu0 %v2429
    %v4638 = vpop.f32.mrf.mxu0
    %v4639 = vadd.f32 %v4598, %v4638
    %v4640 = vpop.f32.mrf.mxu0
    %v4641 = vadd.f32 %v4600, %v4640
    %v4642 = vpop.f32.mrf.mxu0
    %v4643 = vpop.f32.mrf.mxu0
    %4644 = vdwg.mxu0
    %v4645 = vmax.f32 %v4311, 0.0
    %v4646 = vmax.f32 %v4313, 0.0
    %v4647 = vmax.f32 %v4639, 0.0
    %v4648 = vmax.f32 %v4641, 0.0
    %v4649 = vpack.c.bf16 %v4645, %v4645
    %v4650 = vpack.c.bf16 %v4646, %v4646
    %v4651 = vpack.c.bf16 %v4647, %v4647
    %v4652 = vpack.c.bf16 %v4648, %v4648
    %v4653 = vld [vmem:[#allocation11] sm:$0xff]
    %v4654 = vld [vmem:[#allocation11 + $0x8] sm:$0xff]
    %v4655 = vld [vmem:[#allocation11 + $0x10] sm:$0xff]
    %v4656 = vld [vmem:[#allocation11 + $0x18] sm:$0xff]
    %v4657 = vld [vmem:[#allocation11 + $0x20] sm:$0xff]
    %v4658 = vld [vmem:[#allocation11 + $0x28] sm:$0xff]
    %v4659 = vld [vmem:[#allocation11 + $0x30] sm:$0xff]
    %v4660 = vld [vmem:[#allocation11 + $0x38] sm:$0xff]
    %v4661 = vld [vmem:[#allocation11 + $0x40] sm:$0xff]
    %v4662 = vld [vmem:[#allocation11 + $0x48] sm:$0xff]
    %v4663 = vld [vmem:[#allocation11 + $0x50] sm:$0xff]
    %v4664 = vld [vmem:[#allocation11 + $0x58] sm:$0xff]
    %v4665 = vld [vmem:[#allocation11 + $0x60] sm:$0xff]
    %v4666 = vld [vmem:[#allocation11 + $0x68] sm:$0xff]
    %v4667 = vld [vmem:[#allocation11 + $0x70] sm:$0xff]
    %v4668 = vld [vmem:[#allocation11 + $0x78] sm:$0xff]
    %v4669 = vld [vmem:[#allocation11 + $0x80] sm:$0xff]
    %v4670 = vld [vmem:[#allocation11 + $0x88] sm:$0xff]
    %v4671 = vld [vmem:[#allocation11 + $0x90] sm:$0xff]
    %v4672 = vld [vmem:[#allocation11 + $0x98] sm:$0xff]
    %v4673 = vld [vmem:[#allocation11 + $0xa0] sm:$0xff]
    %v4674 = vld [vmem:[#allocation11 + $0xa8] sm:$0xff]
    %v4675 = vld [vmem:[#allocation11 + $0xb0] sm:$0xff]
    %v4676 = vld [vmem:[#allocation11 + $0xb8] sm:$0xff]
    %v4677 = vld [vmem:[#allocation11 + $0xc0] sm:$0xff]
    %v4678 = vld [vmem:[#allocation11 + $0xc8] sm:$0xff]
    %v4679 = vld [vmem:[#allocation11 + $0xd0] sm:$0xff]
    %v4680 = vld [vmem:[#allocation11 + $0xd8] sm:$0xff]
    %v4681 = vld [vmem:[#allocation11 + $0xe0] sm:$0xff]
    %v4682 = vld [vmem:[#allocation11 + $0xe8] sm:$0xff]
    %v4683 = vld [vmem:[#allocation11 + $0xf0] sm:$0xff]
    %v4684 = vld [vmem:[#allocation11 + $0xf8] sm:$0xff]
    %v4685 = vld [vmem:[#allocation11 + $0x100] sm:$0xff]
    %v4686 = vld [vmem:[#allocation11 + $0x108] sm:$0xff]
    %v4687 = vld [vmem:[#allocation11 + $0x110] sm:$0xff]
    %v4688 = vld [vmem:[#allocation11 + $0x118] sm:$0xff]
    %v4689 = vld [vmem:[#allocation11 + $0x120] sm:$0xff]
    %v4690 = vld [vmem:[#allocation11 + $0x128] sm:$0xff]
    %v4691 = vld [vmem:[#allocation11 + $0x130] sm:$0xff]
    %v4692 = vld [vmem:[#allocation11 + $0x138] sm:$0xff]
    %v4693 = vld [vmem:[#allocation11 + $0x140] sm:$0xff]
    %v4694 = vld [vmem:[#allocation11 + $0x148] sm:$0xff]
    %v4695 = vld [vmem:[#allocation11 + $0x150] sm:$0xff]
    %v4696 = vld [vmem:[#allocation11 + $0x158] sm:$0xff]
    %v4697 = vld [vmem:[#allocation11 + $0x160] sm:$0xff]
    %v4698 = vld [vmem:[#allocation11 + $0x168] sm:$0xff]
    %v4699 = vld [vmem:[#allocation11 + $0x170] sm:$0xff]
    %v4700 = vld [vmem:[#allocation11 + $0x178] sm:$0xff]
    %v4701 = vld [vmem:[#allocation11 + $0x180] sm:$0xff]
    %v4702 = vld [vmem:[#allocation11 + $0x188] sm:$0xff]
    %v4703 = vld [vmem:[#allocation11 + $0x190] sm:$0xff]
    %v4704 = vld [vmem:[#allocation11 + $0x198] sm:$0xff]
    %v4705 = vld [vmem:[#allocation11 + $0x1a0] sm:$0xff]
    %v4706 = vld [vmem:[#allocation11 + $0x1a8] sm:$0xff]
    %v4707 = vld [vmem:[#allocation11 + $0x1b0] sm:$0xff]
    %v4708 = vld [vmem:[#allocation11 + $0x1b8] sm:$0xff]
    %v4709 = vld [vmem:[#allocation11 + $0x1c0] sm:$0xff]
    %v4710 = vld [vmem:[#allocation11 + $0x1c8] sm:$0xff]
    %v4711 = vld [vmem:[#allocation11 + $0x1d0] sm:$0xff]
    %v4712 = vld [vmem:[#allocation11 + $0x1d8] sm:$0xff]
    %v4713 = vld [vmem:[#allocation11 + $0x1e0] sm:$0xff]
    %v4714 = vld [vmem:[#allocation11 + $0x1e8] sm:$0xff]
    %v4715 = vld [vmem:[#allocation11 + $0x1f0] sm:$0xff]
    %v4716 = vld [vmem:[#allocation11 + $0x1f8] sm:$0xff]
    %v4717 = vpack.c.bf16 %v4654, %v4653
    %v4718 = vpack.c.bf16 %v4656, %v4655
    %v4719 = vpack.c.bf16 %v4658, %v4657
    %v4720 = vpack.c.bf16 %v4660, %v4659
    %v4721 = vpack.c.bf16 %v4662, %v4661
    %v4722 = vpack.c.bf16 %v4664, %v4663
    %v4723 = vpack.c.bf16 %v4666, %v4665
    %v4724 = vpack.c.bf16 %v4668, %v4667
    %v4725 = vpack.c.bf16 %v4670, %v4669
    %v4726 = vpack.c.bf16 %v4672, %v4671
    %v4727 = vpack.c.bf16 %v4674, %v4673
    %v4728 = vpack.c.bf16 %v4676, %v4675
    %v4729 = vpack.c.bf16 %v4678, %v4677
    %v4730 = vpack.c.bf16 %v4680, %v4679
    %v4731 = vpack.c.bf16 %v4682, %v4681
    %v4732 = vpack.c.bf16 %v4684, %v4683
    %v4733 = vpack.c.bf16 %v4686, %v4685
    %v4734 = vpack.c.bf16 %v4688, %v4687
    %v4735 = vpack.c.bf16 %v4690, %v4689
    %v4736 = vpack.c.bf16 %v4692, %v4691
    %v4737 = vpack.c.bf16 %v4694, %v4693
    %v4738 = vpack.c.bf16 %v4696, %v4695
    %v4739 = vpack.c.bf16 %v4698, %v4697
    %v4740 = vpack.c.bf16 %v4700, %v4699
    %v4741 = vpack.c.bf16 %v4702, %v4701
    %v4742 = vpack.c.bf16 %v4704, %v4703
    %v4743 = vpack.c.bf16 %v4706, %v4705
    %v4744 = vpack.c.bf16 %v4708, %v4707
    %v4745 = vpack.c.bf16 %v4710, %v4709
    %v4746 = vpack.c.bf16 %v4712, %v4711
    %v4747 = vpack.c.bf16 %v4714, %v4713
    %v4748 = vpack.c.bf16 %v4716, %v4715
    %v4749 = vld [vmem:[#allocation13] sm:$0x1]
    %v4751 = vlaneseq
    %v4752 = vshrl.u32 %v4751, 7
    %v4753 = vsub.s32 0, %v4752
    %v4754 = vrot.slane %v4749, %v4753
    %4756 = vmatprep.subr.bf16.mxu0 0
    %4757 = vmatpush1.bf16.msra.mxu0 %v4724
    %4758 = vmatprep.subr.bf16.mxu0 0
    %4759 = vmatpush1.bf16.msra.mxu0 %v4723
    %4760 = vmatprep.subr.bf16.mxu0 0
    %4761 = vmatpush1.bf16.msra.mxu0 %v4722
    %4762 = vmatprep.subr.bf16.mxu0 0
    %4763 = vmatpush1.bf16.msra.mxu0 %v4721
    %4764 = vmatprep.subr.bf16.mxu0 0
    %4765 = vmatpush1.bf16.msra.mxu0 %v4720
    %4766 = vmatprep.subr.bf16.mxu0 0
    %4767 = vmatpush1.bf16.msra.mxu0 %v4719
    %4768 = vmatprep.subr.bf16.mxu0 0
    %4769 = vmatpush1.bf16.msra.mxu0 %v4718
    %4770 = vmatprep.subr.bf16.mxu0 0
    %4771 = vmatpush1.bf16.msra.mxu0 %v4717
    %4772 = vmatprep.subr.bf16.mxu0 0
    %4773 = vmatpush2.bf16.msra.mxu0 %v4732
    %4774 = vmatprep.subr.bf16.mxu0 0
    %4775 = vmatpush2.bf16.msra.mxu0 %v4731
    %4776 = vmatprep.subr.bf16.mxu0 0
    %4777 = vmatpush2.bf16.msra.mxu0 %v4730
    %4778 = vmatprep.subr.bf16.mxu0 0
    %4779 = vmatpush2.bf16.msra.mxu0 %v4729
    %4780 = vmatprep.subr.bf16.mxu0 0
    %4781 = vmatpush2.bf16.msra.mxu0 %v4728
    %4782 = vmatprep.subr.bf16.mxu0 0
    %4783 = vmatpush2.bf16.msra.mxu0 %v4727
    %4784 = vmatprep.subr.bf16.mxu0 0
    %4785 = vmatpush2.bf16.msra.mxu0 %v4726
    %4786 = vmatprep.subr.bf16.mxu0 0
    %4787 = vmatpush2.bf16.msra.mxu0 %v4725
    %4788 = vmatprep.mubr.bf16.mxu0 %v4650
    %4789 = vmatmul.mubr.bf16.gmra.mxu0 %v4649
    %v4790 = vpop.f32.mrf.mxu0
    %v4791 = vadd.f32 %v4754, %v4790
    %v4792 = vpop.f32.mrf.mxu0
    %v4793 = vpop.f32.mrf.mxu0
    %v4794 = vpop.f32.mrf.mxu0
    %4795 = vdwg.mxu0
    %4796 = vmatprep.subr.bf16.mxu0 0
    %4797 = vmatpush1.bf16.msra.mxu0 %v4740
    %4798 = vmatprep.subr.bf16.mxu0 0
    %4799 = vmatpush1.bf16.msra.mxu0 %v4739
    %4800 = vmatprep.subr.bf16.mxu0 0
    %4801 = vmatpush1.bf16.msra.mxu0 %v4738
    %4802 = vmatprep.subr.bf16.mxu0 0
    %4803 = vmatpush1.bf16.msra.mxu0 %v4737
    %4804 = vmatprep.subr.bf16.mxu0 0
    %4805 = vmatpush1.bf16.msra.mxu0 %v4736
    %4806 = vmatprep.subr.bf16.mxu0 0
    %4807 = vmatpush1.bf16.msra.mxu0 %v4735
    %4808 = vmatprep.subr.bf16.mxu0 0
    %4809 = vmatpush1.bf16.msra.mxu0 %v4734
    %4810 = vmatprep.subr.bf16.mxu0 0
    %4811 = vmatpush1.bf16.msra.mxu0 %v4733
    %4812 = vmatprep.subr.bf16.mxu0 0
    %4813 = vmatpush2.bf16.msra.mxu0 %v4748
    %4814 = vmatprep.subr.bf16.mxu0 0
    %4815 = vmatpush2.bf16.msra.mxu0 %v4747
    %4816 = vmatprep.subr.bf16.mxu0 0
    %4817 = vmatpush2.bf16.msra.mxu0 %v4746
    %4818 = vmatprep.subr.bf16.mxu0 0
    %4819 = vmatpush2.bf16.msra.mxu0 %v4745
    %4820 = vmatprep.subr.bf16.mxu0 0
    %4821 = vmatpush2.bf16.msra.mxu0 %v4744
    %4822 = vmatprep.subr.bf16.mxu0 0
    %4823 = vmatpush2.bf16.msra.mxu0 %v4743
    %4824 = vmatprep.subr.bf16.mxu0 0
    %4825 = vmatpush2.bf16.msra.mxu0 %v4742
    %4826 = vmatprep.subr.bf16.mxu0 0
    %4827 = vmatpush2.bf16.msra.mxu0 %v4741
    %4828 = vmatprep.mubr.bf16.mxu0 %v4652
    %4829 = vmatmul.mubr.bf16.gmra.mxu0 %v4651
    %v4830 = vpop.f32.mrf.mxu0
    %v4831 = vadd.f32 %v4791, %v4830
    %v4832 = vpop.f32.mrf.mxu0
    %v4833 = vpop.f32.mrf.mxu0
    %v4834 = vpop.f32.mrf.mxu0
    %4835 = vdwg.mxu0
    %v4836 = vmax.f32 %v4831, 0.0
    %4837 = vst [vmem:[#allocation14] sm:$0xff] %v4836
    // Predicated region
    $region58: #{mlp_forward.1} parent=1 // pred_check
      _
    $region59: #{mlp_forward.1} parent=1 // pred_check_branch
      %4839 = sbr.rel (0) target = $region61
    $region60: #{mlp_forward.1} parent=1 // pred_region
      %s4841 = ssub.s32 128, 128
      %4842 = vsyncadd [#allocation4], %s4841
      %s4844 = sshll.u32 [#allocation14], 4
      %s4845 = int_to_ptr.vmem [resolvable:$true] %s4844
      %4847 = dma.vmem_to_hbm [thread:$0]  %s4845, 128, %s7, [#allocation4]
    $region61: #{mlp_forward.1} parent=1 // pred_fallthru
      _
    // Predicated region
    $region62: #{mlp_forward.1} parent=1 // pred_check
      _
    $region63: #{mlp_forward.1} parent=1 // pred_check_branch
      %4849 = sbr.rel (0) target = $region65
    $region64: #{mlp_forward.1} parent=1 // pred_region
      %4850 = dma.done [#allocation4], 128
    $region65: #{mlp_forward.1} parent=1 // pred_fallthru
      _
    %4851 = vsyncpa [#allocation3], 1
    %4852 = vsyncpa [#allocation6], 1
    %4853 = vsyncpa [#allocation9], 1
    %4854 = vsyncpa [#allocation12], 1
    %4855 = vsyncpa [#allocation4], 1

</llo_original>
